<compile_context>
chip_gen: v6e
topology: v6e:2x2x1
jax: 0.10.0
libtpu: 0.0.40
codegen_flags: <defaults>
</compile_context>

<pallas_src>
import numpy as np
import jax
import jax.numpy as jnp
from jax.experimental import pallas as pl
from jax.experimental.pallas import tpu as pltpu

OUTPUT_SIZE = 256 * 256
_LAYER_SIZES = (16, 32, 64, 128)   # input spatial size of deconv layers 1..4


# ----------------- stride-2 / k=4 / p=1 scatter matrices (constants) -----------------
def _scatter_const(n):
    """(4, 2n, n) f32:  S[k, o, i] = 1  iff  o == 2*i + k - 1   (ConvTranspose2d k=4,s=2,p=1)."""
    o = np.arange(2 * n)[None, :, None]
    i = np.arange(n)[None, None, :]
    k = np.arange(4)[:, None, None]
    return (o == 2 * i + k - 1).astype(np.float32)


_ROW_SCATTER = {n: _scatter_const(n) for n in _LAYER_SIZES}


def _fold_cols(w, n):
    """Mt[ky] = (sum_kx w[ky, kx] * C_kx)^T  ->  (4, n, 2n).

    Built with exact elementwise f32 mul/add (each entry is a single w tap or 0), so no
    matmul-precision concerns in the wrapper."""
    ct = jnp.asarray(_ROW_SCATTER[n]).transpose(0, 2, 1)          # (4, n, 2n): [kx, i, o]
    return jnp.sum(w[:, :, None, None] * ct[None, :, :, :], axis=1)


# ----------------------------------- fused kernel -----------------------------------
def _deconvnet_kernel(x_ref, bias_ref, fcw_ref, fcb_ref,
                      r1_ref, m1_ref, r2_ref, m2_ref,
                      r3_ref, m3_ref, r4_ref, m4_ref, o_ref):
    b = pl.program_id(0)

    # fc(7 -> 256) + ReLU, built directly as the (16, 16) tile the deconv stack consumes.
    # (K=7 is far too small for the MXU; 7 VPU scalar-broadcast mul-adds instead.)
    h = fcb_ref[...]
    for j in range(7):
        h = h + x_ref[b, j] * fcw_ref[j]
    h = jnp.maximum(h, 0.0)

    def deconv(h, r_ref, mt_ref, bias, relu):
        # out = sum_ky R_ky @ (h @ Mt_ky) + bias ; scatter matrices carry both the 4x4 taps
        # and the stride-2 sub-pixel interleave, so the result is already (2H, 2W) dense.
        acc = None
        for ky in range(4):
            t = jnp.dot(h, mt_ref[ky], preferred_element_type=jnp.float32)    # (H, 2W)
            u = jnp.dot(r_ref[ky], t, preferred_element_type=jnp.float32)     # (2H, 2W)
            acc = u if acc is None else acc + u
        acc = acc + bias
        return jnp.maximum(acc, 0.0) if relu else acc

    h = deconv(h, r1_ref, m1_ref, bias_ref[0], True)     # (32, 32)
    h = deconv(h, r2_ref, m2_ref, bias_ref[1], True)     # (64, 64)
    h = deconv(h, r3_ref, m3_ref, bias_ref[2], True)     # (128, 128)
    h = deconv(h, r4_ref, m4_ref, bias_ref[3], False)    # (256, 256)
    o_ref[0] = h


# ------------------------------------- wrapper -------------------------------------
@jax.jit
def deconvnet_forward(x, params):
    B = x.shape[0]
    fc_w3 = params["fc_w"].reshape(7, 16, 16)    # row-major view(…,16,16) of the fc output
    fc_b16 = params["fc_b"].reshape(16, 16)
    biases = jnp.concatenate([params["b1"], params["b2"], params["b3"], params["b4"]])  # (4,)

    operands, vmem_specs = [], []
    for l, n in enumerate(_LAYER_SIZES, start=1):
        r = jnp.asarray(_ROW_SCATTER[n])          # (4, 2n, n)  row scatter (weight-independent)
        mt = _fold_cols(params[f"w{l}"], n)       # (4, n, 2n)  column taps folded with weights
        operands += [r, mt]
        vmem_specs += [pl.BlockSpec((4, 2 * n, n), lambda b: (0, 0, 0)),
                       pl.BlockSpec((4, n, 2 * n), lambda b: (0, 0, 0))]

    grid_spec = pltpu.PrefetchScalarGridSpec(
        num_scalar_prefetch=0,
        grid=(B,),
        in_specs=[
            pl.BlockSpec(memory_space=pltpu.MemorySpace.SMEM),      # x       (B, 7)  scalars
            pl.BlockSpec(memory_space=pltpu.MemorySpace.SMEM),      # biases  (4,)    scalars
            pl.BlockSpec((7, 16, 16), lambda b: (0, 0, 0)),         # fc weights as (7,16,16)
            pl.BlockSpec((16, 16), lambda b: (0, 0)),               # fc bias as (16,16)
            *vmem_specs,                                            # R / Mt per deconv layer
        ],
        out_specs=pl.BlockSpec((1, 256, 256), lambda b: (b, 0, 0)),
    )
    out = pl.pallas_call(
        _deconvnet_kernel,
        out_shape=jax.ShapeDtypeStruct((B, 256, 256), jnp.float32),
        grid_spec=grid_spec,
        compiler_params=pltpu.CompilerParams(
            dimension_semantics=("parallel",),      # batch steps independent -> v7x uses both TCs
            vmem_limit_bytes=32 * 1024 * 1024,      # actual footprint ~3 MiB; safe on v7x 64 MiB
        ),
    )(x, biases, fc_w3, fc_b16, *operands)
    return out.reshape(B, OUTPUT_SIZE)              # free row-major reshape (already lane-dense)


# --------------------------- pure-JAX reference (correctness) ---------------------------
def _deconv_ref(h_nchw, w, b):
    # ConvTranspose2d(k=4,s=2,p=1) == conv(lhs_dilation=2, pad=k-1-p=2, kernel rotated 180deg)
    k = w[::-1, ::-1].reshape(1, 1, 4, 4)
    y = jax.lax.conv_general_dilated(
        h_nchw, k, window_strides=(1, 1), padding=[(2, 2), (2, 2)],
        lhs_dilation=(2, 2), rhs_dilation=(1, 1),
        dimension_numbers=("NCHW", "OIHW", "NCHW"),
        precision=jax.lax.Precision.HIGHEST)
    return y + b.reshape(1, 1, 1, 1)


def reference_forward(x, params):
    h = jnp.maximum(
        jnp.dot(x, params["fc_w"], precision=jax.lax.Precision.HIGHEST) + params["fc_b"], 0.0)
    h = h.reshape(-1, 1, 16, 16)
    h = jnp.maximum(_deconv_ref(h, params["w1"], params["b1"]), 0.0)
    h = jnp.maximum(_deconv_ref(h, params["w2"], params["b2"]), 0.0)
    h = jnp.maximum(_deconv_ref(h, params["w3"], params["b3"]), 0.0)
    h = _deconv_ref(h, params["w4"], params["b4"])
    return h.reshape(h.shape[0], OUTPUT_SIZE)


# --------------------------------------- main ---------------------------------------
def init_params(key):
    ks = jax.random.split(key, 10)
    fc_bound = 1.0 / np.sqrt(7.0)
    dc_bound = 0.25  # 1 / sqrt(in_ch * k * k) = 1/4
    return {
        "fc_w": jax.random.uniform(ks[0], (7, 256), jnp.float32, -fc_bound, fc_bound),
        "fc_b": jax.random.uniform(ks[1], (256,), jnp.float32, -fc_bound, fc_bound),
        "w1": jax.random.uniform(ks[2], (4, 4), jnp.float32, -dc_bound, dc_bound),
        "b1": jax.random.uniform(ks[3], (1,), jnp.float32, -dc_bound, dc_bound),
        "w2": jax.random.uniform(ks[4], (4, 4), jnp.float32, -dc_bound, dc_bound),
        "b2": jax.random.uniform(ks[5], (1,), jnp.float32, -dc_bound, dc_bound),
        "w3": jax.random.uniform(ks[6], (4, 4), jnp.float32, -dc_bound, dc_bound),
        "b3": jax.random.uniform(ks[7], (1,), jnp.float32, -dc_bound, dc_bound),
        "w4": jax.random.uniform(ks[8], (4, 4), jnp.float32, -dc_bound, dc_bound),
        "b4": jax.random.uniform(ks[9], (1,), jnp.float32, -dc_bound, dc_bound),
    }


if __name__ == "__main__":
    key = jax.random.PRNGKey(0)
    kp, kx = jax.random.split(key)
    params = init_params(kp)

    B = 2
    x = jax.random.normal(kx, (B, 7), jnp.float32)

    out = jax.block_until_ready(deconvnet_forward(x, params))
    assert out.shape == (B, OUTPUT_SIZE) and out.dtype == jnp.float32

    ref = jax.block_until_ready(reference_forward(x, params))
    np.testing.assert_allclose(np.asarray(out), np.asarray(ref), rtol=1e-5, atol=1e-5)

    print("KERNEL_OK")
</pallas_src>

<mosaic_0001>
module attributes {stable_mosaic.version = 11 : i64} {
  func.func @_deconvnet_kernel(%arg0: i32, %arg1: memref<2x7xf32, #tpu.memory_space<smem>>, %arg2: memref<4xf32, #tpu.memory_space<smem>>, %arg3: memref<7x16x16xf32, #tpu.memory_space<vmem>>, %arg4: memref<16x16xf32, #tpu.memory_space<vmem>>, %arg5: memref<4x32x16xf32, #tpu.memory_space<vmem>>, %arg6: memref<4x16x32xf32, #tpu.memory_space<vmem>>, %arg7: memref<4x64x32xf32, #tpu.memory_space<vmem>>, %arg8: memref<4x32x64xf32, #tpu.memory_space<vmem>>, %arg9: memref<4x128x64xf32, #tpu.memory_space<vmem>>, %arg10: memref<4x64x128xf32, #tpu.memory_space<vmem>>, %arg11: memref<4x256x128xf32, #tpu.memory_space<vmem>>, %arg12: memref<4x128x256xf32, #tpu.memory_space<vmem>>, %arg13: memref<1x256x256xf32, #tpu.memory_space<vmem>>) attributes {dimension_semantics = [#tpu.dimension_semantics<parallel>], iteration_bounds = array<i64: 2>, scalar_prefetch = 0 : i64, scratch_operands = 0 : i64, tpu.core_type = #tpu.core_type<tc>, window_params = [{transform_indices = @transform_0, window_bounds = array<i64: 2, 7>}, {transform_indices = @transform_1, window_bounds = array<i64: 4>}, {pipeline_mode = #tpu.pipeline_mode<synchronous>, transform_indices = @transform_2, window_bounds = array<i64: 7, 16, 16>}, {pipeline_mode = #tpu.pipeline_mode<synchronous>, transform_indices = @transform_3, window_bounds = array<i64: 16, 16>}, {pipeline_mode = #tpu.pipeline_mode<synchronous>, transform_indices = @transform_4, window_bounds = array<i64: 4, 32, 16>}, {pipeline_mode = #tpu.pipeline_mode<synchronous>, transform_indices = @transform_5, window_bounds = array<i64: 4, 16, 32>}, {pipeline_mode = #tpu.pipeline_mode<synchronous>, transform_indices = @transform_6, window_bounds = array<i64: 4, 64, 32>}, {pipeline_mode = #tpu.pipeline_mode<synchronous>, transform_indices = @transform_7, window_bounds = array<i64: 4, 32, 64>}, {pipeline_mode = #tpu.pipeline_mode<synchronous>, transform_indices = @transform_8, window_bounds = array<i64: 4, 128, 64>}, {pipeline_mode = #tpu.pipeline_mode<synchronous>, transform_indices = @transform_9, window_bounds = array<i64: 4, 64, 128>}, {pipeline_mode = #tpu.pipeline_mode<synchronous>, transform_indices = @transform_10, window_bounds = array<i64: 4, 256, 128>}, {pipeline_mode = #tpu.pipeline_mode<synchronous>, transform_indices = @transform_11, window_bounds = array<i64: 4, 128, 256>}, {transform_indices = @transform_12, window_bounds = array<i64: 1, 256, 256>}]} {
    %c0 = arith.constant 0 : index
    %c0_0 = arith.constant 0 : index
    %0 = vector.load %arg4[%c0, %c0_0] : memref<16x16xf32, #tpu.memory_space<vmem>>, vector<16x16xf32>
    %1 = arith.index_cast %arg0 : i32 to index
    %c0_1 = arith.constant 0 : index
    %2 = memref.load %arg1[%1, %c0_1] : memref<2x7xf32, #tpu.memory_space<smem>>
    %c0_2 = arith.constant 0 : index
    %c0_3 = arith.constant 0 : index
    %c0_4 = arith.constant 0 : index
    %3 = vector.load %arg3[%c0_2, %c0_3, %c0_4] : memref<7x16x16xf32, #tpu.memory_space<vmem>>, vector<1x16x16xf32>
    %4 = vector.shape_cast %3 : vector<1x16x16xf32> to vector<16x16xf32>
    %5 = vector.broadcast %2 : f32 to vector<16x16xf32>
    %6 = arith.mulf %5, %4 : vector<16x16xf32>
    %7 = arith.addf %0, %6 : vector<16x16xf32>
    %8 = arith.index_cast %arg0 : i32 to index
    %c1 = arith.constant 1 : index
    %9 = memref.load %arg1[%8, %c1] : memref<2x7xf32, #tpu.memory_space<smem>>
    %c1_5 = arith.constant 1 : index
    %c0_6 = arith.constant 0 : index
    %c0_7 = arith.constant 0 : index
    %10 = vector.load %arg3[%c1_5, %c0_6, %c0_7] : memref<7x16x16xf32, #tpu.memory_space<vmem>>, vector<1x16x16xf32>
    %11 = vector.shape_cast %10 : vector<1x16x16xf32> to vector<16x16xf32>
    %12 = vector.broadcast %9 : f32 to vector<16x16xf32>
    %13 = arith.mulf %12, %11 : vector<16x16xf32>
    %14 = arith.addf %7, %13 : vector<16x16xf32>
    %15 = arith.index_cast %arg0 : i32 to index
    %c2 = arith.constant 2 : index
    %16 = memref.load %arg1[%15, %c2] : memref<2x7xf32, #tpu.memory_space<smem>>
    %c2_8 = arith.constant 2 : index
    %c0_9 = arith.constant 0 : index
    %c0_10 = arith.constant 0 : index
    %17 = vector.load %arg3[%c2_8, %c0_9, %c0_10] : memref<7x16x16xf32, #tpu.memory_space<vmem>>, vector<1x16x16xf32>
    %18 = vector.shape_cast %17 : vector<1x16x16xf32> to vector<16x16xf32>
    %19 = vector.broadcast %16 : f32 to vector<16x16xf32>
    %20 = arith.mulf %19, %18 : vector<16x16xf32>
    %21 = arith.addf %14, %20 : vector<16x16xf32>
    %22 = arith.index_cast %arg0 : i32 to index
    %c3 = arith.constant 3 : index
    %23 = memref.load %arg1[%22, %c3] : memref<2x7xf32, #tpu.memory_space<smem>>
    %c3_11 = arith.constant 3 : index
    %c0_12 = arith.constant 0 : index
    %c0_13 = arith.constant 0 : index
    %24 = vector.load %arg3[%c3_11, %c0_12, %c0_13] : memref<7x16x16xf32, #tpu.memory_space<vmem>>, vector<1x16x16xf32>
    %25 = vector.shape_cast %24 : vector<1x16x16xf32> to vector<16x16xf32>
    %26 = vector.broadcast %23 : f32 to vector<16x16xf32>
    %27 = arith.mulf %26, %25 : vector<16x16xf32>
    %28 = arith.addf %21, %27 : vector<16x16xf32>
    %29 = arith.index_cast %arg0 : i32 to index
    %c4 = arith.constant 4 : index
    %30 = memref.load %arg1[%29, %c4] : memref<2x7xf32, #tpu.memory_space<smem>>
    %c4_14 = arith.constant 4 : index
    %c0_15 = arith.constant 0 : index
    %c0_16 = arith.constant 0 : index
    %31 = vector.load %arg3[%c4_14, %c0_15, %c0_16] : memref<7x16x16xf32, #tpu.memory_space<vmem>>, vector<1x16x16xf32>
    %32 = vector.shape_cast %31 : vector<1x16x16xf32> to vector<16x16xf32>
    %33 = vector.broadcast %30 : f32 to vector<16x16xf32>
    %34 = arith.mulf %33, %32 : vector<16x16xf32>
    %35 = arith.addf %28, %34 : vector<16x16xf32>
    %36 = arith.index_cast %arg0 : i32 to index
    %c5 = arith.constant 5 : index
    %37 = memref.load %arg1[%36, %c5] : memref<2x7xf32, #tpu.memory_space<smem>>
    %c5_17 = arith.constant 5 : index
    %c0_18 = arith.constant 0 : index
    %c0_19 = arith.constant 0 : index
    %38 = vector.load %arg3[%c5_17, %c0_18, %c0_19] : memref<7x16x16xf32, #tpu.memory_space<vmem>>, vector<1x16x16xf32>
    %39 = vector.shape_cast %38 : vector<1x16x16xf32> to vector<16x16xf32>
    %40 = vector.broadcast %37 : f32 to vector<16x16xf32>
    %41 = arith.mulf %40, %39 : vector<16x16xf32>
    %42 = arith.addf %35, %41 : vector<16x16xf32>
    %43 = arith.index_cast %arg0 : i32 to index
    %c6 = arith.constant 6 : index
    %44 = memref.load %arg1[%43, %c6] : memref<2x7xf32, #tpu.memory_space<smem>>
    %c6_20 = arith.constant 6 : index
    %c0_21 = arith.constant 0 : index
    %c0_22 = arith.constant 0 : index
    %45 = vector.load %arg3[%c6_20, %c0_21, %c0_22] : memref<7x16x16xf32, #tpu.memory_space<vmem>>, vector<1x16x16xf32>
    %46 = vector.shape_cast %45 : vector<1x16x16xf32> to vector<16x16xf32>
    %47 = vector.broadcast %44 : f32 to vector<16x16xf32>
    %48 = arith.mulf %47, %46 : vector<16x16xf32>
    %49 = arith.addf %42, %48 : vector<16x16xf32>
    %cst = arith.constant 0.000000e+00 : f32
    %50 = vector.broadcast %cst : f32 to vector<16x16xf32>
    %51 = arith.maximumf %49, %50 : vector<16x16xf32>
    %c0_23 = arith.constant 0 : index
    %52 = memref.load %arg2[%c0_23] : memref<4xf32, #tpu.memory_space<smem>>
    %c0_24 = arith.constant 0 : index
    %c0_25 = arith.constant 0 : index
    %c0_26 = arith.constant 0 : index
    %53 = vector.load %arg6[%c0_24, %c0_25, %c0_26] : memref<4x16x32xf32, #tpu.memory_space<vmem>>, vector<1x16x32xf32>
    %54 = vector.shape_cast %53 : vector<1x16x32xf32> to vector<16x32xf32>
    %cst_27 = arith.constant dense<0.000000e+00> : vector<16x32xf32>
    %55 = tpu.matmul %51, %54, %cst_27 {dimension_numbers = #tpu.dot_dimension_numbers<[1], [0], [0], [1], [0, 0, 1, 1], [], []>} : vector<16x16xf32>, vector<16x32xf32>, vector<16x32xf32> -> vector<16x32xf32>
    %c0_28 = arith.constant 0 : index
    %c0_29 = arith.constant 0 : index
    %c0_30 = arith.constant 0 : index
    %56 = vector.load %arg5[%c0_28, %c0_29, %c0_30] : memref<4x32x16xf32, #tpu.memory_space<vmem>>, vector<1x32x16xf32>
    %57 = vector.shape_cast %56 : vector<1x32x16xf32> to vector<32x16xf32>
    %cst_31 = arith.constant dense<0.000000e+00> : vector<32x32xf32>
    %58 = tpu.matmul %57, %55, %cst_31 {dimension_numbers = #tpu.dot_dimension_numbers<[1], [0], [0], [1], [0, 0, 1, 1], [], []>} : vector<32x16xf32>, vector<16x32xf32>, vector<32x32xf32> -> vector<32x32xf32>
    %c1_32 = arith.constant 1 : index
    %c0_33 = arith.constant 0 : index
    %c0_34 = arith.constant 0 : index
    %59 = vector.load %arg6[%c1_32, %c0_33, %c0_34] : memref<4x16x32xf32, #tpu.memory_space<vmem>>, vector<1x16x32xf32>
    %60 = vector.shape_cast %59 : vector<1x16x32xf32> to vector<16x32xf32>
    %cst_35 = arith.constant dense<0.000000e+00> : vector<16x32xf32>
    %61 = tpu.matmul %51, %60, %cst_35 {dimension_numbers = #tpu.dot_dimension_numbers<[1], [0], [0], [1], [0, 0, 1, 1], [], []>} : vector<16x16xf32>, vector<16x32xf32>, vector<16x32xf32> -> vector<16x32xf32>
    %c1_36 = arith.constant 1 : index
    %c0_37 = arith.constant 0 : index
    %c0_38 = arith.constant 0 : index
    %62 = vector.load %arg5[%c1_36, %c0_37, %c0_38] : memref<4x32x16xf32, #tpu.memory_space<vmem>>, vector<1x32x16xf32>
    %63 = vector.shape_cast %62 : vector<1x32x16xf32> to vector<32x16xf32>
    %cst_39 = arith.constant dense<0.000000e+00> : vector<32x32xf32>
    %64 = tpu.matmul %63, %61, %cst_39 {dimension_numbers = #tpu.dot_dimension_numbers<[1], [0], [0], [1], [0, 0, 1, 1], [], []>} : vector<32x16xf32>, vector<16x32xf32>, vector<32x32xf32> -> vector<32x32xf32>
    %65 = arith.addf %58, %64 : vector<32x32xf32>
    %c2_40 = arith.constant 2 : index
    %c0_41 = arith.constant 0 : index
    %c0_42 = arith.constant 0 : index
    %66 = vector.load %arg6[%c2_40, %c0_41, %c0_42] : memref<4x16x32xf32, #tpu.memory_space<vmem>>, vector<1x16x32xf32>
    %67 = vector.shape_cast %66 : vector<1x16x32xf32> to vector<16x32xf32>
    %cst_43 = arith.constant dense<0.000000e+00> : vector<16x32xf32>
    %68 = tpu.matmul %51, %67, %cst_43 {dimension_numbers = #tpu.dot_dimension_numbers<[1], [0], [0], [1], [0, 0, 1, 1], [], []>} : vector<16x16xf32>, vector<16x32xf32>, vector<16x32xf32> -> vector<16x32xf32>
    %c2_44 = arith.constant 2 : index
    %c0_45 = arith.constant 0 : index
    %c0_46 = arith.constant 0 : index
    %69 = vector.load %arg5[%c2_44, %c0_45, %c0_46] : memref<4x32x16xf32, #tpu.memory_space<vmem>>, vector<1x32x16xf32>
    %70 = vector.shape_cast %69 : vector<1x32x16xf32> to vector<32x16xf32>
    %cst_47 = arith.constant dense<0.000000e+00> : vector<32x32xf32>
    %71 = tpu.matmul %70, %68, %cst_47 {dimension_numbers = #tpu.dot_dimension_numbers<[1], [0], [0], [1], [0, 0, 1, 1], [], []>} : vector<32x16xf32>, vector<16x32xf32>, vector<32x32xf32> -> vector<32x32xf32>
    %72 = arith.addf %65, %71 : vector<32x32xf32>
    %c3_48 = arith.constant 3 : index
    %c0_49 = arith.constant 0 : index
    %c0_50 = arith.constant 0 : index
    %73 = vector.load %arg6[%c3_48, %c0_49, %c0_50] : memref<4x16x32xf32, #tpu.memory_space<vmem>>, vector<1x16x32xf32>
    %74 = vector.shape_cast %73 : vector<1x16x32xf32> to vector<16x32xf32>
    %cst_51 = arith.constant dense<0.000000e+00> : vector<16x32xf32>
    %75 = tpu.matmul %51, %74, %cst_51 {dimension_numbers = #tpu.dot_dimension_numbers<[1], [0], [0], [1], [0, 0, 1, 1], [], []>} : vector<16x16xf32>, vector<16x32xf32>, vector<16x32xf32> -> vector<16x32xf32>
    %c3_52 = arith.constant 3 : index
    %c0_53 = arith.constant 0 : index
    %c0_54 = arith.constant 0 : index
    %76 = vector.load %arg5[%c3_52, %c0_53, %c0_54] : memref<4x32x16xf32, #tpu.memory_space<vmem>>, vector<1x32x16xf32>
    %77 = vector.shape_cast %76 : vector<1x32x16xf32> to vector<32x16xf32>
    %cst_55 = arith.constant dense<0.000000e+00> : vector<32x32xf32>
    %78 = tpu.matmul %77, %75, %cst_55 {dimension_numbers = #tpu.dot_dimension_numbers<[1], [0], [0], [1], [0, 0, 1, 1], [], []>} : vector<32x16xf32>, vector<16x32xf32>, vector<32x32xf32> -> vector<32x32xf32>
    %79 = arith.addf %72, %78 : vector<32x32xf32>
    %80 = vector.broadcast %52 : f32 to vector<32x32xf32>
    %81 = arith.addf %79, %80 : vector<32x32xf32>
    %cst_56 = arith.constant 0.000000e+00 : f32
    %82 = vector.broadcast %cst_56 : f32 to vector<32x32xf32>
    %83 = arith.maximumf %81, %82 : vector<32x32xf32>
    %c1_57 = arith.constant 1 : index
    %84 = memref.load %arg2[%c1_57] : memref<4xf32, #tpu.memory_space<smem>>
    %c0_58 = arith.constant 0 : index
    %c0_59 = arith.constant 0 : index
    %c0_60 = arith.constant 0 : index
    %85 = vector.load %arg8[%c0_58, %c0_59, %c0_60] : memref<4x32x64xf32, #tpu.memory_space<vmem>>, vector<1x32x64xf32>
    %86 = vector.shape_cast %85 : vector<1x32x64xf32> to vector<32x64xf32>
    %cst_61 = arith.constant dense<0.000000e+00> : vector<32x64xf32>
    %87 = tpu.matmul %83, %86, %cst_61 {dimension_numbers = #tpu.dot_dimension_numbers<[1], [0], [0], [1], [0, 0, 1, 1], [], []>} : vector<32x32xf32>, vector<32x64xf32>, vector<32x64xf32> -> vector<32x64xf32>
    %c0_62 = arith.constant 0 : index
    %c0_63 = arith.constant 0 : index
    %c0_64 = arith.constant 0 : index
    %88 = vector.load %arg7[%c0_62, %c0_63, %c0_64] : memref<4x64x32xf32, #tpu.memory_space<vmem>>, vector<1x64x32xf32>
    %89 = vector.shape_cast %88 : vector<1x64x32xf32> to vector<64x32xf32>
    %cst_65 = arith.constant dense<0.000000e+00> : vector<64x64xf32>
    %90 = tpu.matmul %89, %87, %cst_65 {dimension_numbers = #tpu.dot_dimension_numbers<[1], [0], [0], [1], [0, 0, 1, 1], [], []>} : vector<64x32xf32>, vector<32x64xf32>, vector<64x64xf32> -> vector<64x64xf32>
    %c1_66 = arith.constant 1 : index
    %c0_67 = arith.constant 0 : index
    %c0_68 = arith.constant 0 : index
    %91 = vector.load %arg8[%c1_66, %c0_67, %c0_68] : memref<4x32x64xf32, #tpu.memory_space<vmem>>, vector<1x32x64xf32>
    %92 = vector.shape_cast %91 : vector<1x32x64xf32> to vector<32x64xf32>
    %cst_69 = arith.constant dense<0.000000e+00> : vector<32x64xf32>
    %93 = tpu.matmul %83, %92, %cst_69 {dimension_numbers = #tpu.dot_dimension_numbers<[1], [0], [0], [1], [0, 0, 1, 1], [], []>} : vector<32x32xf32>, vector<32x64xf32>, vector<32x64xf32> -> vector<32x64xf32>
    %c1_70 = arith.constant 1 : index
    %c0_71 = arith.constant 0 : index
    %c0_72 = arith.constant 0 : index
    %94 = vector.load %arg7[%c1_70, %c0_71, %c0_72] : memref<4x64x32xf32, #tpu.memory_space<vmem>>, vector<1x64x32xf32>
    %95 = vector.shape_cast %94 : vector<1x64x32xf32> to vector<64x32xf32>
    %cst_73 = arith.constant dense<0.000000e+00> : vector<64x64xf32>
    %96 = tpu.matmul %95, %93, %cst_73 {dimension_numbers = #tpu.dot_dimension_numbers<[1], [0], [0], [1], [0, 0, 1, 1], [], []>} : vector<64x32xf32>, vector<32x64xf32>, vector<64x64xf32> -> vector<64x64xf32>
    %97 = arith.addf %90, %96 : vector<64x64xf32>
    %c2_74 = arith.constant 2 : index
    %c0_75 = arith.constant 0 : index
    %c0_76 = arith.constant 0 : index
    %98 = vector.load %arg8[%c2_74, %c0_75, %c0_76] : memref<4x32x64xf32, #tpu.memory_space<vmem>>, vector<1x32x64xf32>
    %99 = vector.shape_cast %98 : vector<1x32x64xf32> to vector<32x64xf32>
    %cst_77 = arith.constant dense<0.000000e+00> : vector<32x64xf32>
    %100 = tpu.matmul %83, %99, %cst_77 {dimension_numbers = #tpu.dot_dimension_numbers<[1], [0], [0], [1], [0, 0, 1, 1], [], []>} : vector<32x32xf32>, vector<32x64xf32>, vector<32x64xf32> -> vector<32x64xf32>
    %c2_78 = arith.constant 2 : index
    %c0_79 = arith.constant 0 : index
    %c0_80 = arith.constant 0 : index
    %101 = vector.load %arg7[%c2_78, %c0_79, %c0_80] : memref<4x64x32xf32, #tpu.memory_space<vmem>>, vector<1x64x32xf32>
    %102 = vector.shape_cast %101 : vector<1x64x32xf32> to vector<64x32xf32>
    %cst_81 = arith.constant dense<0.000000e+00> : vector<64x64xf32>
    %103 = tpu.matmul %102, %100, %cst_81 {dimension_numbers = #tpu.dot_dimension_numbers<[1], [0], [0], [1], [0, 0, 1, 1], [], []>} : vector<64x32xf32>, vector<32x64xf32>, vector<64x64xf32> -> vector<64x64xf32>
    %104 = arith.addf %97, %103 : vector<64x64xf32>
    %c3_82 = arith.constant 3 : index
    %c0_83 = arith.constant 0 : index
    %c0_84 = arith.constant 0 : index
    %105 = vector.load %arg8[%c3_82, %c0_83, %c0_84] : memref<4x32x64xf32, #tpu.memory_space<vmem>>, vector<1x32x64xf32>
    %106 = vector.shape_cast %105 : vector<1x32x64xf32> to vector<32x64xf32>
    %cst_85 = arith.constant dense<0.000000e+00> : vector<32x64xf32>
    %107 = tpu.matmul %83, %106, %cst_85 {dimension_numbers = #tpu.dot_dimension_numbers<[1], [0], [0], [1], [0, 0, 1, 1], [], []>} : vector<32x32xf32>, vector<32x64xf32>, vector<32x64xf32> -> vector<32x64xf32>
    %c3_86 = arith.constant 3 : index
    %c0_87 = arith.constant 0 : index
    %c0_88 = arith.constant 0 : index
    %108 = vector.load %arg7[%c3_86, %c0_87, %c0_88] : memref<4x64x32xf32, #tpu.memory_space<vmem>>, vector<1x64x32xf32>
    %109 = vector.shape_cast %108 : vector<1x64x32xf32> to vector<64x32xf32>
    %cst_89 = arith.constant dense<0.000000e+00> : vector<64x64xf32>
    %110 = tpu.matmul %109, %107, %cst_89 {dimension_numbers = #tpu.dot_dimension_numbers<[1], [0], [0], [1], [0, 0, 1, 1], [], []>} : vector<64x32xf32>, vector<32x64xf32>, vector<64x64xf32> -> vector<64x64xf32>
    %111 = arith.addf %104, %110 : vector<64x64xf32>
    %112 = vector.broadcast %84 : f32 to vector<64x64xf32>
    %113 = arith.addf %111, %112 : vector<64x64xf32>
    %cst_90 = arith.constant 0.000000e+00 : f32
    %114 = vector.broadcast %cst_90 : f32 to vector<64x64xf32>
    %115 = arith.maximumf %113, %114 : vector<64x64xf32>
    %c2_91 = arith.constant 2 : index
    %116 = memref.load %arg2[%c2_91] : memref<4xf32, #tpu.memory_space<smem>>
    %c0_92 = arith.constant 0 : index
    %c0_93 = arith.constant 0 : index
    %c0_94 = arith.constant 0 : index
    %117 = vector.load %arg10[%c0_92, %c0_93, %c0_94] : memref<4x64x128xf32, #tpu.memory_space<vmem>>, vector<1x64x128xf32>
    %118 = vector.shape_cast %117 : vector<1x64x128xf32> to vector<64x128xf32>
    %cst_95 = arith.constant dense<0.000000e+00> : vector<64x128xf32>
    %119 = tpu.matmul %115, %118, %cst_95 {dimension_numbers = #tpu.dot_dimension_numbers<[1], [0], [0], [1], [0, 0, 1, 1], [], []>} : vector<64x64xf32>, vector<64x128xf32>, vector<64x128xf32> -> vector<64x128xf32>
    %c0_96 = arith.constant 0 : index
    %c0_97 = arith.constant 0 : index
    %c0_98 = arith.constant 0 : index
    %120 = vector.load %arg9[%c0_96, %c0_97, %c0_98] : memref<4x128x64xf32, #tpu.memory_space<vmem>>, vector<1x128x64xf32>
    %121 = vector.shape_cast %120 : vector<1x128x64xf32> to vector<128x64xf32>
    %cst_99 = arith.constant dense<0.000000e+00> : vector<128x128xf32>
    %122 = tpu.matmul %121, %119, %cst_99 {dimension_numbers = #tpu.dot_dimension_numbers<[1], [0], [0], [1], [0, 0, 1, 1], [], []>} : vector<128x64xf32>, vector<64x128xf32>, vector<128x128xf32> -> vector<128x128xf32>
    %c1_100 = arith.constant 1 : index
    %c0_101 = arith.constant 0 : index
    %c0_102 = arith.constant 0 : index
    %123 = vector.load %arg10[%c1_100, %c0_101, %c0_102] : memref<4x64x128xf32, #tpu.memory_space<vmem>>, vector<1x64x128xf32>
    %124 = vector.shape_cast %123 : vector<1x64x128xf32> to vector<64x128xf32>
    %cst_103 = arith.constant dense<0.000000e+00> : vector<64x128xf32>
    %125 = tpu.matmul %115, %124, %cst_103 {dimension_numbers = #tpu.dot_dimension_numbers<[1], [0], [0], [1], [0, 0, 1, 1], [], []>} : vector<64x64xf32>, vector<64x128xf32>, vector<64x128xf32> -> vector<64x128xf32>
    %c1_104 = arith.constant 1 : index
    %c0_105 = arith.constant 0 : index
    %c0_106 = arith.constant 0 : index
    %126 = vector.load %arg9[%c1_104, %c0_105, %c0_106] : memref<4x128x64xf32, #tpu.memory_space<vmem>>, vector<1x128x64xf32>
    %127 = vector.shape_cast %126 : vector<1x128x64xf32> to vector<128x64xf32>
    %cst_107 = arith.constant dense<0.000000e+00> : vector<128x128xf32>
    %128 = tpu.matmul %127, %125, %cst_107 {dimension_numbers = #tpu.dot_dimension_numbers<[1], [0], [0], [1], [0, 0, 1, 1], [], []>} : vector<128x64xf32>, vector<64x128xf32>, vector<128x128xf32> -> vector<128x128xf32>
    %129 = arith.addf %122, %128 : vector<128x128xf32>
    %c2_108 = arith.constant 2 : index
    %c0_109 = arith.constant 0 : index
    %c0_110 = arith.constant 0 : index
    %130 = vector.load %arg10[%c2_108, %c0_109, %c0_110] : memref<4x64x128xf32, #tpu.memory_space<vmem>>, vector<1x64x128xf32>
    %131 = vector.shape_cast %130 : vector<1x64x128xf32> to vector<64x128xf32>
    %cst_111 = arith.constant dense<0.000000e+00> : vector<64x128xf32>
    %132 = tpu.matmul %115, %131, %cst_111 {dimension_numbers = #tpu.dot_dimension_numbers<[1], [0], [0], [1], [0, 0, 1, 1], [], []>} : vector<64x64xf32>, vector<64x128xf32>, vector<64x128xf32> -> vector<64x128xf32>
    %c2_112 = arith.constant 2 : index
    %c0_113 = arith.constant 0 : index
    %c0_114 = arith.constant 0 : index
    %133 = vector.load %arg9[%c2_112, %c0_113, %c0_114] : memref<4x128x64xf32, #tpu.memory_space<vmem>>, vector<1x128x64xf32>
    %134 = vector.shape_cast %133 : vector<1x128x64xf32> to vector<128x64xf32>
    %cst_115 = arith.constant dense<0.000000e+00> : vector<128x128xf32>
    %135 = tpu.matmul %134, %132, %cst_115 {dimension_numbers = #tpu.dot_dimension_numbers<[1], [0], [0], [1], [0, 0, 1, 1], [], []>} : vector<128x64xf32>, vector<64x128xf32>, vector<128x128xf32> -> vector<128x128xf32>
    %136 = arith.addf %129, %135 : vector<128x128xf32>
    %c3_116 = arith.constant 3 : index
    %c0_117 = arith.constant 0 : index
    %c0_118 = arith.constant 0 : index
    %137 = vector.load %arg10[%c3_116, %c0_117, %c0_118] : memref<4x64x128xf32, #tpu.memory_space<vmem>>, vector<1x64x128xf32>
    %138 = vector.shape_cast %137 : vector<1x64x128xf32> to vector<64x128xf32>
    %cst_119 = arith.constant dense<0.000000e+00> : vector<64x128xf32>
    %139 = tpu.matmul %115, %138, %cst_119 {dimension_numbers = #tpu.dot_dimension_numbers<[1], [0], [0], [1], [0, 0, 1, 1], [], []>} : vector<64x64xf32>, vector<64x128xf32>, vector<64x128xf32> -> vector<64x128xf32>
    %c3_120 = arith.constant 3 : index
    %c0_121 = arith.constant 0 : index
    %c0_122 = arith.constant 0 : index
    %140 = vector.load %arg9[%c3_120, %c0_121, %c0_122] : memref<4x128x64xf32, #tpu.memory_space<vmem>>, vector<1x128x64xf32>
    %141 = vector.shape_cast %140 : vector<1x128x64xf32> to vector<128x64xf32>
    %cst_123 = arith.constant dense<0.000000e+00> : vector<128x128xf32>
    %142 = tpu.matmul %141, %139, %cst_123 {dimension_numbers = #tpu.dot_dimension_numbers<[1], [0], [0], [1], [0, 0, 1, 1], [], []>} : vector<128x64xf32>, vector<64x128xf32>, vector<128x128xf32> -> vector<128x128xf32>
    %143 = arith.addf %136, %142 : vector<128x128xf32>
    %144 = vector.broadcast %116 : f32 to vector<128x128xf32>
    %145 = arith.addf %143, %144 : vector<128x128xf32>
    %cst_124 = arith.constant 0.000000e+00 : f32
    %146 = vector.broadcast %cst_124 : f32 to vector<128x128xf32>
    %147 = arith.maximumf %145, %146 : vector<128x128xf32>
    %c3_125 = arith.constant 3 : index
    %148 = memref.load %arg2[%c3_125] : memref<4xf32, #tpu.memory_space<smem>>
    %c0_126 = arith.constant 0 : index
    %c0_127 = arith.constant 0 : index
    %c0_128 = arith.constant 0 : index
    %149 = vector.load %arg12[%c0_126, %c0_127, %c0_128] : memref<4x128x256xf32, #tpu.memory_space<vmem>>, vector<1x128x256xf32>
    %150 = vector.shape_cast %149 : vector<1x128x256xf32> to vector<128x256xf32>
    %cst_129 = arith.constant dense<0.000000e+00> : vector<128x256xf32>
    %151 = tpu.matmul %147, %150, %cst_129 {dimension_numbers = #tpu.dot_dimension_numbers<[1], [0], [0], [1], [0, 0, 1, 1], [], []>} : vector<128x128xf32>, vector<128x256xf32>, vector<128x256xf32> -> vector<128x256xf32>
    %c0_130 = arith.constant 0 : index
    %c0_131 = arith.constant 0 : index
    %c0_132 = arith.constant 0 : index
    %152 = vector.load %arg11[%c0_130, %c0_131, %c0_132] : memref<4x256x128xf32, #tpu.memory_space<vmem>>, vector<1x256x128xf32>
    %153 = vector.shape_cast %152 : vector<1x256x128xf32> to vector<256x128xf32>
    %cst_133 = arith.constant dense<0.000000e+00> : vector<256x256xf32>
    %154 = tpu.matmul %153, %151, %cst_133 {dimension_numbers = #tpu.dot_dimension_numbers<[1], [0], [0], [1], [0, 0, 1, 1], [], []>} : vector<256x128xf32>, vector<128x256xf32>, vector<256x256xf32> -> vector<256x256xf32>
    %c1_134 = arith.constant 1 : index
    %c0_135 = arith.constant 0 : index
    %c0_136 = arith.constant 0 : index
    %155 = vector.load %arg12[%c1_134, %c0_135, %c0_136] : memref<4x128x256xf32, #tpu.memory_space<vmem>>, vector<1x128x256xf32>
    %156 = vector.shape_cast %155 : vector<1x128x256xf32> to vector<128x256xf32>
    %cst_137 = arith.constant dense<0.000000e+00> : vector<128x256xf32>
    %157 = tpu.matmul %147, %156, %cst_137 {dimension_numbers = #tpu.dot_dimension_numbers<[1], [0], [0], [1], [0, 0, 1, 1], [], []>} : vector<128x128xf32>, vector<128x256xf32>, vector<128x256xf32> -> vector<128x256xf32>
    %c1_138 = arith.constant 1 : index
    %c0_139 = arith.constant 0 : index
    %c0_140 = arith.constant 0 : index
    %158 = vector.load %arg11[%c1_138, %c0_139, %c0_140] : memref<4x256x128xf32, #tpu.memory_space<vmem>>, vector<1x256x128xf32>
    %159 = vector.shape_cast %158 : vector<1x256x128xf32> to vector<256x128xf32>
    %cst_141 = arith.constant dense<0.000000e+00> : vector<256x256xf32>
    %160 = tpu.matmul %159, %157, %cst_141 {dimension_numbers = #tpu.dot_dimension_numbers<[1], [0], [0], [1], [0, 0, 1, 1], [], []>} : vector<256x128xf32>, vector<128x256xf32>, vector<256x256xf32> -> vector<256x256xf32>
    %161 = arith.addf %154, %160 : vector<256x256xf32>
    %c2_142 = arith.constant 2 : index
    %c0_143 = arith.constant 0 : index
    %c0_144 = arith.constant 0 : index
    %162 = vector.load %arg12[%c2_142, %c0_143, %c0_144] : memref<4x128x256xf32, #tpu.memory_space<vmem>>, vector<1x128x256xf32>
    %163 = vector.shape_cast %162 : vector<1x128x256xf32> to vector<128x256xf32>
    %cst_145 = arith.constant dense<0.000000e+00> : vector<128x256xf32>
    %164 = tpu.matmul %147, %163, %cst_145 {dimension_numbers = #tpu.dot_dimension_numbers<[1], [0], [0], [1], [0, 0, 1, 1], [], []>} : vector<128x128xf32>, vector<128x256xf32>, vector<128x256xf32> -> vector<128x256xf32>
    %c2_146 = arith.constant 2 : index
    %c0_147 = arith.constant 0 : index
    %c0_148 = arith.constant 0 : index
    %165 = vector.load %arg11[%c2_146, %c0_147, %c0_148] : memref<4x256x128xf32, #tpu.memory_space<vmem>>, vector<1x256x128xf32>
    %166 = vector.shape_cast %165 : vector<1x256x128xf32> to vector<256x128xf32>
    %cst_149 = arith.constant dense<0.000000e+00> : vector<256x256xf32>
    %167 = tpu.matmul %166, %164, %cst_149 {dimension_numbers = #tpu.dot_dimension_numbers<[1], [0], [0], [1], [0, 0, 1, 1], [], []>} : vector<256x128xf32>, vector<128x256xf32>, vector<256x256xf32> -> vector<256x256xf32>
    %168 = arith.addf %161, %167 : vector<256x256xf32>
    %c3_150 = arith.constant 3 : index
    %c0_151 = arith.constant 0 : index
    %c0_152 = arith.constant 0 : index
    %169 = vector.load %arg12[%c3_150, %c0_151, %c0_152] : memref<4x128x256xf32, #tpu.memory_space<vmem>>, vector<1x128x256xf32>
    %170 = vector.shape_cast %169 : vector<1x128x256xf32> to vector<128x256xf32>
    %cst_153 = arith.constant dense<0.000000e+00> : vector<128x256xf32>
    %171 = tpu.matmul %147, %170, %cst_153 {dimension_numbers = #tpu.dot_dimension_numbers<[1], [0], [0], [1], [0, 0, 1, 1], [], []>} : vector<128x128xf32>, vector<128x256xf32>, vector<128x256xf32> -> vector<128x256xf32>
    %c3_154 = arith.constant 3 : index
    %c0_155 = arith.constant 0 : index
    %c0_156 = arith.constant 0 : index
    %172 = vector.load %arg11[%c3_154, %c0_155, %c0_156] : memref<4x256x128xf32, #tpu.memory_space<vmem>>, vector<1x256x128xf32>
    %173 = vector.shape_cast %172 : vector<1x256x128xf32> to vector<256x128xf32>
    %cst_157 = arith.constant dense<0.000000e+00> : vector<256x256xf32>
    %174 = tpu.matmul %173, %171, %cst_157 {dimension_numbers = #tpu.dot_dimension_numbers<[1], [0], [0], [1], [0, 0, 1, 1], [], []>} : vector<256x128xf32>, vector<128x256xf32>, vector<256x256xf32> -> vector<256x256xf32>
    %175 = arith.addf %168, %174 : vector<256x256xf32>
    %176 = vector.broadcast %148 : f32 to vector<256x256xf32>
    %177 = arith.addf %175, %176 : vector<256x256xf32>
    %c0_158 = arith.constant 0 : index
    %c0_159 = arith.constant 0 : index
    %c0_160 = arith.constant 0 : index
    %178 = vector.load %arg13[%c0_158, %c0_159, %c0_160] : memref<1x256x256xf32, #tpu.memory_space<vmem>>, vector<1x256x256xf32>
    %179 = vector.shape_cast %178 : vector<1x256x256xf32> to vector<256x256xf32>
    %180 = vector.shape_cast %177 : vector<256x256xf32> to vector<1x256x256xf32>
    tpu.vector_store %arg13[%c0_158, %c0_159, %c0_160], %180 {strides = array<i32>} : memref<1x256x256xf32, #tpu.memory_space<vmem>>, vector<1x256x256xf32>,
    return
  }
  func.func @transform_0(%arg0: i32) -> (i32, i32) {
    %c0_i32 = arith.constant 0 : i32
    %c0_i32_0 = arith.constant 0 : i32
    %c0_i32_1 = arith.constant 0 : i32
    return %c0_i32, %c0_i32_0 : i32, i32
  }
  func.func @transform_1(%arg0: i32) -> i32 {
    %c0_i32 = arith.constant 0 : i32
    %c0_i32_0 = arith.constant 0 : i32
    return %c0_i32 : i32
  }
  func.func @transform_2(%arg0: i32) -> (i32, i32, i32) {
    %c0_i32 = arith.constant 0 : i32
    %c0_i32_0 = arith.constant 0 : i32
    %c0_i32_1 = arith.constant 0 : i32
    %c0_i32_2 = arith.constant 0 : i32
    return %c0_i32, %c0_i32_0, %c0_i32_1 : i32, i32, i32
  }
  func.func @transform_3(%arg0: i32) -> (i32, i32) {
    %c0_i32 = arith.constant 0 : i32
    %c0_i32_0 = arith.constant 0 : i32
    %c0_i32_1 = arith.constant 0 : i32
    return %c0_i32, %c0_i32_0 : i32, i32
  }
  func.func @transform_4(%arg0: i32) -> (i32, i32, i32) {
    %c0_i32 = arith.constant 0 : i32
    %c0_i32_0 = arith.constant 0 : i32
    %c0_i32_1 = arith.constant 0 : i32
    %c0_i32_2 = arith.constant 0 : i32
    return %c0_i32, %c0_i32_0, %c0_i32_1 : i32, i32, i32
  }
  func.func @transform_5(%arg0: i32) -> (i32, i32, i32) {
    %c0_i32 = arith.constant 0 : i32
    %c0_i32_0 = arith.constant 0 : i32
    %c0_i32_1 = arith.constant 0 : i32
    %c0_i32_2 = arith.constant 0 : i32
    return %c0_i32, %c0_i32_0, %c0_i32_1 : i32, i32, i32
  }
  func.func @transform_6(%arg0: i32) -> (i32, i32, i32) {
    %c0_i32 = arith.constant 0 : i32
    %c0_i32_0 = arith.constant 0 : i32
    %c0_i32_1 = arith.constant 0 : i32
    %c0_i32_2 = arith.constant 0 : i32
    return %c0_i32, %c0_i32_0, %c0_i32_1 : i32, i32, i32
  }
  func.func @transform_7(%arg0: i32) -> (i32, i32, i32) {
    %c0_i32 = arith.constant 0 : i32
    %c0_i32_0 = arith.constant 0 : i32
    %c0_i32_1 = arith.constant 0 : i32
    %c0_i32_2 = arith.constant 0 : i32
    return %c0_i32, %c0_i32_0, %c0_i32_1 : i32, i32, i32
  }
  func.func @transform_8(%arg0: i32) -> (i32, i32, i32) {
    %c0_i32 = arith.constant 0 : i32
    %c0_i32_0 = arith.constant 0 : i32
    %c0_i32_1 = arith.constant 0 : i32
    %c0_i32_2 = arith.constant 0 : i32
    return %c0_i32, %c0_i32_0, %c0_i32_1 : i32, i32, i32
  }
  func.func @transform_9(%arg0: i32) -> (i32, i32, i32) {
    %c0_i32 = arith.constant 0 : i32
    %c0_i32_0 = arith.constant 0 : i32
    %c0_i32_1 = arith.constant 0 : i32
    %c0_i32_2 = arith.constant 0 : i32
    return %c0_i32, %c0_i32_0, %c0_i32_1 : i32, i32, i32
  }
  func.func @transform_10(%arg0: i32) -> (i32, i32, i32) {
    %c0_i32 = arith.constant 0 : i32
    %c0_i32_0 = arith.constant 0 : i32
    %c0_i32_1 = arith.constant 0 : i32
    %c0_i32_2 = arith.constant 0 : i32
    return %c0_i32, %c0_i32_0, %c0_i32_1 : i32, i32, i32
  }
  func.func @transform_11(%arg0: i32) -> (i32, i32, i32) {
    %c0_i32 = arith.constant 0 : i32
    %c0_i32_0 = arith.constant 0 : i32
    %c0_i32_1 = arith.constant 0 : i32
    %c0_i32_2 = arith.constant 0 : i32
    return %c0_i32, %c0_i32_0, %c0_i32_1 : i32, i32, i32
  }
  func.func @transform_12(%arg0: i32) -> (i32, i32, i32) {
    %c0_i32 = arith.constant 0 : i32
    %c0_i32_0 = arith.constant 0 : i32
    %c0_i32_1 = arith.constant 0 : i32
    return %arg0, %c0_i32, %c0_i32_0 : i32, i32, i32
  }
}

</mosaic_0001>

<llo_original>
// kernel: deconvnet_forward.1
$region0: #{deconvnet_forward.1}
  #allocation0 [shape = 'u32[]', space=smem, size = 0x4, offset = 0x4, fixed_abs, tag = 'smem constant byte address 0x4 - core index']
  #allocation1 [shape = 'u32[144,128]{1,0:T(1,128)}', space=vmem, size = 0x12000, scoped, tag = 'internal scratch']
  %s0 = inlined_call_operand.vmem [shape: f32[2,7], index: 0, kind: input, shape index: {}]
  %s1 = inlined_call_operand.vmem [shape: f32[4], index: 1, kind: input, shape index: {}]
  %s2 = inlined_call_operand.vmem [shape: f32[7,16,16], index: 2, kind: input, shape index: {}]
  %s3 = inlined_call_operand.vmem [shape: f32[16,16], index: 3, kind: input, shape index: {}]
  %s4 = inlined_call_operand.vmem [shape: f32[4,32,16], index: 4, kind: input, shape index: {}]
  %s5 = inlined_call_operand.vmem [shape: f32[4,16,32], index: 5, kind: input, shape index: {}]
  %s6 = inlined_call_operand.vmem [shape: f32[4,64,32], index: 6, kind: input, shape index: {}]
  %s7 = inlined_call_operand.vmem [shape: f32[4,32,64], index: 7, kind: input, shape index: {}]
  %s8 = inlined_call_operand.vmem [shape: f32[4,128,64], index: 8, kind: input, shape index: {}]
  %s9 = inlined_call_operand.vmem [shape: f32[4,64,128], index: 9, kind: input, shape index: {}]
  %s10 = inlined_call_operand.vmem [shape: f32[4,256,128], index: 10, kind: input, shape index: {}]
  %s11 = inlined_call_operand.vmem [shape: f32[4,128,256], index: 11, kind: input, shape index: {}]
  %s12 = inlined_call_operand.vmem [shape: f32[2,256,256], index: 12, kind: output, shape index: {}]
  %s13 = sld [smem:[#allocation0]]
  $region89: #{deconvnet_forward.1} parent=0
    _
  %s15 = ssub.s32 1, %s13
  %s16 = scalar_select 0, %s15, %s13
  $region1: #{deconvnet_forward.1} parent=0
    #allocation2 [shape = 'u8[1024]{0}', space=smem, size = 0x400, scoped, tag = 'input window, operand 0, single buffered']
    #allocation3 [shape = 's32[2]{0}', space=sflag, size = 0x8, scoped, tag = 'scoped memory for deconvnet_forward.1']
    #allocation4 [shape = 'u8[512]{0}', space=smem, size = 0x200, scoped, tag = 'input window, operand 1, single buffered']
    #allocation5 [shape = 's32[1]{0}', space=sflag, size = 0x4, scoped, tag = 'scoped memory for deconvnet_forward.1']
    %17 = vsyncpa [#allocation3], 0
    %18 = vsyncpa [#allocation5], 0
    loop: start=0, step=1, limit=4
    $region2: #{deconvnet_forward.1} parent=1 // loop_pre_header
      _
    $region3: #{deconvnet_forward.1} parent=1 // loop_header
      %s20 = sphi 0, %s24
      %p21 = scmp.ge.s32.totalorder %s20, 4
      %s28 = sphi 0, %s28
      %s30 = sphi 0, %s28
      %s31 = sphi 0, %s30
      %s45 = sphi 0, %s31
      %s49 = sphi 0, %s49
      %s51 = sphi 0, %s49
      %s52 = sphi 0, %s51
      %s66 = sphi 0, %s52
      %s70 = sphi 0, %s70
      %s72 = sphi 0, %s70
      %s73 = sphi 0, %s72
      %s87 = sphi 0, %s73
      %s91 = sphi 0, %s91
      %s93 = sphi 0, %s91
      %s94 = sphi 0, %s93
      %s108 = sphi 0, %s94
      %s112 = sphi 0, %s112
      %s114 = sphi 0, %s112
      %s115 = sphi 0, %s114
      %s129 = sphi 0, %s115
      %s133 = sphi 0, %s133
      %s135 = sphi 0, %s133
      %s136 = sphi 0, %s135
      %s150 = sphi 0, %s136
      %s154 = sphi 0, %s154
      %s156 = sphi 0, %s154
      %s157 = sphi 0, %s156
      %s171 = sphi 0, %s157
      %s175 = sphi 0, %s175
      %s177 = sphi 0, %s175
      %s178 = sphi 0, %s177
      %s192 = sphi 0, %s178
      %s196 = sphi 0, %s196
      %s198 = sphi 0, %s196
      %s199 = sphi 0, %s198
      %s213 = sphi 0, %s199
      %s217 = sphi 0, %s217
      %s219 = sphi 0, %s217
      %s220 = sphi 0, %s219
      %s234 = sphi 0, %s220
      %s238 = sphi 0, %s238
      %s240 = sphi 0, %s238
      %s241 = sphi 0, %s240
      %s255 = sphi 0, %s241
      %s259 = sphi 0, %s259
      %s261 = sphi 0, %s259
      %s262 = sphi 0, %s261
      %s276 = sphi 0, %s262
      %s282 = sphi 0, %s284
      %s285 = sphi 0, %s282
      %s286 = sphi 0, %s285
      %s302 = sphi 0, %s286
    $region4: #{deconvnet_forward.1} parent=1 // loop_header_branch
      %23 = sbr.rel (%p21) target = $region8
    $region5: #{deconvnet_forward.1} parent=1 // loop_body
      %s25 = ssub.s32 %s20, 1
      %s26 = ssub.s32 %s20, 2
      %s27 = sadd.s32 %s20, 1
      %s29 = sadd.s32 %s28, 1
      %p32 = scmp.eq.s32.totalorder %s20, 1
      %p33 = scmp.ne.s32.totalorder %s28, %s30
      %p34 = scmp.eq.s32.totalorder %s20, 0
      %p35 = por %p33, %p34
      %p36 = scmp.ne.s32.totalorder %s28, %s30
      %p37 = scmp.eq.s32.totalorder %s25, 1
      %p38 = por %p36, %p37
      %p39 = scmp.ne.s32.totalorder %s30, %s31
      %p40 = scmp.eq.s32.totalorder %s25, 0
      %p41 = por %p39, %p40
      %p42 = scmp.ne.s32.totalorder %s30, %s31
      %p43 = scmp.eq.s32.totalorder %s26, 1
      %p44 = por %p42, %p43
      %p46 = scmp.ne.s32.totalorder %s31, %s45
      %p47 = scmp.eq.s32.totalorder %s26, 0
      %p48 = por %p46, %p47
      %s50 = sadd.s32 %s49, 1
      %p53 = scmp.eq.s32.totalorder %s20, 1
      %p54 = scmp.ne.s32.totalorder %s49, %s51
      %p55 = scmp.eq.s32.totalorder %s20, 0
      %p56 = por %p54, %p55
      %p57 = scmp.ne.s32.totalorder %s49, %s51
      %p58 = scmp.eq.s32.totalorder %s25, 1
      %p59 = por %p57, %p58
      %p60 = scmp.ne.s32.totalorder %s51, %s52
      %p61 = scmp.eq.s32.totalorder %s25, 0
      %p62 = por %p60, %p61
      %p63 = scmp.ne.s32.totalorder %s51, %s52
      %p64 = scmp.eq.s32.totalorder %s26, 1
      %p65 = por %p63, %p64
      %p67 = scmp.ne.s32.totalorder %s52, %s66
      %p68 = scmp.eq.s32.totalorder %s26, 0
      %p69 = por %p67, %p68
      %s71 = sadd.s32 %s70, 1
      %p74 = scmp.eq.s32.totalorder %s20, 1
      %p75 = scmp.ne.s32.totalorder %s70, %s72
      %p76 = scmp.eq.s32.totalorder %s20, 0
      %p77 = por %p75, %p76
      %p78 = scmp.ne.s32.totalorder %s70, %s72
      %p79 = scmp.eq.s32.totalorder %s25, 1
      %p80 = por %p78, %p79
      %p81 = scmp.ne.s32.totalorder %s72, %s73
      %p82 = scmp.eq.s32.totalorder %s25, 0
      %p83 = por %p81, %p82
      %p84 = scmp.ne.s32.totalorder %s72, %s73
      %p85 = scmp.eq.s32.totalorder %s26, 1
      %p86 = por %p84, %p85
      %p88 = scmp.ne.s32.totalorder %s73, %s87
      %p89 = scmp.eq.s32.totalorder %s26, 0
      %p90 = por %p88, %p89
      %s92 = sadd.s32 %s91, 1
      %p95 = scmp.eq.s32.totalorder %s20, 1
      %p96 = scmp.ne.s32.totalorder %s91, %s93
      %p97 = scmp.eq.s32.totalorder %s20, 0
      %p98 = por %p96, %p97
      %p99 = scmp.ne.s32.totalorder %s91, %s93
      %p100 = scmp.eq.s32.totalorder %s25, 1
      %p101 = por %p99, %p100
      %p102 = scmp.ne.s32.totalorder %s93, %s94
      %p103 = scmp.eq.s32.totalorder %s25, 0
      %p104 = por %p102, %p103
      %p105 = scmp.ne.s32.totalorder %s93, %s94
      %p106 = scmp.eq.s32.totalorder %s26, 1
      %p107 = por %p105, %p106
      %p109 = scmp.ne.s32.totalorder %s94, %s108
      %p110 = scmp.eq.s32.totalorder %s26, 0
      %p111 = por %p109, %p110
      %s113 = sadd.s32 %s112, 1
      %p116 = scmp.eq.s32.totalorder %s20, 1
      %p117 = scmp.ne.s32.totalorder %s112, %s114
      %p118 = scmp.eq.s32.totalorder %s20, 0
      %p119 = por %p117, %p118
      %p120 = scmp.ne.s32.totalorder %s112, %s114
      %p121 = scmp.eq.s32.totalorder %s25, 1
      %p122 = por %p120, %p121
      %p123 = scmp.ne.s32.totalorder %s114, %s115
      %p124 = scmp.eq.s32.totalorder %s25, 0
      %p125 = por %p123, %p124
      %p126 = scmp.ne.s32.totalorder %s114, %s115
      %p127 = scmp.eq.s32.totalorder %s26, 1
      %p128 = por %p126, %p127
      %p130 = scmp.ne.s32.totalorder %s115, %s129
      %p131 = scmp.eq.s32.totalorder %s26, 0
      %p132 = por %p130, %p131
      %s134 = sadd.s32 %s133, 1
      %p137 = scmp.eq.s32.totalorder %s20, 1
      %p138 = scmp.ne.s32.totalorder %s133, %s135
      %p139 = scmp.eq.s32.totalorder %s20, 0
      %p140 = por %p138, %p139
      %p141 = scmp.ne.s32.totalorder %s133, %s135
      %p142 = scmp.eq.s32.totalorder %s25, 1
      %p143 = por %p141, %p142
      %p144 = scmp.ne.s32.totalorder %s135, %s136
      %p145 = scmp.eq.s32.totalorder %s25, 0
      %p146 = por %p144, %p145
      %p147 = scmp.ne.s32.totalorder %s135, %s136
      %p148 = scmp.eq.s32.totalorder %s26, 1
      %p149 = por %p147, %p148
      %p151 = scmp.ne.s32.totalorder %s136, %s150
      %p152 = scmp.eq.s32.totalorder %s26, 0
      %p153 = por %p151, %p152
      %s155 = sadd.s32 %s154, 1
      %p158 = scmp.eq.s32.totalorder %s20, 1
      %p159 = scmp.ne.s32.totalorder %s154, %s156
      %p160 = scmp.eq.s32.totalorder %s20, 0
      %p161 = por %p159, %p160
      %p162 = scmp.ne.s32.totalorder %s154, %s156
      %p163 = scmp.eq.s32.totalorder %s25, 1
      %p164 = por %p162, %p163
      %p165 = scmp.ne.s32.totalorder %s156, %s157
      %p166 = scmp.eq.s32.totalorder %s25, 0
      %p167 = por %p165, %p166
      %p168 = scmp.ne.s32.totalorder %s156, %s157
      %p169 = scmp.eq.s32.totalorder %s26, 1
      %p170 = por %p168, %p169
      %p172 = scmp.ne.s32.totalorder %s157, %s171
      %p173 = scmp.eq.s32.totalorder %s26, 0
      %p174 = por %p172, %p173
      %s176 = sadd.s32 %s175, 1
      %p179 = scmp.eq.s32.totalorder %s20, 1
      %p180 = scmp.ne.s32.totalorder %s175, %s177
      %p181 = scmp.eq.s32.totalorder %s20, 0
      %p182 = por %p180, %p181
      %p183 = scmp.ne.s32.totalorder %s175, %s177
      %p184 = scmp.eq.s32.totalorder %s25, 1
      %p185 = por %p183, %p184
      %p186 = scmp.ne.s32.totalorder %s177, %s178
      %p187 = scmp.eq.s32.totalorder %s25, 0
      %p188 = por %p186, %p187
      %p189 = scmp.ne.s32.totalorder %s177, %s178
      %p190 = scmp.eq.s32.totalorder %s26, 1
      %p191 = por %p189, %p190
      %p193 = scmp.ne.s32.totalorder %s178, %s192
      %p194 = scmp.eq.s32.totalorder %s26, 0
      %p195 = por %p193, %p194
      %s197 = sadd.s32 %s196, 1
      %p200 = scmp.eq.s32.totalorder %s20, 1
      %p201 = scmp.ne.s32.totalorder %s196, %s198
      %p202 = scmp.eq.s32.totalorder %s20, 0
      %p203 = por %p201, %p202
      %p204 = scmp.ne.s32.totalorder %s196, %s198
      %p205 = scmp.eq.s32.totalorder %s25, 1
      %p206 = por %p204, %p205
      %p207 = scmp.ne.s32.totalorder %s198, %s199
      %p208 = scmp.eq.s32.totalorder %s25, 0
      %p209 = por %p207, %p208
      %p210 = scmp.ne.s32.totalorder %s198, %s199
      %p211 = scmp.eq.s32.totalorder %s26, 1
      %p212 = por %p210, %p211
      %p214 = scmp.ne.s32.totalorder %s199, %s213
      %p215 = scmp.eq.s32.totalorder %s26, 0
      %p216 = por %p214, %p215
      %s218 = sadd.s32 %s217, 1
      %p221 = scmp.eq.s32.totalorder %s20, 1
      %p222 = scmp.ne.s32.totalorder %s217, %s219
      %p223 = scmp.eq.s32.totalorder %s20, 0
      %p224 = por %p222, %p223
      %p225 = scmp.ne.s32.totalorder %s217, %s219
      %p226 = scmp.eq.s32.totalorder %s25, 1
      %p227 = por %p225, %p226
      %p228 = scmp.ne.s32.totalorder %s219, %s220
      %p229 = scmp.eq.s32.totalorder %s25, 0
      %p230 = por %p228, %p229
      %p231 = scmp.ne.s32.totalorder %s219, %s220
      %p232 = scmp.eq.s32.totalorder %s26, 1
      %p233 = por %p231, %p232
      %p235 = scmp.ne.s32.totalorder %s220, %s234
      %p236 = scmp.eq.s32.totalorder %s26, 0
      %p237 = por %p235, %p236
      %s239 = sadd.s32 %s238, 1
      %p242 = scmp.eq.s32.totalorder %s20, 1
      %p243 = scmp.ne.s32.totalorder %s238, %s240
      %p244 = scmp.eq.s32.totalorder %s20, 0
      %p245 = por %p243, %p244
      %p246 = scmp.ne.s32.totalorder %s238, %s240
      %p247 = scmp.eq.s32.totalorder %s25, 1
      %p248 = por %p246, %p247
      %p249 = scmp.ne.s32.totalorder %s240, %s241
      %p250 = scmp.eq.s32.totalorder %s25, 0
      %p251 = por %p249, %p250
      %p252 = scmp.ne.s32.totalorder %s240, %s241
      %p253 = scmp.eq.s32.totalorder %s26, 1
      %p254 = por %p252, %p253
      %p256 = scmp.ne.s32.totalorder %s241, %s255
      %p257 = scmp.eq.s32.totalorder %s26, 0
      %p258 = por %p256, %p257
      %s260 = sadd.s32 %s259, 1
      %p263 = scmp.eq.s32.totalorder %s20, 1
      %p264 = scmp.ne.s32.totalorder %s259, %s261
      %p265 = scmp.eq.s32.totalorder %s20, 0
      %p266 = por %p264, %p265
      %p267 = scmp.ne.s32.totalorder %s259, %s261
      %p268 = scmp.eq.s32.totalorder %s25, 1
      %p269 = por %p267, %p268
      %p270 = scmp.ne.s32.totalorder %s261, %s262
      %p271 = scmp.eq.s32.totalorder %s25, 0
      %p272 = por %p270, %p271
      %p273 = scmp.ne.s32.totalorder %s261, %s262
      %p274 = scmp.eq.s32.totalorder %s26, 1
      %p275 = por %p273, %p274
      %p277 = scmp.ne.s32.totalorder %s262, %s276
      %p278 = scmp.eq.s32.totalorder %s26, 0
      %p279 = por %p277, %p278
      %s280 = ssub.s32 %s20, %s27
      %p281 = scmp.eq.s32.totalorder %s280, 0
      %s283 = sadd.s32 %s282, 1
      %s284 = scalar_select %p281, %s282, %s283
      %p287 = pneg %p281
      %p288 = scmp.eq.s32.totalorder %s20, 1
      %p289 = por %p287, %p288
      %p290 = scmp.ne.s32.totalorder %s282, %s285
      %p291 = scmp.eq.s32.totalorder %s20, 0
      %p292 = por %p290, %p291
      %p293 = scmp.ne.s32.totalorder %s282, %s285
      %p294 = scmp.eq.s32.totalorder %s25, 1
      %p295 = por %p293, %p294
      %p296 = scmp.ne.s32.totalorder %s285, %s286
      %p297 = scmp.eq.s32.totalorder %s25, 0
      %p298 = por %p296, %p297
      %p299 = scmp.ne.s32.totalorder %s285, %s286
      %p300 = scmp.eq.s32.totalorder %s26, 1
      %p301 = por %p299, %p300
      %p303 = scmp.ne.s32.totalorder %s286, %s302
      %p304 = scmp.eq.s32.totalorder %s26, 0
      %p305 = por %p303, %p304
      %p306 = scmp.le.s32.totalorder 1, %s20
      %p307 = scmp.lt.s32.totalorder %s20, 3
      %p308 = pnand %p306, %p307
      %p309 = pneg %p308
      // Predicated region
      $region9: #{deconvnet_forward.1} parent=5 // pred_check
        _
      $region10: #{deconvnet_forward.1} parent=5 // pred_check_branch
        %311 = sbr.rel (%p308) target = $region12
      $region11: #{deconvnet_forward.1} parent=5 // pred_region
        %s312 = ssub.s32 %s20, 1
        // Predicated region
        $region13: #{deconvnet_forward.1} parent=11 // pred_check
          %p313 = pneg %p41
        $region14: #{deconvnet_forward.1} parent=11 // pred_check_branch
          %315 = sbr.rel (%p313) target = $region16
        $region15: #{deconvnet_forward.1} parent=11 // pred_region
          %s317 = ssub.s32 32, 32
          %318 = vsyncadd [#allocation3], %s317
          %s320 = sshll.u32 %s0, 4
          %s321 = int_to_ptr.vmem [resolvable:$true] %s320
          %323 = dma.vmem_to_smem %s321, 32, [#allocation2], [#allocation3]
        $region16: #{deconvnet_forward.1} parent=11 // pred_fallthru
          _
        // Predicated region
        $region17: #{deconvnet_forward.1} parent=11 // pred_check
          %p324 = pneg %p62
        $region18: #{deconvnet_forward.1} parent=11 // pred_check_branch
          %326 = sbr.rel (%p324) target = $region20
        $region19: #{deconvnet_forward.1} parent=11 // pred_region
          %s328 = ssub.s32 16, 16
          %329 = vsyncadd [#allocation5], %s328
          %s331 = sshll.u32 %s1, 4
          %s332 = int_to_ptr.vmem [resolvable:$true] %s331
          %334 = dma.vmem_to_smem %s332, 16, [#allocation4], [#allocation5]
        $region20: #{deconvnet_forward.1} parent=11 // pred_fallthru
          _
        // Predicated region
        $region21: #{deconvnet_forward.1} parent=11 // pred_check
          %p335 = pneg %p83
        $region22: #{deconvnet_forward.1} parent=11 // pred_check_branch
          %337 = sbr.rel (%p335) target = $region24
        $region23: #{deconvnet_forward.1} parent=11 // pred_region
          _
        $region24: #{deconvnet_forward.1} parent=11 // pred_fallthru
          _
        // Predicated region
        $region25: #{deconvnet_forward.1} parent=11 // pred_check
          %p338 = pneg %p104
        $region26: #{deconvnet_forward.1} parent=11 // pred_check_branch
          %340 = sbr.rel (%p338) target = $region28
        $region27: #{deconvnet_forward.1} parent=11 // pred_region
          _
        $region28: #{deconvnet_forward.1} parent=11 // pred_fallthru
          _
        // Predicated region
        $region29: #{deconvnet_forward.1} parent=11 // pred_check
          %p341 = pneg %p125
        $region30: #{deconvnet_forward.1} parent=11 // pred_check_branch
          %343 = sbr.rel (%p341) target = $region32
        $region31: #{deconvnet_forward.1} parent=11 // pred_region
          _
        $region32: #{deconvnet_forward.1} parent=11 // pred_fallthru
          _
        // Predicated region
        $region33: #{deconvnet_forward.1} parent=11 // pred_check
          %p344 = pneg %p146
        $region34: #{deconvnet_forward.1} parent=11 // pred_check_branch
          %346 = sbr.rel (%p344) target = $region36
        $region35: #{deconvnet_forward.1} parent=11 // pred_region
          _
        $region36: #{deconvnet_forward.1} parent=11 // pred_fallthru
          _
        // Predicated region
        $region37: #{deconvnet_forward.1} parent=11 // pred_check
          %p347 = pneg %p167
        $region38: #{deconvnet_forward.1} parent=11 // pred_check_branch
          %349 = sbr.rel (%p347) target = $region40
        $region39: #{deconvnet_forward.1} parent=11 // pred_region
          _
        $region40: #{deconvnet_forward.1} parent=11 // pred_fallthru
          _
        // Predicated region
        $region41: #{deconvnet_forward.1} parent=11 // pred_check
          %p350 = pneg %p188
        $region42: #{deconvnet_forward.1} parent=11 // pred_check_branch
          %352 = sbr.rel (%p350) target = $region44
        $region43: #{deconvnet_forward.1} parent=11 // pred_region
          _
        $region44: #{deconvnet_forward.1} parent=11 // pred_fallthru
          _
        // Predicated region
        $region45: #{deconvnet_forward.1} parent=11 // pred_check
          %p353 = pneg %p209
        $region46: #{deconvnet_forward.1} parent=11 // pred_check_branch
          %355 = sbr.rel (%p353) target = $region48
        $region47: #{deconvnet_forward.1} parent=11 // pred_region
          _
        $region48: #{deconvnet_forward.1} parent=11 // pred_fallthru
          _
        // Predicated region
        $region49: #{deconvnet_forward.1} parent=11 // pred_check
          %p356 = pneg %p230
        $region50: #{deconvnet_forward.1} parent=11 // pred_check_branch
          %358 = sbr.rel (%p356) target = $region52
        $region51: #{deconvnet_forward.1} parent=11 // pred_region
          _
        $region52: #{deconvnet_forward.1} parent=11 // pred_fallthru
          _
        // Predicated region
        $region53: #{deconvnet_forward.1} parent=11 // pred_check
          %p359 = pneg %p251
        $region54: #{deconvnet_forward.1} parent=11 // pred_check_branch
          %361 = sbr.rel (%p359) target = $region56
        $region55: #{deconvnet_forward.1} parent=11 // pred_region
          _
        $region56: #{deconvnet_forward.1} parent=11 // pred_fallthru
          _
        // Predicated region
        $region57: #{deconvnet_forward.1} parent=11 // pred_check
          %p362 = pneg %p272
        $region58: #{deconvnet_forward.1} parent=11 // pred_check_branch
          %364 = sbr.rel (%p362) target = $region60
        $region59: #{deconvnet_forward.1} parent=11 // pred_region
          _
        $region60: #{deconvnet_forward.1} parent=11 // pred_fallthru
          _
      $region12: #{deconvnet_forward.1} parent=5 // pred_fallthru
        _
      %p365 = scmp.lt.s32.totalorder %s20, 2
      // Predicated region
      $region61: #{deconvnet_forward.1} parent=5 // pred_check
        %p366 = pneg %p365
      $region62: #{deconvnet_forward.1} parent=5 // pred_check_branch
        %368 = sbr.rel (%p366) target = $region64
      $region63: #{deconvnet_forward.1} parent=5 // pred_region
        _
      $region64: #{deconvnet_forward.1} parent=5 // pred_fallthru
        _
      %p369 = scmp.le.s32.totalorder 1, %s20
      %p370 = scmp.lt.s32.totalorder %s20, 3
      %p371 = pnand %p369, %p370
      %p372 = pneg %p371
      // Predicated region
      $region65: #{deconvnet_forward.1} parent=5 // pred_check
        _
      $region66: #{deconvnet_forward.1} parent=5 // pred_check_branch
        %374 = sbr.rel (%p371) target = $region68
      $region67: #{deconvnet_forward.1} parent=5 // pred_region
        %s375 = ssub.s32 %s20, 1
        // Predicated region
        $region69: #{deconvnet_forward.1} parent=67 // pred_check
          %p376 = pneg %p41
        $region70: #{deconvnet_forward.1} parent=67 // pred_check_branch
          %378 = sbr.rel (%p376) target = $region72
        $region71: #{deconvnet_forward.1} parent=67 // pred_region
          %379 = dma.done [#allocation3], 32
        $region72: #{deconvnet_forward.1} parent=67 // pred_fallthru
          _
        // Predicated region
        $region73: #{deconvnet_forward.1} parent=67 // pred_check
          %p380 = pneg %p62
        $region74: #{deconvnet_forward.1} parent=67 // pred_check_branch
          %382 = sbr.rel (%p380) target = $region76
        $region75: #{deconvnet_forward.1} parent=67 // pred_region
          %383 = dma.done [#allocation5], 16
        $region76: #{deconvnet_forward.1} parent=67 // pred_fallthru
          _
        %384 = sfence
        %p385 = pneg %p41
        %p386 = pneg %p38
        %p387 = pneg %p62
        %p388 = pneg %p59
        %p389 = pneg %p83
        %p390 = pneg %p80
        %p391 = pneg %p104
        %p392 = pneg %p101
        %p393 = pneg %p125
        %p394 = pneg %p122
        %p395 = pneg %p146
        %p396 = pneg %p143
        %p397 = pneg %p167
        %p398 = pneg %p164
        %p399 = pneg %p188
        %p400 = pneg %p185
        %p401 = pneg %p209
        %p402 = pneg %p206
        %p403 = pneg %p230
        %p404 = pneg %p227
        %p405 = pneg %p251
        %p406 = pneg %p248
        %p407 = pneg %p272
        %p408 = pneg %p269
        %p409 = pneg %p298
        %p410 = pneg %p295
        %p411 = scmp.lt.s32.totalorder %s25, 1
        %s412 = scalar_select %p411, %s25, 1
        %s413 = smul.addr %s412, 64
        %s414 = smul.addr %s413, 8
        %s415 = scalar_lea.vmem %s12, %s414
        %p416 = scmp.lt.s32.totalorder %s25, 1
        %s417 = scalar_select %p416, %s25, 1
        %s418 = smul.addr %s417, 64
        %s419 = smul.addr %s418, 8
        %s420 = scalar_lea.vmem %s12, %s419
        %v421 = vld [vmem:[%s3] sm:$0xff]
        %v422 = vld [vmem:[%s3 + $0x8] sm:$0xff]
        %s423 = smul.u32 %s25, 128
        %s424 = sld [smem:[#allocation2 + %s423]]
        %v425 = vld [vmem:[%s2] sm:$0xff]
        %v426 = vld [vmem:[%s2 + $0x8] sm:$0xff]
        %v427 = vstv %s424
        %v428 = vmul.f32 %v427, %v425
        %v429 = vmul.f32 %v427, %v426
        %v430 = vadd.f32 %v421, %v428
        %v431 = vadd.f32 %v422, %v429
        %s432 = sadd.s32 %s423, 1
        %s433 = sld [smem:[#allocation2 + %s432]]
        %s434 = scalar_lea.vmem %s2, 16
        %v435 = vld [vmem:[%s434] sm:$0xff]
        %v436 = vld [vmem:[%s434 + $0x8] sm:$0xff]
        %v437 = vstv %s433
        %v438 = vmul.f32 %v437, %v435
        %v439 = vmul.f32 %v437, %v436
        %v440 = vadd.f32 %v430, %v438
        %v441 = vadd.f32 %v431, %v439
        %s442 = sadd.s32 %s423, 2
        %s443 = sld [smem:[#allocation2 + %s442]]
        %s444 = scalar_lea.vmem %s2, 32
        %v445 = vld [vmem:[%s444] sm:$0xff]
        %v446 = vld [vmem:[%s444 + $0x8] sm:$0xff]
        %v447 = vstv %s443
        %v448 = vmul.f32 %v447, %v445
        %v449 = vmul.f32 %v447, %v446
        %v450 = vadd.f32 %v440, %v448
        %v451 = vadd.f32 %v441, %v449
        %s452 = sadd.s32 %s423, 3
        %s453 = sld [smem:[#allocation2 + %s452]]
        %s454 = scalar_lea.vmem %s2, 48
        %v455 = vld [vmem:[%s454] sm:$0xff]
        %v456 = vld [vmem:[%s454 + $0x8] sm:$0xff]
        %v457 = vstv %s453
        %v458 = vmul.f32 %v457, %v455
        %v459 = vmul.f32 %v457, %v456
        %v460 = vadd.f32 %v450, %v458
        %v461 = vadd.f32 %v451, %v459
        %s462 = sadd.s32 %s423, 4
        %s463 = sld [smem:[#allocation2 + %s462]]
        %s464 = scalar_lea.vmem %s2, 64
        %v465 = vld [vmem:[%s464] sm:$0xff]
        %v466 = vld [vmem:[%s464 + $0x8] sm:$0xff]
        %v467 = vstv %s463
        %v468 = vmul.f32 %v467, %v465
        %v469 = vmul.f32 %v467, %v466
        %v470 = vadd.f32 %v460, %v468
        %v471 = vadd.f32 %v461, %v469
        %s472 = sadd.s32 %s423, 5
        %s473 = sld [smem:[#allocation2 + %s472]]
        %s474 = scalar_lea.vmem %s2, 80
        %v475 = vld [vmem:[%s474] sm:$0xff]
        %v476 = vld [vmem:[%s474 + $0x8] sm:$0xff]
        %v477 = vstv %s473
        %v478 = vmul.f32 %v477, %v475
        %v479 = vmul.f32 %v477, %v476
        %v480 = vadd.f32 %v470, %v478
        %v481 = vadd.f32 %v471, %v479
        %s482 = sadd.s32 %s423, 6
        %s483 = sld [smem:[#allocation2 + %s482]]
        %s484 = scalar_lea.vmem %s2, 96
        %v485 = vld [vmem:[%s484] sm:$0xff]
        %v486 = vld [vmem:[%s484 + $0x8] sm:$0xff]
        %v487 = vstv %s483
        %v488 = vmul.f32 %v487, %v485
        %v489 = vmul.f32 %v487, %v486
        %v490 = vadd.f32 %v480, %v488
        %v491 = vadd.f32 %v481, %v489
        %v492 = vmax.f32 %v490, 0.0
        %v493 = vmax.f32 %v491, 0.0
        %s494 = sld [smem:[#allocation4]]
        %v495 = vld [vmem:[%s5] sm:$0xff]
        %v496 = vld [vmem:[%s5 + $0x8] sm:$0xff]
        %vm497 = vcmask 130048
        %v499 = vsel %vm497, %v492, 0
        %v502 = vsel %vm497, %v493, 0
        %504 = vmatprep.subr.mxu0 0.0
        %505 = vmatpush1.msra.mxu0 0.0
        %506 = vmatprep.subr.mxu0 0.0
        %507 = vmatpush1.msra.mxu0 0.0
        %508 = vmatprep.subr.mxu0 0.0
        %509 = vmatpush1.msra.mxu0 0.0
        %510 = vmatprep.subr.mxu0 0.0
        %511 = vmatpush1.msra.mxu0 0.0
        %512 = vmatprep.subr.mxu0 0.0
        %513 = vmatpush1.msra.mxu0 0.0
        %514 = vmatprep.subr.mxu0 0.0
        %515 = vmatpush1.msra.mxu0 0.0
        %516 = vmatprep.subr.mxu0 0.0
        %517 = vmatpush1.msra.mxu0 0.0
        %518 = vmatprep.subr.mxu0 0.0
        %519 = vmatpush1.msra.mxu0 0.0
        %520 = vmatprep.subr.mxu0 0.0
        %521 = vmatpush1.msra.mxu0 0.0
        %522 = vmatprep.subr.mxu0 0.0
        %523 = vmatpush1.msra.mxu0 0.0
        %524 = vmatprep.subr.mxu0 0.0
        %525 = vmatpush1.msra.mxu0 0.0
        %526 = vmatprep.subr.mxu0 0.0
        %527 = vmatpush1.msra.mxu0 0.0
        %528 = vmatprep.subr.mxu0 0.0
        %529 = vmatpush1.msra.mxu0 0.0
        %530 = vmatprep.subr.mxu0 0.0
        %531 = vmatpush1.msra.mxu0 0.0
        %532 = vmatprep.subr.mxu0 0.0
        %533 = vmatpush1.msra.mxu0 %v496
        %534 = vmatprep.subr.mxu0 0.0
        %535 = vmatpush1.msra.mxu0 %v495
        %536 = vmatprep.subr.mxu0 0.0
        %537 = vmatpush2.msra.mxu0 0.0
        %538 = vmatprep.subr.mxu0 0.0
        %539 = vmatpush2.msra.mxu0 0.0
        %540 = vmatprep.subr.mxu0 0.0
        %541 = vmatpush2.msra.mxu0 0.0
        %542 = vmatprep.subr.mxu0 0.0
        %543 = vmatpush2.msra.mxu0 0.0
        %544 = vmatprep.subr.mxu0 0.0
        %545 = vmatpush2.msra.mxu0 0.0
        %546 = vmatprep.subr.mxu0 0.0
        %547 = vmatpush2.msra.mxu0 0.0
        %548 = vmatprep.subr.mxu0 0.0
        %549 = vmatpush2.msra.mxu0 0.0
        %550 = vmatprep.subr.mxu0 0.0
        %551 = vmatpush2.msra.mxu0 0.0
        %552 = vmatprep.subr.mxu0 0.0
        %553 = vmatpush2.msra.mxu0 0.0
        %554 = vmatprep.subr.mxu0 0.0
        %555 = vmatpush2.msra.mxu0 0.0
        %556 = vmatprep.subr.mxu0 0.0
        %557 = vmatpush2.msra.mxu0 0.0
        %558 = vmatprep.subr.mxu0 0.0
        %559 = vmatpush2.msra.mxu0 0.0
        %560 = vmatprep.subr.mxu0 0.0
        %561 = vmatpush2.msra.mxu0 0.0
        %562 = vmatprep.subr.mxu0 0.0
        %563 = vmatpush2.msra.mxu0 0.0
        %564 = vmatprep.subr.mxu0 0.0
        %565 = vmatpush2.msra.mxu0 0.0
        %566 = vmatprep.subr.mxu0 0.0
        %567 = vmatpush2.msra.mxu0 0.0
        %568 = vmatprep.mubr.f32.mxu0 0.0
        %569 = vmatmul.mubr.f32.gmra.mxu0 %v499
        %v570 = vpop.f32.mrf.mxu0
        %v571 = vadd.f32 0.0, %v570
        %v572 = vpop.f32.mrf.mxu0
        %573 = vmatprep.mubr.f32.mxu0 0.0
        %574 = vmatmul.mubr.f32.gmra.mxu0 %v502
        %v575 = vpop.f32.mrf.mxu0
        %v576 = vadd.f32 0.0, %v575
        %v577 = vpop.f32.mrf.mxu0
        %578 = vdwg.mxu0
        %v579 = vld [vmem:[%s4] sm:$0xff]
        %v580 = vld [vmem:[%s4 + $0x8] sm:$0xff]
        %v581 = vld [vmem:[%s4 + $0x10] sm:$0xff]
        %v582 = vld [vmem:[%s4 + $0x18] sm:$0xff]
        %s583 = scalar_lea.vmem %s5, 16
        %v584 = vld [vmem:[%s583] sm:$0xff]
        %v585 = vld [vmem:[%s583 + $0x8] sm:$0xff]
        %586 = vmatprep.subr.mxu0 0.0
        %587 = vmatpush1.msra.mxu0 0.0
        %588 = vmatprep.subr.mxu0 0.0
        %589 = vmatpush1.msra.mxu0 0.0
        %590 = vmatprep.subr.mxu0 0.0
        %591 = vmatpush1.msra.mxu0 0.0
        %592 = vmatprep.subr.mxu0 0.0
        %593 = vmatpush1.msra.mxu0 0.0
        %594 = vmatprep.subr.mxu0 0.0
        %595 = vmatpush1.msra.mxu0 0.0
        %596 = vmatprep.subr.mxu0 0.0
        %597 = vmatpush1.msra.mxu0 0.0
        %598 = vmatprep.subr.mxu0 0.0
        %599 = vmatpush1.msra.mxu0 0.0
        %600 = vmatprep.subr.mxu0 0.0
        %601 = vmatpush1.msra.mxu0 0.0
        %602 = vmatprep.subr.mxu0 0.0
        %603 = vmatpush1.msra.mxu0 0.0
        %604 = vmatprep.subr.mxu0 0.0
        %605 = vmatpush1.msra.mxu0 0.0
        %606 = vmatprep.subr.mxu0 0.0
        %607 = vmatpush1.msra.mxu0 0.0
        %608 = vmatprep.subr.mxu0 0.0
        %609 = vmatpush1.msra.mxu0 0.0
        %610 = vmatprep.subr.mxu0 0.0
        %611 = vmatpush1.msra.mxu0 0.0
        %612 = vmatprep.subr.mxu0 0.0
        %613 = vmatpush1.msra.mxu0 0.0
        %614 = vmatprep.subr.mxu0 0.0
        %615 = vmatpush1.msra.mxu0 %v585
        %616 = vmatprep.subr.mxu0 0.0
        %617 = vmatpush1.msra.mxu0 %v584
        %618 = vmatprep.subr.mxu0 0.0
        %619 = vmatpush2.msra.mxu0 0.0
        %620 = vmatprep.subr.mxu0 0.0
        %621 = vmatpush2.msra.mxu0 0.0
        %622 = vmatprep.subr.mxu0 0.0
        %623 = vmatpush2.msra.mxu0 0.0
        %624 = vmatprep.subr.mxu0 0.0
        %625 = vmatpush2.msra.mxu0 0.0
        %626 = vmatprep.subr.mxu0 0.0
        %627 = vmatpush2.msra.mxu0 0.0
        %628 = vmatprep.subr.mxu0 0.0
        %629 = vmatpush2.msra.mxu0 0.0
        %630 = vmatprep.subr.mxu0 0.0
        %631 = vmatpush2.msra.mxu0 0.0
        %632 = vmatprep.subr.mxu0 0.0
        %633 = vmatpush2.msra.mxu0 0.0
        %634 = vmatprep.subr.mxu0 0.0
        %635 = vmatpush2.msra.mxu0 0.0
        %636 = vmatprep.subr.mxu0 0.0
        %637 = vmatpush2.msra.mxu0 0.0
        %638 = vmatprep.subr.mxu0 0.0
        %639 = vmatpush2.msra.mxu0 0.0
        %640 = vmatprep.subr.mxu0 0.0
        %641 = vmatpush2.msra.mxu0 0.0
        %642 = vmatprep.subr.mxu0 0.0
        %643 = vmatpush2.msra.mxu0 0.0
        %644 = vmatprep.subr.mxu0 0.0
        %645 = vmatpush2.msra.mxu0 0.0
        %646 = vmatprep.subr.mxu0 0.0
        %647 = vmatpush2.msra.mxu0 0.0
        %648 = vmatprep.subr.mxu0 0.0
        %649 = vmatpush2.msra.mxu0 0.0
        %650 = vmatprep.mubr.f32.mxu0 0.0
        %651 = vmatmul.mubr.f32.gmra.mxu0 %v499
        %v652 = vpop.f32.mrf.mxu0
        %v653 = vadd.f32 0.0, %v652
        %v654 = vpop.f32.mrf.mxu0
        %655 = vmatprep.mubr.f32.mxu0 0.0
        %656 = vmatmul.mubr.f32.gmra.mxu0 %v502
        %v657 = vpop.f32.mrf.mxu0
        %v658 = vadd.f32 0.0, %v657
        %v659 = vpop.f32.mrf.mxu0
        %660 = vdwg.mxu0
        %s661 = scalar_lea.vmem %s4, 32
        %v662 = vld [vmem:[%s661] sm:$0xff]
        %v663 = vld [vmem:[%s661 + $0x8] sm:$0xff]
        %v664 = vld [vmem:[%s661 + $0x10] sm:$0xff]
        %v665 = vld [vmem:[%s661 + $0x18] sm:$0xff]
        %v667 = vsel %vm497, %v662, 0
        %v670 = vsel %vm497, %v663, 0
        %v673 = vsel %vm497, %v664, 0
        %v676 = vsel %vm497, %v665, 0
        %678 = vmatprep.subr.mxu0 0.0
        %679 = vmatpush1.msra.mxu0 0.0
        %680 = vmatprep.subr.mxu0 0.0
        %681 = vmatpush1.msra.mxu0 0.0
        %682 = vmatprep.subr.mxu0 0.0
        %683 = vmatpush1.msra.mxu0 0.0
        %684 = vmatprep.subr.mxu0 0.0
        %685 = vmatpush1.msra.mxu0 0.0
        %686 = vmatprep.subr.mxu0 0.0
        %687 = vmatpush1.msra.mxu0 0.0
        %688 = vmatprep.subr.mxu0 0.0
        %689 = vmatpush1.msra.mxu0 0.0
        %690 = vmatprep.subr.mxu0 0.0
        %691 = vmatpush1.msra.mxu0 0.0
        %692 = vmatprep.subr.mxu0 0.0
        %693 = vmatpush1.msra.mxu0 0.0
        %694 = vmatprep.subr.mxu0 0.0
        %695 = vmatpush1.msra.mxu0 0.0
        %696 = vmatprep.subr.mxu0 0.0
        %697 = vmatpush1.msra.mxu0 0.0
        %698 = vmatprep.subr.mxu0 0.0
        %699 = vmatpush1.msra.mxu0 0.0
        %700 = vmatprep.subr.mxu0 0.0
        %701 = vmatpush1.msra.mxu0 0.0
        %702 = vmatprep.subr.mxu0 0.0
        %703 = vmatpush1.msra.mxu0 0.0
        %704 = vmatprep.subr.mxu0 0.0
        %705 = vmatpush1.msra.mxu0 0.0
        %706 = vmatprep.subr.mxu0 0.0
        %707 = vmatpush1.msra.mxu0 %v658
        %708 = vmatprep.subr.mxu0 0.0
        %709 = vmatpush1.msra.mxu0 %v653
        %710 = vmatprep.subr.mxu0 0.0
        %711 = vmatpush2.msra.mxu0 0.0
        %712 = vmatprep.subr.mxu0 0.0
        %713 = vmatpush2.msra.mxu0 0.0
        %714 = vmatprep.subr.mxu0 0.0
        %715 = vmatpush2.msra.mxu0 0.0
        %716 = vmatprep.subr.mxu0 0.0
        %717 = vmatpush2.msra.mxu0 0.0
        %718 = vmatprep.subr.mxu0 0.0
        %719 = vmatpush2.msra.mxu0 0.0
        %720 = vmatprep.subr.mxu0 0.0
        %721 = vmatpush2.msra.mxu0 0.0
        %722 = vmatprep.subr.mxu0 0.0
        %723 = vmatpush2.msra.mxu0 0.0
        %724 = vmatprep.subr.mxu0 0.0
        %725 = vmatpush2.msra.mxu0 0.0
        %726 = vmatprep.subr.mxu0 0.0
        %727 = vmatpush2.msra.mxu0 0.0
        %728 = vmatprep.subr.mxu0 0.0
        %729 = vmatpush2.msra.mxu0 0.0
        %730 = vmatprep.subr.mxu0 0.0
        %731 = vmatpush2.msra.mxu0 0.0
        %732 = vmatprep.subr.mxu0 0.0
        %733 = vmatpush2.msra.mxu0 0.0
        %734 = vmatprep.subr.mxu0 0.0
        %735 = vmatpush2.msra.mxu0 0.0
        %736 = vmatprep.subr.mxu0 0.0
        %737 = vmatpush2.msra.mxu0 0.0
        %738 = vmatprep.subr.mxu0 0.0
        %739 = vmatpush2.msra.mxu0 0.0
        %740 = vmatprep.subr.mxu0 0.0
        %741 = vmatpush2.msra.mxu0 0.0
        %742 = vmatprep.mubr.f32.mxu0 0.0
        %743 = vmatmul.mubr.f32.gmra.mxu0 %v667
        %v744 = vpop.f32.mrf.mxu0
        %v745 = vadd.f32 0.0, %v744
        %v746 = vpop.f32.mrf.mxu0
        %747 = vmatprep.mubr.f32.mxu0 0.0
        %748 = vmatmul.mubr.f32.gmra.mxu0 %v670
        %v749 = vpop.f32.mrf.mxu0
        %v750 = vadd.f32 0.0, %v749
        %v751 = vpop.f32.mrf.mxu0
        %752 = vmatprep.mubr.f32.mxu0 0.0
        %753 = vmatmul.mubr.f32.gmra.mxu0 %v673
        %v754 = vpop.f32.mrf.mxu0
        %v755 = vadd.f32 0.0, %v754
        %v756 = vpop.f32.mrf.mxu0
        %757 = vmatprep.mubr.f32.mxu0 0.0
        %758 = vmatmul.mubr.f32.gmra.mxu0 %v676
        %v759 = vpop.f32.mrf.mxu0
        %v760 = vadd.f32 0.0, %v759
        %v761 = vpop.f32.mrf.mxu0
        %762 = vdwg.mxu0
        %v764 = vsel %vm497, %v579, 0
        %v767 = vsel %vm497, %v580, 0
        %v770 = vsel %vm497, %v581, 0
        %v773 = vsel %vm497, %v582, 0
        %775 = vmatprep.subr.mxu0 0.0
        %776 = vmatpush1.msra.mxu0 0.0
        %777 = vmatprep.subr.mxu0 0.0
        %778 = vmatpush1.msra.mxu0 0.0
        %779 = vmatprep.subr.mxu0 0.0
        %780 = vmatpush1.msra.mxu0 0.0
        %781 = vmatprep.subr.mxu0 0.0
        %782 = vmatpush1.msra.mxu0 0.0
        %783 = vmatprep.subr.mxu0 0.0
        %784 = vmatpush1.msra.mxu0 0.0
        %785 = vmatprep.subr.mxu0 0.0
        %786 = vmatpush1.msra.mxu0 0.0
        %787 = vmatprep.subr.mxu0 0.0
        %788 = vmatpush1.msra.mxu0 0.0
        %789 = vmatprep.subr.mxu0 0.0
        %790 = vmatpush1.msra.mxu0 0.0
        %791 = vmatprep.subr.mxu0 0.0
        %792 = vmatpush1.msra.mxu0 0.0
        %793 = vmatprep.subr.mxu0 0.0
        %794 = vmatpush1.msra.mxu0 0.0
        %795 = vmatprep.subr.mxu0 0.0
        %796 = vmatpush1.msra.mxu0 0.0
        %797 = vmatprep.subr.mxu0 0.0
        %798 = vmatpush1.msra.mxu0 0.0
        %799 = vmatprep.subr.mxu0 0.0
        %800 = vmatpush1.msra.mxu0 0.0
        %801 = vmatprep.subr.mxu0 0.0
        %802 = vmatpush1.msra.mxu0 0.0
        %803 = vmatprep.subr.mxu0 0.0
        %804 = vmatpush1.msra.mxu0 %v576
        %805 = vmatprep.subr.mxu0 0.0
        %806 = vmatpush1.msra.mxu0 %v571
        %807 = vmatprep.subr.mxu0 0.0
        %808 = vmatpush2.msra.mxu0 0.0
        %809 = vmatprep.subr.mxu0 0.0
        %810 = vmatpush2.msra.mxu0 0.0
        %811 = vmatprep.subr.mxu0 0.0
        %812 = vmatpush2.msra.mxu0 0.0
        %813 = vmatprep.subr.mxu0 0.0
        %814 = vmatpush2.msra.mxu0 0.0
        %815 = vmatprep.subr.mxu0 0.0
        %816 = vmatpush2.msra.mxu0 0.0
        %817 = vmatprep.subr.mxu0 0.0
        %818 = vmatpush2.msra.mxu0 0.0
        %819 = vmatprep.subr.mxu0 0.0
        %820 = vmatpush2.msra.mxu0 0.0
        %821 = vmatprep.subr.mxu0 0.0
        %822 = vmatpush2.msra.mxu0 0.0
        %823 = vmatprep.subr.mxu0 0.0
        %824 = vmatpush2.msra.mxu0 0.0
        %825 = vmatprep.subr.mxu0 0.0
        %826 = vmatpush2.msra.mxu0 0.0
        %827 = vmatprep.subr.mxu0 0.0
        %828 = vmatpush2.msra.mxu0 0.0
        %829 = vmatprep.subr.mxu0 0.0
        %830 = vmatpush2.msra.mxu0 0.0
        %831 = vmatprep.subr.mxu0 0.0
        %832 = vmatpush2.msra.mxu0 0.0
        %833 = vmatprep.subr.mxu0 0.0
        %834 = vmatpush2.msra.mxu0 0.0
        %835 = vmatprep.subr.mxu0 0.0
        %836 = vmatpush2.msra.mxu0 0.0
        %837 = vmatprep.subr.mxu0 0.0
        %838 = vmatpush2.msra.mxu0 0.0
        %839 = vmatprep.mubr.f32.mxu0 0.0
        %840 = vmatmul.mubr.f32.gmra.mxu0 %v764
        %v841 = vpop.f32.mrf.mxu0
        %v842 = vadd.f32 %v745, %v841
        %v843 = vpop.f32.mrf.mxu0
        %844 = vmatprep.mubr.f32.mxu0 0.0
        %845 = vmatmul.mubr.f32.gmra.mxu0 %v767
        %v846 = vpop.f32.mrf.mxu0
        %v847 = vadd.f32 %v750, %v846
        %v848 = vpop.f32.mrf.mxu0
        %849 = vmatprep.mubr.f32.mxu0 0.0
        %850 = vmatmul.mubr.f32.gmra.mxu0 %v770
        %v851 = vpop.f32.mrf.mxu0
        %v852 = vadd.f32 %v755, %v851
        %v853 = vpop.f32.mrf.mxu0
        %854 = vmatprep.mubr.f32.mxu0 0.0
        %855 = vmatmul.mubr.f32.gmra.mxu0 %v773
        %v856 = vpop.f32.mrf.mxu0
        %v857 = vadd.f32 %v760, %v856
        %v858 = vpop.f32.mrf.mxu0
        %859 = vdwg.mxu0
        %s860 = scalar_lea.vmem %s5, 32
        %v861 = vld [vmem:[%s860] sm:$0xff]
        %v862 = vld [vmem:[%s860 + $0x8] sm:$0xff]
        %863 = vmatprep.subr.mxu0 0.0
        %864 = vmatpush1.msra.mxu0 0.0
        %865 = vmatprep.subr.mxu0 0.0
        %866 = vmatpush1.msra.mxu0 0.0
        %867 = vmatprep.subr.mxu0 0.0
        %868 = vmatpush1.msra.mxu0 0.0
        %869 = vmatprep.subr.mxu0 0.0
        %870 = vmatpush1.msra.mxu0 0.0
        %871 = vmatprep.subr.mxu0 0.0
        %872 = vmatpush1.msra.mxu0 0.0
        %873 = vmatprep.subr.mxu0 0.0
        %874 = vmatpush1.msra.mxu0 0.0
        %875 = vmatprep.subr.mxu0 0.0
        %876 = vmatpush1.msra.mxu0 0.0
        %877 = vmatprep.subr.mxu0 0.0
        %878 = vmatpush1.msra.mxu0 0.0
        %879 = vmatprep.subr.mxu0 0.0
        %880 = vmatpush1.msra.mxu0 0.0
        %881 = vmatprep.subr.mxu0 0.0
        %882 = vmatpush1.msra.mxu0 0.0
        %883 = vmatprep.subr.mxu0 0.0
        %884 = vmatpush1.msra.mxu0 0.0
        %885 = vmatprep.subr.mxu0 0.0
        %886 = vmatpush1.msra.mxu0 0.0
        %887 = vmatprep.subr.mxu0 0.0
        %888 = vmatpush1.msra.mxu0 0.0
        %889 = vmatprep.subr.mxu0 0.0
        %890 = vmatpush1.msra.mxu0 0.0
        %891 = vmatprep.subr.mxu0 0.0
        %892 = vmatpush1.msra.mxu0 %v862
        %893 = vmatprep.subr.mxu0 0.0
        %894 = vmatpush1.msra.mxu0 %v861
        %895 = vmatprep.subr.mxu0 0.0
        %896 = vmatpush2.msra.mxu0 0.0
        %897 = vmatprep.subr.mxu0 0.0
        %898 = vmatpush2.msra.mxu0 0.0
        %899 = vmatprep.subr.mxu0 0.0
        %900 = vmatpush2.msra.mxu0 0.0
        %901 = vmatprep.subr.mxu0 0.0
        %902 = vmatpush2.msra.mxu0 0.0
        %903 = vmatprep.subr.mxu0 0.0
        %904 = vmatpush2.msra.mxu0 0.0
        %905 = vmatprep.subr.mxu0 0.0
        %906 = vmatpush2.msra.mxu0 0.0
        %907 = vmatprep.subr.mxu0 0.0
        %908 = vmatpush2.msra.mxu0 0.0
        %909 = vmatprep.subr.mxu0 0.0
        %910 = vmatpush2.msra.mxu0 0.0
        %911 = vmatprep.subr.mxu0 0.0
        %912 = vmatpush2.msra.mxu0 0.0
        %913 = vmatprep.subr.mxu0 0.0
        %914 = vmatpush2.msra.mxu0 0.0
        %915 = vmatprep.subr.mxu0 0.0
        %916 = vmatpush2.msra.mxu0 0.0
        %917 = vmatprep.subr.mxu0 0.0
        %918 = vmatpush2.msra.mxu0 0.0
        %919 = vmatprep.subr.mxu0 0.0
        %920 = vmatpush2.msra.mxu0 0.0
        %921 = vmatprep.subr.mxu0 0.0
        %922 = vmatpush2.msra.mxu0 0.0
        %923 = vmatprep.subr.mxu0 0.0
        %924 = vmatpush2.msra.mxu0 0.0
        %925 = vmatprep.subr.mxu0 0.0
        %926 = vmatpush2.msra.mxu0 0.0
        %927 = vmatprep.mubr.f32.mxu0 0.0
        %928 = vmatmul.mubr.f32.gmra.mxu0 %v499
        %v929 = vpop.f32.mrf.mxu0
        %v930 = vadd.f32 0.0, %v929
        %v931 = vpop.f32.mrf.mxu0
        %932 = vmatprep.mubr.f32.mxu0 0.0
        %933 = vmatmul.mubr.f32.gmra.mxu0 %v502
        %v934 = vpop.f32.mrf.mxu0
        %v935 = vadd.f32 0.0, %v934
        %v936 = vpop.f32.mrf.mxu0
        %937 = vdwg.mxu0
        %s938 = scalar_lea.vmem %s4, 64
        %v939 = vld [vmem:[%s938] sm:$0xff]
        %v940 = vld [vmem:[%s938 + $0x8] sm:$0xff]
        %v941 = vld [vmem:[%s938 + $0x10] sm:$0xff]
        %v942 = vld [vmem:[%s938 + $0x18] sm:$0xff]
        %v944 = vsel %vm497, %v939, 0
        %v947 = vsel %vm497, %v940, 0
        %v950 = vsel %vm497, %v941, 0
        %v953 = vsel %vm497, %v942, 0
        %955 = vmatprep.subr.mxu0 0.0
        %956 = vmatpush1.msra.mxu0 0.0
        %957 = vmatprep.subr.mxu0 0.0
        %958 = vmatpush1.msra.mxu0 0.0
        %959 = vmatprep.subr.mxu0 0.0
        %960 = vmatpush1.msra.mxu0 0.0
        %961 = vmatprep.subr.mxu0 0.0
        %962 = vmatpush1.msra.mxu0 0.0
        %963 = vmatprep.subr.mxu0 0.0
        %964 = vmatpush1.msra.mxu0 0.0
        %965 = vmatprep.subr.mxu0 0.0
        %966 = vmatpush1.msra.mxu0 0.0
        %967 = vmatprep.subr.mxu0 0.0
        %968 = vmatpush1.msra.mxu0 0.0
        %969 = vmatprep.subr.mxu0 0.0
        %970 = vmatpush1.msra.mxu0 0.0
        %971 = vmatprep.subr.mxu0 0.0
        %972 = vmatpush1.msra.mxu0 0.0
        %973 = vmatprep.subr.mxu0 0.0
        %974 = vmatpush1.msra.mxu0 0.0
        %975 = vmatprep.subr.mxu0 0.0
        %976 = vmatpush1.msra.mxu0 0.0
        %977 = vmatprep.subr.mxu0 0.0
        %978 = vmatpush1.msra.mxu0 0.0
        %979 = vmatprep.subr.mxu0 0.0
        %980 = vmatpush1.msra.mxu0 0.0
        %981 = vmatprep.subr.mxu0 0.0
        %982 = vmatpush1.msra.mxu0 0.0
        %983 = vmatprep.subr.mxu0 0.0
        %984 = vmatpush1.msra.mxu0 %v935
        %985 = vmatprep.subr.mxu0 0.0
        %986 = vmatpush1.msra.mxu0 %v930
        %987 = vmatprep.subr.mxu0 0.0
        %988 = vmatpush2.msra.mxu0 0.0
        %989 = vmatprep.subr.mxu0 0.0
        %990 = vmatpush2.msra.mxu0 0.0
        %991 = vmatprep.subr.mxu0 0.0
        %992 = vmatpush2.msra.mxu0 0.0
        %993 = vmatprep.subr.mxu0 0.0
        %994 = vmatpush2.msra.mxu0 0.0
        %995 = vmatprep.subr.mxu0 0.0
        %996 = vmatpush2.msra.mxu0 0.0
        %997 = vmatprep.subr.mxu0 0.0
        %998 = vmatpush2.msra.mxu0 0.0
        %999 = vmatprep.subr.mxu0 0.0
        %1000 = vmatpush2.msra.mxu0 0.0
        %1001 = vmatprep.subr.mxu0 0.0
        %1002 = vmatpush2.msra.mxu0 0.0
        %1003 = vmatprep.subr.mxu0 0.0
        %1004 = vmatpush2.msra.mxu0 0.0
        %1005 = vmatprep.subr.mxu0 0.0
        %1006 = vmatpush2.msra.mxu0 0.0
        %1007 = vmatprep.subr.mxu0 0.0
        %1008 = vmatpush2.msra.mxu0 0.0
        %1009 = vmatprep.subr.mxu0 0.0
        %1010 = vmatpush2.msra.mxu0 0.0
        %1011 = vmatprep.subr.mxu0 0.0
        %1012 = vmatpush2.msra.mxu0 0.0
        %1013 = vmatprep.subr.mxu0 0.0
        %1014 = vmatpush2.msra.mxu0 0.0
        %1015 = vmatprep.subr.mxu0 0.0
        %1016 = vmatpush2.msra.mxu0 0.0
        %1017 = vmatprep.subr.mxu0 0.0
        %1018 = vmatpush2.msra.mxu0 0.0
        %1019 = vmatprep.mubr.f32.mxu0 0.0
        %1020 = vmatmul.mubr.f32.gmra.mxu0 %v944
        %v1021 = vpop.f32.mrf.mxu0
        %v1022 = vadd.f32 0.0, %v1021
        %v1023 = vpop.f32.mrf.mxu0
        %1024 = vmatprep.mubr.f32.mxu0 0.0
        %1025 = vmatmul.mubr.f32.gmra.mxu0 %v947
        %v1026 = vpop.f32.mrf.mxu0
        %v1027 = vadd.f32 0.0, %v1026
        %v1028 = vpop.f32.mrf.mxu0
        %1029 = vmatprep.mubr.f32.mxu0 0.0
        %1030 = vmatmul.mubr.f32.gmra.mxu0 %v950
        %v1031 = vpop.f32.mrf.mxu0
        %v1032 = vadd.f32 0.0, %v1031
        %v1033 = vpop.f32.mrf.mxu0
        %1034 = vmatprep.mubr.f32.mxu0 0.0
        %1035 = vmatmul.mubr.f32.gmra.mxu0 %v953
        %v1036 = vpop.f32.mrf.mxu0
        %v1037 = vadd.f32 0.0, %v1036
        %v1038 = vpop.f32.mrf.mxu0
        %1039 = vdwg.mxu0
        %v1040 = vadd.f32 %v842, %v1022
        %v1041 = vadd.f32 %v847, %v1027
        %v1042 = vadd.f32 %v852, %v1032
        %v1043 = vadd.f32 %v857, %v1037
        %s1044 = scalar_lea.vmem %s5, 48
        %v1045 = vld [vmem:[%s1044] sm:$0xff]
        %v1046 = vld [vmem:[%s1044 + $0x8] sm:$0xff]
        %1047 = vmatprep.subr.mxu0 0.0
        %1048 = vmatpush1.msra.mxu0 0.0
        %1049 = vmatprep.subr.mxu0 0.0
        %1050 = vmatpush1.msra.mxu0 0.0
        %1051 = vmatprep.subr.mxu0 0.0
        %1052 = vmatpush1.msra.mxu0 0.0
        %1053 = vmatprep.subr.mxu0 0.0
        %1054 = vmatpush1.msra.mxu0 0.0
        %1055 = vmatprep.subr.mxu0 0.0
        %1056 = vmatpush1.msra.mxu0 0.0
        %1057 = vmatprep.subr.mxu0 0.0
        %1058 = vmatpush1.msra.mxu0 0.0
        %1059 = vmatprep.subr.mxu0 0.0
        %1060 = vmatpush1.msra.mxu0 0.0
        %1061 = vmatprep.subr.mxu0 0.0
        %1062 = vmatpush1.msra.mxu0 0.0
        %1063 = vmatprep.subr.mxu0 0.0
        %1064 = vmatpush1.msra.mxu0 0.0
        %1065 = vmatprep.subr.mxu0 0.0
        %1066 = vmatpush1.msra.mxu0 0.0
        %1067 = vmatprep.subr.mxu0 0.0
        %1068 = vmatpush1.msra.mxu0 0.0
        %1069 = vmatprep.subr.mxu0 0.0
        %1070 = vmatpush1.msra.mxu0 0.0
        %1071 = vmatprep.subr.mxu0 0.0
        %1072 = vmatpush1.msra.mxu0 0.0
        %1073 = vmatprep.subr.mxu0 0.0
        %1074 = vmatpush1.msra.mxu0 0.0
        %1075 = vmatprep.subr.mxu0 0.0
        %1076 = vmatpush1.msra.mxu0 %v1046
        %1077 = vmatprep.subr.mxu0 0.0
        %1078 = vmatpush1.msra.mxu0 %v1045
        %1079 = vmatprep.subr.mxu0 0.0
        %1080 = vmatpush2.msra.mxu0 0.0
        %1081 = vmatprep.subr.mxu0 0.0
        %1082 = vmatpush2.msra.mxu0 0.0
        %1083 = vmatprep.subr.mxu0 0.0
        %1084 = vmatpush2.msra.mxu0 0.0
        %1085 = vmatprep.subr.mxu0 0.0
        %1086 = vmatpush2.msra.mxu0 0.0
        %1087 = vmatprep.subr.mxu0 0.0
        %1088 = vmatpush2.msra.mxu0 0.0
        %1089 = vmatprep.subr.mxu0 0.0
        %1090 = vmatpush2.msra.mxu0 0.0
        %1091 = vmatprep.subr.mxu0 0.0
        %1092 = vmatpush2.msra.mxu0 0.0
        %1093 = vmatprep.subr.mxu0 0.0
        %1094 = vmatpush2.msra.mxu0 0.0
        %1095 = vmatprep.subr.mxu0 0.0
        %1096 = vmatpush2.msra.mxu0 0.0
        %1097 = vmatprep.subr.mxu0 0.0
        %1098 = vmatpush2.msra.mxu0 0.0
        %1099 = vmatprep.subr.mxu0 0.0
        %1100 = vmatpush2.msra.mxu0 0.0
        %1101 = vmatprep.subr.mxu0 0.0
        %1102 = vmatpush2.msra.mxu0 0.0
        %1103 = vmatprep.subr.mxu0 0.0
        %1104 = vmatpush2.msra.mxu0 0.0
        %1105 = vmatprep.subr.mxu0 0.0
        %1106 = vmatpush2.msra.mxu0 0.0
        %1107 = vmatprep.subr.mxu0 0.0
        %1108 = vmatpush2.msra.mxu0 0.0
        %1109 = vmatprep.subr.mxu0 0.0
        %1110 = vmatpush2.msra.mxu0 0.0
        %1111 = vmatprep.mubr.f32.mxu0 0.0
        %1112 = vmatmul.mubr.f32.gmra.mxu0 %v499
        %v1113 = vpop.f32.mrf.mxu0
        %v1114 = vadd.f32 0.0, %v1113
        %v1115 = vpop.f32.mrf.mxu0
        %1116 = vmatprep.mubr.f32.mxu0 0.0
        %1117 = vmatmul.mubr.f32.gmra.mxu0 %v502
        %v1118 = vpop.f32.mrf.mxu0
        %v1119 = vadd.f32 0.0, %v1118
        %v1120 = vpop.f32.mrf.mxu0
        %1121 = vdwg.mxu0
        %s1122 = scalar_lea.vmem %s4, 96
        %v1123 = vld [vmem:[%s1122] sm:$0xff]
        %v1124 = vld [vmem:[%s1122 + $0x8] sm:$0xff]
        %v1125 = vld [vmem:[%s1122 + $0x10] sm:$0xff]
        %v1126 = vld [vmem:[%s1122 + $0x18] sm:$0xff]
        %v1128 = vsel %vm497, %v1123, 0
        %v1131 = vsel %vm497, %v1124, 0
        %v1134 = vsel %vm497, %v1125, 0
        %v1137 = vsel %vm497, %v1126, 0
        %1139 = vmatprep.subr.mxu0 0.0
        %1140 = vmatpush1.msra.mxu0 0.0
        %1141 = vmatprep.subr.mxu0 0.0
        %1142 = vmatpush1.msra.mxu0 0.0
        %1143 = vmatprep.subr.mxu0 0.0
        %1144 = vmatpush1.msra.mxu0 0.0
        %1145 = vmatprep.subr.mxu0 0.0
        %1146 = vmatpush1.msra.mxu0 0.0
        %1147 = vmatprep.subr.mxu0 0.0
        %1148 = vmatpush1.msra.mxu0 0.0
        %1149 = vmatprep.subr.mxu0 0.0
        %1150 = vmatpush1.msra.mxu0 0.0
        %1151 = vmatprep.subr.mxu0 0.0
        %1152 = vmatpush1.msra.mxu0 0.0
        %1153 = vmatprep.subr.mxu0 0.0
        %1154 = vmatpush1.msra.mxu0 0.0
        %1155 = vmatprep.subr.mxu0 0.0
        %1156 = vmatpush1.msra.mxu0 0.0
        %1157 = vmatprep.subr.mxu0 0.0
        %1158 = vmatpush1.msra.mxu0 0.0
        %1159 = vmatprep.subr.mxu0 0.0
        %1160 = vmatpush1.msra.mxu0 0.0
        %1161 = vmatprep.subr.mxu0 0.0
        %1162 = vmatpush1.msra.mxu0 0.0
        %1163 = vmatprep.subr.mxu0 0.0
        %1164 = vmatpush1.msra.mxu0 0.0
        %1165 = vmatprep.subr.mxu0 0.0
        %1166 = vmatpush1.msra.mxu0 0.0
        %1167 = vmatprep.subr.mxu0 0.0
        %1168 = vmatpush1.msra.mxu0 %v1119
        %1169 = vmatprep.subr.mxu0 0.0
        %1170 = vmatpush1.msra.mxu0 %v1114
        %1171 = vmatprep.subr.mxu0 0.0
        %1172 = vmatpush2.msra.mxu0 0.0
        %1173 = vmatprep.subr.mxu0 0.0
        %1174 = vmatpush2.msra.mxu0 0.0
        %1175 = vmatprep.subr.mxu0 0.0
        %1176 = vmatpush2.msra.mxu0 0.0
        %1177 = vmatprep.subr.mxu0 0.0
        %1178 = vmatpush2.msra.mxu0 0.0
        %1179 = vmatprep.subr.mxu0 0.0
        %1180 = vmatpush2.msra.mxu0 0.0
        %1181 = vmatprep.subr.mxu0 0.0
        %1182 = vmatpush2.msra.mxu0 0.0
        %1183 = vmatprep.subr.mxu0 0.0
        %1184 = vmatpush2.msra.mxu0 0.0
        %1185 = vmatprep.subr.mxu0 0.0
        %1186 = vmatpush2.msra.mxu0 0.0
        %1187 = vmatprep.subr.mxu0 0.0
        %1188 = vmatpush2.msra.mxu0 0.0
        %1189 = vmatprep.subr.mxu0 0.0
        %1190 = vmatpush2.msra.mxu0 0.0
        %1191 = vmatprep.subr.mxu0 0.0
        %1192 = vmatpush2.msra.mxu0 0.0
        %1193 = vmatprep.subr.mxu0 0.0
        %1194 = vmatpush2.msra.mxu0 0.0
        %1195 = vmatprep.subr.mxu0 0.0
        %1196 = vmatpush2.msra.mxu0 0.0
        %1197 = vmatprep.subr.mxu0 0.0
        %1198 = vmatpush2.msra.mxu0 0.0
        %1199 = vmatprep.subr.mxu0 0.0
        %1200 = vmatpush2.msra.mxu0 0.0
        %1201 = vmatprep.subr.mxu0 0.0
        %1202 = vmatpush2.msra.mxu0 0.0
        %1203 = vmatprep.mubr.f32.mxu0 0.0
        %1204 = vmatmul.mubr.f32.gmra.mxu0 %v1128
        %v1205 = vpop.f32.mrf.mxu0
        %v1206 = vadd.f32 0.0, %v1205
        %v1207 = vpop.f32.mrf.mxu0
        %1208 = vmatprep.mubr.f32.mxu0 0.0
        %1209 = vmatmul.mubr.f32.gmra.mxu0 %v1131
        %v1210 = vpop.f32.mrf.mxu0
        %v1211 = vadd.f32 0.0, %v1210
        %v1212 = vpop.f32.mrf.mxu0
        %1213 = vmatprep.mubr.f32.mxu0 0.0
        %1214 = vmatmul.mubr.f32.gmra.mxu0 %v1134
        %v1215 = vpop.f32.mrf.mxu0
        %v1216 = vadd.f32 0.0, %v1215
        %v1217 = vpop.f32.mrf.mxu0
        %1218 = vmatprep.mubr.f32.mxu0 0.0
        %1219 = vmatmul.mubr.f32.gmra.mxu0 %v1137
        %v1220 = vpop.f32.mrf.mxu0
        %v1221 = vadd.f32 0.0, %v1220
        %v1222 = vpop.f32.mrf.mxu0
        %1223 = vdwg.mxu0
        %v1224 = vadd.f32 %v1040, %v1206
        %v1225 = vadd.f32 %v1041, %v1211
        %v1226 = vadd.f32 %v1042, %v1216
        %v1227 = vadd.f32 %v1043, %v1221
        %v1228 = vstv %s494
        %v1229 = vadd.f32 %v1224, %v1228
        %v1230 = vadd.f32 %v1225, %v1228
        %v1231 = vadd.f32 %v1226, %v1228
        %v1232 = vadd.f32 %v1227, %v1228
        %v1233 = vmax.f32 %v1229, 0.0
        %v1234 = vmax.f32 %v1230, 0.0
        %v1235 = vmax.f32 %v1231, 0.0
        %v1236 = vmax.f32 %v1232, 0.0
        %s1237 = sld [smem:[#allocation4 + $0x1]]
        %v1238 = vld [vmem:[%s7] sm:$0xff]
        %v1239 = vld [vmem:[%s7 + $0x8] sm:$0xff]
        %v1240 = vld [vmem:[%s7 + $0x10] sm:$0xff]
        %v1241 = vld [vmem:[%s7 + $0x18] sm:$0xff]
        %vm1242 = vcmask 261120
        %v1244 = vsel %vm1242, %v1233, 0
        %v1247 = vsel %vm1242, %v1234, 0
        %v1250 = vsel %vm1242, %v1235, 0
        %v1253 = vsel %vm1242, %v1236, 0
        %1255 = vmatprep.subr.mxu0 0.0
        %1256 = vmatpush1.msra.mxu0 0.0
        %1257 = vmatprep.subr.mxu0 0.0
        %1258 = vmatpush1.msra.mxu0 0.0
        %1259 = vmatprep.subr.mxu0 0.0
        %1260 = vmatpush1.msra.mxu0 0.0
        %1261 = vmatprep.subr.mxu0 0.0
        %1262 = vmatpush1.msra.mxu0 0.0
        %1263 = vmatprep.subr.mxu0 0.0
        %1264 = vmatpush1.msra.mxu0 0.0
        %1265 = vmatprep.subr.mxu0 0.0
        %1266 = vmatpush1.msra.mxu0 0.0
        %1267 = vmatprep.subr.mxu0 0.0
        %1268 = vmatpush1.msra.mxu0 0.0
        %1269 = vmatprep.subr.mxu0 0.0
        %1270 = vmatpush1.msra.mxu0 0.0
        %1271 = vmatprep.subr.mxu0 0.0
        %1272 = vmatpush1.msra.mxu0 0.0
        %1273 = vmatprep.subr.mxu0 0.0
        %1274 = vmatpush1.msra.mxu0 0.0
        %1275 = vmatprep.subr.mxu0 0.0
        %1276 = vmatpush1.msra.mxu0 0.0
        %1277 = vmatprep.subr.mxu0 0.0
        %1278 = vmatpush1.msra.mxu0 0.0
        %1279 = vmatprep.subr.mxu0 0.0
        %1280 = vmatpush1.msra.mxu0 %v1241
        %1281 = vmatprep.subr.mxu0 0.0
        %1282 = vmatpush1.msra.mxu0 %v1240
        %1283 = vmatprep.subr.mxu0 0.0
        %1284 = vmatpush1.msra.mxu0 %v1239
        %1285 = vmatprep.subr.mxu0 0.0
        %1286 = vmatpush1.msra.mxu0 %v1238
        %1287 = vmatprep.subr.mxu0 0.0
        %1288 = vmatpush2.msra.mxu0 0.0
        %1289 = vmatprep.subr.mxu0 0.0
        %1290 = vmatpush2.msra.mxu0 0.0
        %1291 = vmatprep.subr.mxu0 0.0
        %1292 = vmatpush2.msra.mxu0 0.0
        %1293 = vmatprep.subr.mxu0 0.0
        %1294 = vmatpush2.msra.mxu0 0.0
        %1295 = vmatprep.subr.mxu0 0.0
        %1296 = vmatpush2.msra.mxu0 0.0
        %1297 = vmatprep.subr.mxu0 0.0
        %1298 = vmatpush2.msra.mxu0 0.0
        %1299 = vmatprep.subr.mxu0 0.0
        %1300 = vmatpush2.msra.mxu0 0.0
        %1301 = vmatprep.subr.mxu0 0.0
        %1302 = vmatpush2.msra.mxu0 0.0
        %1303 = vmatprep.subr.mxu0 0.0
        %1304 = vmatpush2.msra.mxu0 0.0
        %1305 = vmatprep.subr.mxu0 0.0
        %1306 = vmatpush2.msra.mxu0 0.0
        %1307 = vmatprep.subr.mxu0 0.0
        %1308 = vmatpush2.msra.mxu0 0.0
        %1309 = vmatprep.subr.mxu0 0.0
        %1310 = vmatpush2.msra.mxu0 0.0
        %1311 = vmatprep.subr.mxu0 0.0
        %1312 = vmatpush2.msra.mxu0 0.0
        %1313 = vmatprep.subr.mxu0 0.0
        %1314 = vmatpush2.msra.mxu0 0.0
        %1315 = vmatprep.subr.mxu0 0.0
        %1316 = vmatpush2.msra.mxu0 0.0
        %1317 = vmatprep.subr.mxu0 0.0
        %1318 = vmatpush2.msra.mxu0 0.0
        %1319 = vmatprep.mubr.f32.mxu0 0.0
        %1320 = vmatmul.mubr.f32.gmra.mxu0 %v1244
        %v1321 = vpop.f32.mrf.mxu0
        %v1322 = vadd.f32 0.0, %v1321
        %v1323 = vpop.f32.mrf.mxu0
        %1324 = vmatprep.mubr.f32.mxu0 0.0
        %1325 = vmatmul.mubr.f32.gmra.mxu0 %v1247
        %v1326 = vpop.f32.mrf.mxu0
        %v1327 = vadd.f32 0.0, %v1326
        %v1328 = vpop.f32.mrf.mxu0
        %1329 = vmatprep.mubr.f32.mxu0 0.0
        %1330 = vmatmul.mubr.f32.gmra.mxu0 %v1250
        %v1331 = vpop.f32.mrf.mxu0
        %v1332 = vadd.f32 0.0, %v1331
        %v1333 = vpop.f32.mrf.mxu0
        %1334 = vmatprep.mubr.f32.mxu0 0.0
        %1335 = vmatmul.mubr.f32.gmra.mxu0 %v1253
        %v1336 = vpop.f32.mrf.mxu0
        %v1337 = vadd.f32 0.0, %v1336
        %v1338 = vpop.f32.mrf.mxu0
        %1339 = vdwg.mxu0
        %v1340 = vld [vmem:[%s6] sm:$0xff]
        %v1341 = vld [vmem:[%s6 + $0x8] sm:$0xff]
        %v1342 = vld [vmem:[%s6 + $0x10] sm:$0xff]
        %v1343 = vld [vmem:[%s6 + $0x18] sm:$0xff]
        %v1344 = vld [vmem:[%s6 + $0x20] sm:$0xff]
        %v1345 = vld [vmem:[%s6 + $0x28] sm:$0xff]
        %v1346 = vld [vmem:[%s6 + $0x30] sm:$0xff]
        %v1347 = vld [vmem:[%s6 + $0x38] sm:$0xff]
        %s1348 = scalar_lea.vmem %s7, 32
        %v1349 = vld [vmem:[%s1348] sm:$0xff]
        %v1350 = vld [vmem:[%s1348 + $0x8] sm:$0xff]
        %v1351 = vld [vmem:[%s1348 + $0x10] sm:$0xff]
        %v1352 = vld [vmem:[%s1348 + $0x18] sm:$0xff]
        %1353 = vmatprep.subr.mxu0 0.0
        %1354 = vmatpush1.msra.mxu0 0.0
        %1355 = vmatprep.subr.mxu0 0.0
        %1356 = vmatpush1.msra.mxu0 0.0
        %1357 = vmatprep.subr.mxu0 0.0
        %1358 = vmatpush1.msra.mxu0 0.0
        %1359 = vmatprep.subr.mxu0 0.0
        %1360 = vmatpush1.msra.mxu0 0.0
        %1361 = vmatprep.subr.mxu0 0.0
        %1362 = vmatpush1.msra.mxu0 0.0
        %1363 = vmatprep.subr.mxu0 0.0
        %1364 = vmatpush1.msra.mxu0 0.0
        %1365 = vmatprep.subr.mxu0 0.0
        %1366 = vmatpush1.msra.mxu0 0.0
        %1367 = vmatprep.subr.mxu0 0.0
        %1368 = vmatpush1.msra.mxu0 0.0
        %1369 = vmatprep.subr.mxu0 0.0
        %1370 = vmatpush1.msra.mxu0 0.0
        %1371 = vmatprep.subr.mxu0 0.0
        %1372 = vmatpush1.msra.mxu0 0.0
        %1373 = vmatprep.subr.mxu0 0.0
        %1374 = vmatpush1.msra.mxu0 0.0
        %1375 = vmatprep.subr.mxu0 0.0
        %1376 = vmatpush1.msra.mxu0 0.0
        %1377 = vmatprep.subr.mxu0 0.0
        %1378 = vmatpush1.msra.mxu0 %v1352
        %1379 = vmatprep.subr.mxu0 0.0
        %1380 = vmatpush1.msra.mxu0 %v1351
        %1381 = vmatprep.subr.mxu0 0.0
        %1382 = vmatpush1.msra.mxu0 %v1350
        %1383 = vmatprep.subr.mxu0 0.0
        %1384 = vmatpush1.msra.mxu0 %v1349
        %1385 = vmatprep.subr.mxu0 0.0
        %1386 = vmatpush2.msra.mxu0 0.0
        %1387 = vmatprep.subr.mxu0 0.0
        %1388 = vmatpush2.msra.mxu0 0.0
        %1389 = vmatprep.subr.mxu0 0.0
        %1390 = vmatpush2.msra.mxu0 0.0
        %1391 = vmatprep.subr.mxu0 0.0
        %1392 = vmatpush2.msra.mxu0 0.0
        %1393 = vmatprep.subr.mxu0 0.0
        %1394 = vmatpush2.msra.mxu0 0.0
        %1395 = vmatprep.subr.mxu0 0.0
        %1396 = vmatpush2.msra.mxu0 0.0
        %1397 = vmatprep.subr.mxu0 0.0
        %1398 = vmatpush2.msra.mxu0 0.0
        %1399 = vmatprep.subr.mxu0 0.0
        %1400 = vmatpush2.msra.mxu0 0.0
        %1401 = vmatprep.subr.mxu0 0.0
        %1402 = vmatpush2.msra.mxu0 0.0
        %1403 = vmatprep.subr.mxu0 0.0
        %1404 = vmatpush2.msra.mxu0 0.0
        %1405 = vmatprep.subr.mxu0 0.0
        %1406 = vmatpush2.msra.mxu0 0.0
        %1407 = vmatprep.subr.mxu0 0.0
        %1408 = vmatpush2.msra.mxu0 0.0
        %1409 = vmatprep.subr.mxu0 0.0
        %1410 = vmatpush2.msra.mxu0 0.0
        %1411 = vmatprep.subr.mxu0 0.0
        %1412 = vmatpush2.msra.mxu0 0.0
        %1413 = vmatprep.subr.mxu0 0.0
        %1414 = vmatpush2.msra.mxu0 0.0
        %1415 = vmatprep.subr.mxu0 0.0
        %1416 = vmatpush2.msra.mxu0 0.0
        %1417 = vmatprep.mubr.f32.mxu0 0.0
        %1418 = vmatmul.mubr.f32.gmra.mxu0 %v1244
        %v1419 = vpop.f32.mrf.mxu0
        %v1420 = vadd.f32 0.0, %v1419
        %v1421 = vpop.f32.mrf.mxu0
        %1422 = vmatprep.mubr.f32.mxu0 0.0
        %1423 = vmatmul.mubr.f32.gmra.mxu0 %v1247
        %v1424 = vpop.f32.mrf.mxu0
        %v1425 = vadd.f32 0.0, %v1424
        %v1426 = vpop.f32.mrf.mxu0
        %1427 = vmatprep.mubr.f32.mxu0 0.0
        %1428 = vmatmul.mubr.f32.gmra.mxu0 %v1250
        %v1429 = vpop.f32.mrf.mxu0
        %v1430 = vadd.f32 0.0, %v1429
        %v1431 = vpop.f32.mrf.mxu0
        %1432 = vmatprep.mubr.f32.mxu0 0.0
        %1433 = vmatmul.mubr.f32.gmra.mxu0 %v1253
        %v1434 = vpop.f32.mrf.mxu0
        %v1435 = vadd.f32 0.0, %v1434
        %v1436 = vpop.f32.mrf.mxu0
        %1437 = vdwg.mxu0
        %s1438 = scalar_lea.vmem %s6, 64
        %v1439 = vld [vmem:[%s1438] sm:$0xff]
        %v1440 = vld [vmem:[%s1438 + $0x8] sm:$0xff]
        %v1441 = vld [vmem:[%s1438 + $0x10] sm:$0xff]
        %v1442 = vld [vmem:[%s1438 + $0x18] sm:$0xff]
        %v1443 = vld [vmem:[%s1438 + $0x20] sm:$0xff]
        %v1444 = vld [vmem:[%s1438 + $0x28] sm:$0xff]
        %v1445 = vld [vmem:[%s1438 + $0x30] sm:$0xff]
        %v1446 = vld [vmem:[%s1438 + $0x38] sm:$0xff]
        %v1448 = vsel %vm1242, %v1439, 0
        %v1451 = vsel %vm1242, %v1440, 0
        %v1454 = vsel %vm1242, %v1441, 0
        %v1457 = vsel %vm1242, %v1442, 0
        %v1460 = vsel %vm1242, %v1443, 0
        %v1463 = vsel %vm1242, %v1444, 0
        %v1466 = vsel %vm1242, %v1445, 0
        %v1469 = vsel %vm1242, %v1446, 0
        %1471 = vmatprep.subr.mxu0 0.0
        %1472 = vmatpush1.msra.mxu0 0.0
        %1473 = vmatprep.subr.mxu0 0.0
        %1474 = vmatpush1.msra.mxu0 0.0
        %1475 = vmatprep.subr.mxu0 0.0
        %1476 = vmatpush1.msra.mxu0 0.0
        %1477 = vmatprep.subr.mxu0 0.0
        %1478 = vmatpush1.msra.mxu0 0.0
        %1479 = vmatprep.subr.mxu0 0.0
        %1480 = vmatpush1.msra.mxu0 0.0
        %1481 = vmatprep.subr.mxu0 0.0
        %1482 = vmatpush1.msra.mxu0 0.0
        %1483 = vmatprep.subr.mxu0 0.0
        %1484 = vmatpush1.msra.mxu0 0.0
        %1485 = vmatprep.subr.mxu0 0.0
        %1486 = vmatpush1.msra.mxu0 0.0
        %1487 = vmatprep.subr.mxu0 0.0
        %1488 = vmatpush1.msra.mxu0 0.0
        %1489 = vmatprep.subr.mxu0 0.0
        %1490 = vmatpush1.msra.mxu0 0.0
        %1491 = vmatprep.subr.mxu0 0.0
        %1492 = vmatpush1.msra.mxu0 0.0
        %1493 = vmatprep.subr.mxu0 0.0
        %1494 = vmatpush1.msra.mxu0 0.0
        %1495 = vmatprep.subr.mxu0 0.0
        %1496 = vmatpush1.msra.mxu0 %v1435
        %1497 = vmatprep.subr.mxu0 0.0
        %1498 = vmatpush1.msra.mxu0 %v1430
        %1499 = vmatprep.subr.mxu0 0.0
        %1500 = vmatpush1.msra.mxu0 %v1425
        %1501 = vmatprep.subr.mxu0 0.0
        %1502 = vmatpush1.msra.mxu0 %v1420
        %1503 = vmatprep.subr.mxu0 0.0
        %1504 = vmatpush2.msra.mxu0 0.0
        %1505 = vmatprep.subr.mxu0 0.0
        %1506 = vmatpush2.msra.mxu0 0.0
        %1507 = vmatprep.subr.mxu0 0.0
        %1508 = vmatpush2.msra.mxu0 0.0
        %1509 = vmatprep.subr.mxu0 0.0
        %1510 = vmatpush2.msra.mxu0 0.0
        %1511 = vmatprep.subr.mxu0 0.0
        %1512 = vmatpush2.msra.mxu0 0.0
        %1513 = vmatprep.subr.mxu0 0.0
        %1514 = vmatpush2.msra.mxu0 0.0
        %1515 = vmatprep.subr.mxu0 0.0
        %1516 = vmatpush2.msra.mxu0 0.0
        %1517 = vmatprep.subr.mxu0 0.0
        %1518 = vmatpush2.msra.mxu0 0.0
        %1519 = vmatprep.subr.mxu0 0.0
        %1520 = vmatpush2.msra.mxu0 0.0
        %1521 = vmatprep.subr.mxu0 0.0
        %1522 = vmatpush2.msra.mxu0 0.0
        %1523 = vmatprep.subr.mxu0 0.0
        %1524 = vmatpush2.msra.mxu0 0.0
        %1525 = vmatprep.subr.mxu0 0.0
        %1526 = vmatpush2.msra.mxu0 0.0
        %1527 = vmatprep.subr.mxu0 0.0
        %1528 = vmatpush2.msra.mxu0 0.0
        %1529 = vmatprep.subr.mxu0 0.0
        %1530 = vmatpush2.msra.mxu0 0.0
        %1531 = vmatprep.subr.mxu0 0.0
        %1532 = vmatpush2.msra.mxu0 0.0
        %1533 = vmatprep.subr.mxu0 0.0
        %1534 = vmatpush2.msra.mxu0 0.0
        %1535 = vmatprep.mubr.f32.mxu0 0.0
        %1536 = vmatmul.mubr.f32.gmra.mxu0 %v1448
        %v1537 = vpop.f32.mrf.mxu0
        %v1538 = vadd.f32 0.0, %v1537
        %v1539 = vpop.f32.mrf.mxu0
        %1540 = vmatprep.mubr.f32.mxu0 0.0
        %1541 = vmatmul.mubr.f32.gmra.mxu0 %v1451
        %v1542 = vpop.f32.mrf.mxu0
        %v1543 = vadd.f32 0.0, %v1542
        %v1544 = vpop.f32.mrf.mxu0
        %1545 = vmatprep.mubr.f32.mxu0 0.0
        %1546 = vmatmul.mubr.f32.gmra.mxu0 %v1454
        %v1547 = vpop.f32.mrf.mxu0
        %v1548 = vadd.f32 0.0, %v1547
        %v1549 = vpop.f32.mrf.mxu0
        %1550 = vmatprep.mubr.f32.mxu0 0.0
        %1551 = vmatmul.mubr.f32.gmra.mxu0 %v1457
        %v1552 = vpop.f32.mrf.mxu0
        %v1553 = vadd.f32 0.0, %v1552
        %v1554 = vpop.f32.mrf.mxu0
        %1555 = vmatprep.mubr.f32.mxu0 0.0
        %1556 = vmatmul.mubr.f32.gmra.mxu0 %v1460
        %v1557 = vpop.f32.mrf.mxu0
        %v1558 = vadd.f32 0.0, %v1557
        %v1559 = vpop.f32.mrf.mxu0
        %1560 = vmatprep.mubr.f32.mxu0 0.0
        %1561 = vmatmul.mubr.f32.gmra.mxu0 %v1463
        %v1562 = vpop.f32.mrf.mxu0
        %v1563 = vadd.f32 0.0, %v1562
        %v1564 = vpop.f32.mrf.mxu0
        %1565 = vmatprep.mubr.f32.mxu0 0.0
        %1566 = vmatmul.mubr.f32.gmra.mxu0 %v1466
        %v1567 = vpop.f32.mrf.mxu0
        %v1568 = vadd.f32 0.0, %v1567
        %v1569 = vpop.f32.mrf.mxu0
        %1570 = vmatprep.mubr.f32.mxu0 0.0
        %1571 = vmatmul.mubr.f32.gmra.mxu0 %v1469
        %v1572 = vpop.f32.mrf.mxu0
        %v1573 = vadd.f32 0.0, %v1572
        %v1574 = vpop.f32.mrf.mxu0
        %1575 = vdwg.mxu0
        %v1577 = vsel %vm1242, %v1340, 0
        %v1580 = vsel %vm1242, %v1341, 0
        %v1583 = vsel %vm1242, %v1342, 0
        %v1586 = vsel %vm1242, %v1343, 0
        %v1589 = vsel %vm1242, %v1344, 0
        %v1592 = vsel %vm1242, %v1345, 0
        %v1595 = vsel %vm1242, %v1346, 0
        %v1598 = vsel %vm1242, %v1347, 0
        %1600 = vmatprep.subr.mxu0 0.0
        %1601 = vmatpush1.msra.mxu0 0.0
        %1602 = vmatprep.subr.mxu0 0.0
        %1603 = vmatpush1.msra.mxu0 0.0
        %1604 = vmatprep.subr.mxu0 0.0
        %1605 = vmatpush1.msra.mxu0 0.0
        %1606 = vmatprep.subr.mxu0 0.0
        %1607 = vmatpush1.msra.mxu0 0.0
        %1608 = vmatprep.subr.mxu0 0.0
        %1609 = vmatpush1.msra.mxu0 0.0
        %1610 = vmatprep.subr.mxu0 0.0
        %1611 = vmatpush1.msra.mxu0 0.0
        %1612 = vmatprep.subr.mxu0 0.0
        %1613 = vmatpush1.msra.mxu0 0.0
        %1614 = vmatprep.subr.mxu0 0.0
        %1615 = vmatpush1.msra.mxu0 0.0
        %1616 = vmatprep.subr.mxu0 0.0
        %1617 = vmatpush1.msra.mxu0 0.0
        %1618 = vmatprep.subr.mxu0 0.0
        %1619 = vmatpush1.msra.mxu0 0.0
        %1620 = vmatprep.subr.mxu0 0.0
        %1621 = vmatpush1.msra.mxu0 0.0
        %1622 = vmatprep.subr.mxu0 0.0
        %1623 = vmatpush1.msra.mxu0 0.0
        %1624 = vmatprep.subr.mxu0 0.0
        %1625 = vmatpush1.msra.mxu0 %v1337
        %1626 = vmatprep.subr.mxu0 0.0
        %1627 = vmatpush1.msra.mxu0 %v1332
        %1628 = vmatprep.subr.mxu0 0.0
        %1629 = vmatpush1.msra.mxu0 %v1327
        %1630 = vmatprep.subr.mxu0 0.0
        %1631 = vmatpush1.msra.mxu0 %v1322
        %1632 = vmatprep.subr.mxu0 0.0
        %1633 = vmatpush2.msra.mxu0 0.0
        %1634 = vmatprep.subr.mxu0 0.0
        %1635 = vmatpush2.msra.mxu0 0.0
        %1636 = vmatprep.subr.mxu0 0.0
        %1637 = vmatpush2.msra.mxu0 0.0
        %1638 = vmatprep.subr.mxu0 0.0
        %1639 = vmatpush2.msra.mxu0 0.0
        %1640 = vmatprep.subr.mxu0 0.0
        %1641 = vmatpush2.msra.mxu0 0.0
        %1642 = vmatprep.subr.mxu0 0.0
        %1643 = vmatpush2.msra.mxu0 0.0
        %1644 = vmatprep.subr.mxu0 0.0
        %1645 = vmatpush2.msra.mxu0 0.0
        %1646 = vmatprep.subr.mxu0 0.0
        %1647 = vmatpush2.msra.mxu0 0.0
        %1648 = vmatprep.subr.mxu0 0.0
        %1649 = vmatpush2.msra.mxu0 0.0
        %1650 = vmatprep.subr.mxu0 0.0
        %1651 = vmatpush2.msra.mxu0 0.0
        %1652 = vmatprep.subr.mxu0 0.0
        %1653 = vmatpush2.msra.mxu0 0.0
        %1654 = vmatprep.subr.mxu0 0.0
        %1655 = vmatpush2.msra.mxu0 0.0
        %1656 = vmatprep.subr.mxu0 0.0
        %1657 = vmatpush2.msra.mxu0 0.0
        %1658 = vmatprep.subr.mxu0 0.0
        %1659 = vmatpush2.msra.mxu0 0.0
        %1660 = vmatprep.subr.mxu0 0.0
        %1661 = vmatpush2.msra.mxu0 0.0
        %1662 = vmatprep.subr.mxu0 0.0
        %1663 = vmatpush2.msra.mxu0 0.0
        %1664 = vmatprep.mubr.f32.mxu0 0.0
        %1665 = vmatmul.mubr.f32.gmra.mxu0 %v1577
        %v1666 = vpop.f32.mrf.mxu0
        %v1667 = vadd.f32 %v1538, %v1666
        %v1668 = vpop.f32.mrf.mxu0
        %1669 = vmatprep.mubr.f32.mxu0 0.0
        %1670 = vmatmul.mubr.f32.gmra.mxu0 %v1580
        %v1671 = vpop.f32.mrf.mxu0
        %v1672 = vadd.f32 %v1543, %v1671
        %v1673 = vpop.f32.mrf.mxu0
        %1674 = vmatprep.mubr.f32.mxu0 0.0
        %1675 = vmatmul.mubr.f32.gmra.mxu0 %v1583
        %v1676 = vpop.f32.mrf.mxu0
        %v1677 = vadd.f32 %v1548, %v1676
        %v1678 = vpop.f32.mrf.mxu0
        %1679 = vmatprep.mubr.f32.mxu0 0.0
        %1680 = vmatmul.mubr.f32.gmra.mxu0 %v1586
        %v1681 = vpop.f32.mrf.mxu0
        %v1682 = vadd.f32 %v1553, %v1681
        %v1683 = vpop.f32.mrf.mxu0
        %1684 = vmatprep.mubr.f32.mxu0 0.0
        %1685 = vmatmul.mubr.f32.gmra.mxu0 %v1589
        %v1686 = vpop.f32.mrf.mxu0
        %v1687 = vadd.f32 %v1558, %v1686
        %v1688 = vpop.f32.mrf.mxu0
        %1689 = vmatprep.mubr.f32.mxu0 0.0
        %1690 = vmatmul.mubr.f32.gmra.mxu0 %v1592
        %v1691 = vpop.f32.mrf.mxu0
        %v1692 = vadd.f32 %v1563, %v1691
        %v1693 = vpop.f32.mrf.mxu0
        %1694 = vmatprep.mubr.f32.mxu0 0.0
        %1695 = vmatmul.mubr.f32.gmra.mxu0 %v1595
        %v1696 = vpop.f32.mrf.mxu0
        %v1697 = vadd.f32 %v1568, %v1696
        %v1698 = vpop.f32.mrf.mxu0
        %1699 = vmatprep.mubr.f32.mxu0 0.0
        %1700 = vmatmul.mubr.f32.gmra.mxu0 %v1598
        %v1701 = vpop.f32.mrf.mxu0
        %v1702 = vadd.f32 %v1573, %v1701
        %v1703 = vpop.f32.mrf.mxu0
        %1704 = vdwg.mxu0
        %s1705 = scalar_lea.vmem %s7, 64
        %v1706 = vld [vmem:[%s1705] sm:$0xff]
        %v1707 = vld [vmem:[%s1705 + $0x8] sm:$0xff]
        %v1708 = vld [vmem:[%s1705 + $0x10] sm:$0xff]
        %v1709 = vld [vmem:[%s1705 + $0x18] sm:$0xff]
        %1710 = vmatprep.subr.mxu0 0.0
        %1711 = vmatpush1.msra.mxu0 0.0
        %1712 = vmatprep.subr.mxu0 0.0
        %1713 = vmatpush1.msra.mxu0 0.0
        %1714 = vmatprep.subr.mxu0 0.0
        %1715 = vmatpush1.msra.mxu0 0.0
        %1716 = vmatprep.subr.mxu0 0.0
        %1717 = vmatpush1.msra.mxu0 0.0
        %1718 = vmatprep.subr.mxu0 0.0
        %1719 = vmatpush1.msra.mxu0 0.0
        %1720 = vmatprep.subr.mxu0 0.0
        %1721 = vmatpush1.msra.mxu0 0.0
        %1722 = vmatprep.subr.mxu0 0.0
        %1723 = vmatpush1.msra.mxu0 0.0
        %1724 = vmatprep.subr.mxu0 0.0
        %1725 = vmatpush1.msra.mxu0 0.0
        %1726 = vmatprep.subr.mxu0 0.0
        %1727 = vmatpush1.msra.mxu0 0.0
        %1728 = vmatprep.subr.mxu0 0.0
        %1729 = vmatpush1.msra.mxu0 0.0
        %1730 = vmatprep.subr.mxu0 0.0
        %1731 = vmatpush1.msra.mxu0 0.0
        %1732 = vmatprep.subr.mxu0 0.0
        %1733 = vmatpush1.msra.mxu0 0.0
        %1734 = vmatprep.subr.mxu0 0.0
        %1735 = vmatpush1.msra.mxu0 %v1709
        %1736 = vmatprep.subr.mxu0 0.0
        %1737 = vmatpush1.msra.mxu0 %v1708
        %1738 = vmatprep.subr.mxu0 0.0
        %1739 = vmatpush1.msra.mxu0 %v1707
        %1740 = vmatprep.subr.mxu0 0.0
        %1741 = vmatpush1.msra.mxu0 %v1706
        %1742 = vmatprep.subr.mxu0 0.0
        %1743 = vmatpush2.msra.mxu0 0.0
        %1744 = vmatprep.subr.mxu0 0.0
        %1745 = vmatpush2.msra.mxu0 0.0
        %1746 = vmatprep.subr.mxu0 0.0
        %1747 = vmatpush2.msra.mxu0 0.0
        %1748 = vmatprep.subr.mxu0 0.0
        %1749 = vmatpush2.msra.mxu0 0.0
        %1750 = vmatprep.subr.mxu0 0.0
        %1751 = vmatpush2.msra.mxu0 0.0
        %1752 = vmatprep.subr.mxu0 0.0
        %1753 = vmatpush2.msra.mxu0 0.0
        %1754 = vmatprep.subr.mxu0 0.0
        %1755 = vmatpush2.msra.mxu0 0.0
        %1756 = vmatprep.subr.mxu0 0.0
        %1757 = vmatpush2.msra.mxu0 0.0
        %1758 = vmatprep.subr.mxu0 0.0
        %1759 = vmatpush2.msra.mxu0 0.0
        %1760 = vmatprep.subr.mxu0 0.0
        %1761 = vmatpush2.msra.mxu0 0.0
        %1762 = vmatprep.subr.mxu0 0.0
        %1763 = vmatpush2.msra.mxu0 0.0
        %1764 = vmatprep.subr.mxu0 0.0
        %1765 = vmatpush2.msra.mxu0 0.0
        %1766 = vmatprep.subr.mxu0 0.0
        %1767 = vmatpush2.msra.mxu0 0.0
        %1768 = vmatprep.subr.mxu0 0.0
        %1769 = vmatpush2.msra.mxu0 0.0
        %1770 = vmatprep.subr.mxu0 0.0
        %1771 = vmatpush2.msra.mxu0 0.0
        %1772 = vmatprep.subr.mxu0 0.0
        %1773 = vmatpush2.msra.mxu0 0.0
        %1774 = vmatprep.mubr.f32.mxu0 0.0
        %1775 = vmatmul.mubr.f32.gmra.mxu0 %v1244
        %v1776 = vpop.f32.mrf.mxu0
        %v1777 = vadd.f32 0.0, %v1776
        %v1778 = vpop.f32.mrf.mxu0
        %1779 = vmatprep.mubr.f32.mxu0 0.0
        %1780 = vmatmul.mubr.f32.gmra.mxu0 %v1247
        %v1781 = vpop.f32.mrf.mxu0
        %v1782 = vadd.f32 0.0, %v1781
        %v1783 = vpop.f32.mrf.mxu0
        %1784 = vmatprep.mubr.f32.mxu0 0.0
        %1785 = vmatmul.mubr.f32.gmra.mxu0 %v1250
        %v1786 = vpop.f32.mrf.mxu0
        %v1787 = vadd.f32 0.0, %v1786
        %v1788 = vpop.f32.mrf.mxu0
        %1789 = vmatprep.mubr.f32.mxu0 0.0
        %1790 = vmatmul.mubr.f32.gmra.mxu0 %v1253
        %v1791 = vpop.f32.mrf.mxu0
        %v1792 = vadd.f32 0.0, %v1791
        %v1793 = vpop.f32.mrf.mxu0
        %1794 = vdwg.mxu0
        %s1795 = scalar_lea.vmem %s6, 128
        %v1796 = vld [vmem:[%s1795] sm:$0xff]
        %v1797 = vld [vmem:[%s1795 + $0x8] sm:$0xff]
        %v1798 = vld [vmem:[%s1795 + $0x10] sm:$0xff]
        %v1799 = vld [vmem:[%s1795 + $0x18] sm:$0xff]
        %v1800 = vld [vmem:[%s1795 + $0x20] sm:$0xff]
        %v1801 = vld [vmem:[%s1795 + $0x28] sm:$0xff]
        %v1802 = vld [vmem:[%s1795 + $0x30] sm:$0xff]
        %v1803 = vld [vmem:[%s1795 + $0x38] sm:$0xff]
        %v1805 = vsel %vm1242, %v1796, 0
        %v1808 = vsel %vm1242, %v1797, 0
        %v1811 = vsel %vm1242, %v1798, 0
        %v1814 = vsel %vm1242, %v1799, 0
        %v1817 = vsel %vm1242, %v1800, 0
        %v1820 = vsel %vm1242, %v1801, 0
        %v1823 = vsel %vm1242, %v1802, 0
        %v1826 = vsel %vm1242, %v1803, 0
        %1828 = vmatprep.subr.mxu0 0.0
        %1829 = vmatpush1.msra.mxu0 0.0
        %1830 = vmatprep.subr.mxu0 0.0
        %1831 = vmatpush1.msra.mxu0 0.0
        %1832 = vmatprep.subr.mxu0 0.0
        %1833 = vmatpush1.msra.mxu0 0.0
        %1834 = vmatprep.subr.mxu0 0.0
        %1835 = vmatpush1.msra.mxu0 0.0
        %1836 = vmatprep.subr.mxu0 0.0
        %1837 = vmatpush1.msra.mxu0 0.0
        %1838 = vmatprep.subr.mxu0 0.0
        %1839 = vmatpush1.msra.mxu0 0.0
        %1840 = vmatprep.subr.mxu0 0.0
        %1841 = vmatpush1.msra.mxu0 0.0
        %1842 = vmatprep.subr.mxu0 0.0
        %1843 = vmatpush1.msra.mxu0 0.0
        %1844 = vmatprep.subr.mxu0 0.0
        %1845 = vmatpush1.msra.mxu0 0.0
        %1846 = vmatprep.subr.mxu0 0.0
        %1847 = vmatpush1.msra.mxu0 0.0
        %1848 = vmatprep.subr.mxu0 0.0
        %1849 = vmatpush1.msra.mxu0 0.0
        %1850 = vmatprep.subr.mxu0 0.0
        %1851 = vmatpush1.msra.mxu0 0.0
        %1852 = vmatprep.subr.mxu0 0.0
        %1853 = vmatpush1.msra.mxu0 %v1792
        %1854 = vmatprep.subr.mxu0 0.0
        %1855 = vmatpush1.msra.mxu0 %v1787
        %1856 = vmatprep.subr.mxu0 0.0
        %1857 = vmatpush1.msra.mxu0 %v1782
        %1858 = vmatprep.subr.mxu0 0.0
        %1859 = vmatpush1.msra.mxu0 %v1777
        %1860 = vmatprep.subr.mxu0 0.0
        %1861 = vmatpush2.msra.mxu0 0.0
        %1862 = vmatprep.subr.mxu0 0.0
        %1863 = vmatpush2.msra.mxu0 0.0
        %1864 = vmatprep.subr.mxu0 0.0
        %1865 = vmatpush2.msra.mxu0 0.0
        %1866 = vmatprep.subr.mxu0 0.0
        %1867 = vmatpush2.msra.mxu0 0.0
        %1868 = vmatprep.subr.mxu0 0.0
        %1869 = vmatpush2.msra.mxu0 0.0
        %1870 = vmatprep.subr.mxu0 0.0
        %1871 = vmatpush2.msra.mxu0 0.0
        %1872 = vmatprep.subr.mxu0 0.0
        %1873 = vmatpush2.msra.mxu0 0.0
        %1874 = vmatprep.subr.mxu0 0.0
        %1875 = vmatpush2.msra.mxu0 0.0
        %1876 = vmatprep.subr.mxu0 0.0
        %1877 = vmatpush2.msra.mxu0 0.0
        %1878 = vmatprep.subr.mxu0 0.0
        %1879 = vmatpush2.msra.mxu0 0.0
        %1880 = vmatprep.subr.mxu0 0.0
        %1881 = vmatpush2.msra.mxu0 0.0
        %1882 = vmatprep.subr.mxu0 0.0
        %1883 = vmatpush2.msra.mxu0 0.0
        %1884 = vmatprep.subr.mxu0 0.0
        %1885 = vmatpush2.msra.mxu0 0.0
        %1886 = vmatprep.subr.mxu0 0.0
        %1887 = vmatpush2.msra.mxu0 0.0
        %1888 = vmatprep.subr.mxu0 0.0
        %1889 = vmatpush2.msra.mxu0 0.0
        %1890 = vmatprep.subr.mxu0 0.0
        %1891 = vmatpush2.msra.mxu0 0.0
        %1892 = vmatprep.mubr.f32.mxu0 0.0
        %1893 = vmatmul.mubr.f32.gmra.mxu0 %v1805
        %v1894 = vpop.f32.mrf.mxu0
        %v1895 = vadd.f32 0.0, %v1894
        %v1896 = vpop.f32.mrf.mxu0
        %1897 = vmatprep.mubr.f32.mxu0 0.0
        %1898 = vmatmul.mubr.f32.gmra.mxu0 %v1808
        %v1899 = vpop.f32.mrf.mxu0
        %v1900 = vadd.f32 0.0, %v1899
        %v1901 = vpop.f32.mrf.mxu0
        %1902 = vmatprep.mubr.f32.mxu0 0.0
        %1903 = vmatmul.mubr.f32.gmra.mxu0 %v1811
        %v1904 = vpop.f32.mrf.mxu0
        %v1905 = vadd.f32 0.0, %v1904
        %v1906 = vpop.f32.mrf.mxu0
        %1907 = vmatprep.mubr.f32.mxu0 0.0
        %1908 = vmatmul.mubr.f32.gmra.mxu0 %v1814
        %v1909 = vpop.f32.mrf.mxu0
        %v1910 = vadd.f32 0.0, %v1909
        %v1911 = vpop.f32.mrf.mxu0
        %1912 = vmatprep.mubr.f32.mxu0 0.0
        %1913 = vmatmul.mubr.f32.gmra.mxu0 %v1817
        %v1914 = vpop.f32.mrf.mxu0
        %v1915 = vadd.f32 0.0, %v1914
        %v1916 = vpop.f32.mrf.mxu0
        %1917 = vmatprep.mubr.f32.mxu0 0.0
        %1918 = vmatmul.mubr.f32.gmra.mxu0 %v1820
        %v1919 = vpop.f32.mrf.mxu0
        %v1920 = vadd.f32 0.0, %v1919
        %v1921 = vpop.f32.mrf.mxu0
        %1922 = vmatprep.mubr.f32.mxu0 0.0
        %1923 = vmatmul.mubr.f32.gmra.mxu0 %v1823
        %v1924 = vpop.f32.mrf.mxu0
        %v1925 = vadd.f32 0.0, %v1924
        %v1926 = vpop.f32.mrf.mxu0
        %1927 = vmatprep.mubr.f32.mxu0 0.0
        %1928 = vmatmul.mubr.f32.gmra.mxu0 %v1826
        %v1929 = vpop.f32.mrf.mxu0
        %v1930 = vadd.f32 0.0, %v1929
        %v1931 = vpop.f32.mrf.mxu0
        %1932 = vdwg.mxu0
        %v1933 = vadd.f32 %v1667, %v1895
        %v1934 = vadd.f32 %v1672, %v1900
        %v1935 = vadd.f32 %v1677, %v1905
        %v1936 = vadd.f32 %v1682, %v1910
        %v1937 = vadd.f32 %v1687, %v1915
        %v1938 = vadd.f32 %v1692, %v1920
        %v1939 = vadd.f32 %v1697, %v1925
        %v1940 = vadd.f32 %v1702, %v1930
        %s1941 = scalar_lea.vmem %s7, 96
        %v1942 = vld [vmem:[%s1941] sm:$0xff]
        %v1943 = vld [vmem:[%s1941 + $0x8] sm:$0xff]
        %v1944 = vld [vmem:[%s1941 + $0x10] sm:$0xff]
        %v1945 = vld [vmem:[%s1941 + $0x18] sm:$0xff]
        %1946 = vmatprep.subr.mxu0 0.0
        %1947 = vmatpush1.msra.mxu0 0.0
        %1948 = vmatprep.subr.mxu0 0.0
        %1949 = vmatpush1.msra.mxu0 0.0
        %1950 = vmatprep.subr.mxu0 0.0
        %1951 = vmatpush1.msra.mxu0 0.0
        %1952 = vmatprep.subr.mxu0 0.0
        %1953 = vmatpush1.msra.mxu0 0.0
        %1954 = vmatprep.subr.mxu0 0.0
        %1955 = vmatpush1.msra.mxu0 0.0
        %1956 = vmatprep.subr.mxu0 0.0
        %1957 = vmatpush1.msra.mxu0 0.0
        %1958 = vmatprep.subr.mxu0 0.0
        %1959 = vmatpush1.msra.mxu0 0.0
        %1960 = vmatprep.subr.mxu0 0.0
        %1961 = vmatpush1.msra.mxu0 0.0
        %1962 = vmatprep.subr.mxu0 0.0
        %1963 = vmatpush1.msra.mxu0 0.0
        %1964 = vmatprep.subr.mxu0 0.0
        %1965 = vmatpush1.msra.mxu0 0.0
        %1966 = vmatprep.subr.mxu0 0.0
        %1967 = vmatpush1.msra.mxu0 0.0
        %1968 = vmatprep.subr.mxu0 0.0
        %1969 = vmatpush1.msra.mxu0 0.0
        %1970 = vmatprep.subr.mxu0 0.0
        %1971 = vmatpush1.msra.mxu0 %v1945
        %1972 = vmatprep.subr.mxu0 0.0
        %1973 = vmatpush1.msra.mxu0 %v1944
        %1974 = vmatprep.subr.mxu0 0.0
        %1975 = vmatpush1.msra.mxu0 %v1943
        %1976 = vmatprep.subr.mxu0 0.0
        %1977 = vmatpush1.msra.mxu0 %v1942
        %1978 = vmatprep.subr.mxu0 0.0
        %1979 = vmatpush2.msra.mxu0 0.0
        %1980 = vmatprep.subr.mxu0 0.0
        %1981 = vmatpush2.msra.mxu0 0.0
        %1982 = vmatprep.subr.mxu0 0.0
        %1983 = vmatpush2.msra.mxu0 0.0
        %1984 = vmatprep.subr.mxu0 0.0
        %1985 = vmatpush2.msra.mxu0 0.0
        %1986 = vmatprep.subr.mxu0 0.0
        %1987 = vmatpush2.msra.mxu0 0.0
        %1988 = vmatprep.subr.mxu0 0.0
        %1989 = vmatpush2.msra.mxu0 0.0
        %1990 = vmatprep.subr.mxu0 0.0
        %1991 = vmatpush2.msra.mxu0 0.0
        %1992 = vmatprep.subr.mxu0 0.0
        %1993 = vmatpush2.msra.mxu0 0.0
        %1994 = vmatprep.subr.mxu0 0.0
        %1995 = vmatpush2.msra.mxu0 0.0
        %1996 = vmatprep.subr.mxu0 0.0
        %1997 = vmatpush2.msra.mxu0 0.0
        %1998 = vmatprep.subr.mxu0 0.0
        %1999 = vmatpush2.msra.mxu0 0.0
        %2000 = vmatprep.subr.mxu0 0.0
        %2001 = vmatpush2.msra.mxu0 0.0
        %2002 = vmatprep.subr.mxu0 0.0
        %2003 = vmatpush2.msra.mxu0 0.0
        %2004 = vmatprep.subr.mxu0 0.0
        %2005 = vmatpush2.msra.mxu0 0.0
        %2006 = vmatprep.subr.mxu0 0.0
        %2007 = vmatpush2.msra.mxu0 0.0
        %2008 = vmatprep.subr.mxu0 0.0
        %2009 = vmatpush2.msra.mxu0 0.0
        %2010 = vmatprep.mubr.f32.mxu0 0.0
        %2011 = vmatmul.mubr.f32.gmra.mxu0 %v1244
        %v2012 = vpop.f32.mrf.mxu0
        %v2013 = vadd.f32 0.0, %v2012
        %v2014 = vpop.f32.mrf.mxu0
        %2015 = vmatprep.mubr.f32.mxu0 0.0
        %2016 = vmatmul.mubr.f32.gmra.mxu0 %v1247
        %v2017 = vpop.f32.mrf.mxu0
        %v2018 = vadd.f32 0.0, %v2017
        %v2019 = vpop.f32.mrf.mxu0
        %2020 = vmatprep.mubr.f32.mxu0 0.0
        %2021 = vmatmul.mubr.f32.gmra.mxu0 %v1250
        %v2022 = vpop.f32.mrf.mxu0
        %v2023 = vadd.f32 0.0, %v2022
        %v2024 = vpop.f32.mrf.mxu0
        %2025 = vmatprep.mubr.f32.mxu0 0.0
        %2026 = vmatmul.mubr.f32.gmra.mxu0 %v1253
        %v2027 = vpop.f32.mrf.mxu0
        %v2028 = vadd.f32 0.0, %v2027
        %v2029 = vpop.f32.mrf.mxu0
        %2030 = vdwg.mxu0
        %s2031 = scalar_lea.vmem %s6, 192
        %v2032 = vld [vmem:[%s2031] sm:$0xff]
        %v2033 = vld [vmem:[%s2031 + $0x8] sm:$0xff]
        %v2034 = vld [vmem:[%s2031 + $0x10] sm:$0xff]
        %v2035 = vld [vmem:[%s2031 + $0x18] sm:$0xff]
        %v2036 = vld [vmem:[%s2031 + $0x20] sm:$0xff]
        %v2037 = vld [vmem:[%s2031 + $0x28] sm:$0xff]
        %v2038 = vld [vmem:[%s2031 + $0x30] sm:$0xff]
        %v2039 = vld [vmem:[%s2031 + $0x38] sm:$0xff]
        %v2041 = vsel %vm1242, %v2032, 0
        %v2044 = vsel %vm1242, %v2033, 0
        %v2047 = vsel %vm1242, %v2034, 0
        %v2050 = vsel %vm1242, %v2035, 0
        %v2053 = vsel %vm1242, %v2036, 0
        %v2056 = vsel %vm1242, %v2037, 0
        %v2059 = vsel %vm1242, %v2038, 0
        %v2062 = vsel %vm1242, %v2039, 0
        %2064 = vmatprep.subr.mxu0 0.0
        %2065 = vmatpush1.msra.mxu0 0.0
        %2066 = vmatprep.subr.mxu0 0.0
        %2067 = vmatpush1.msra.mxu0 0.0
        %2068 = vmatprep.subr.mxu0 0.0
        %2069 = vmatpush1.msra.mxu0 0.0
        %2070 = vmatprep.subr.mxu0 0.0
        %2071 = vmatpush1.msra.mxu0 0.0
        %2072 = vmatprep.subr.mxu0 0.0
        %2073 = vmatpush1.msra.mxu0 0.0
        %2074 = vmatprep.subr.mxu0 0.0
        %2075 = vmatpush1.msra.mxu0 0.0
        %2076 = vmatprep.subr.mxu0 0.0
        %2077 = vmatpush1.msra.mxu0 0.0
        %2078 = vmatprep.subr.mxu0 0.0
        %2079 = vmatpush1.msra.mxu0 0.0
        %2080 = vmatprep.subr.mxu0 0.0
        %2081 = vmatpush1.msra.mxu0 0.0
        %2082 = vmatprep.subr.mxu0 0.0
        %2083 = vmatpush1.msra.mxu0 0.0
        %2084 = vmatprep.subr.mxu0 0.0
        %2085 = vmatpush1.msra.mxu0 0.0
        %2086 = vmatprep.subr.mxu0 0.0
        %2087 = vmatpush1.msra.mxu0 0.0
        %2088 = vmatprep.subr.mxu0 0.0
        %2089 = vmatpush1.msra.mxu0 %v2028
        %2090 = vmatprep.subr.mxu0 0.0
        %2091 = vmatpush1.msra.mxu0 %v2023
        %2092 = vmatprep.subr.mxu0 0.0
        %2093 = vmatpush1.msra.mxu0 %v2018
        %2094 = vmatprep.subr.mxu0 0.0
        %2095 = vmatpush1.msra.mxu0 %v2013
        %2096 = vmatprep.subr.mxu0 0.0
        %2097 = vmatpush2.msra.mxu0 0.0
        %2098 = vmatprep.subr.mxu0 0.0
        %2099 = vmatpush2.msra.mxu0 0.0
        %2100 = vmatprep.subr.mxu0 0.0
        %2101 = vmatpush2.msra.mxu0 0.0
        %2102 = vmatprep.subr.mxu0 0.0
        %2103 = vmatpush2.msra.mxu0 0.0
        %2104 = vmatprep.subr.mxu0 0.0
        %2105 = vmatpush2.msra.mxu0 0.0
        %2106 = vmatprep.subr.mxu0 0.0
        %2107 = vmatpush2.msra.mxu0 0.0
        %2108 = vmatprep.subr.mxu0 0.0
        %2109 = vmatpush2.msra.mxu0 0.0
        %2110 = vmatprep.subr.mxu0 0.0
        %2111 = vmatpush2.msra.mxu0 0.0
        %2112 = vmatprep.subr.mxu0 0.0
        %2113 = vmatpush2.msra.mxu0 0.0
        %2114 = vmatprep.subr.mxu0 0.0
        %2115 = vmatpush2.msra.mxu0 0.0
        %2116 = vmatprep.subr.mxu0 0.0
        %2117 = vmatpush2.msra.mxu0 0.0
        %2118 = vmatprep.subr.mxu0 0.0
        %2119 = vmatpush2.msra.mxu0 0.0
        %2120 = vmatprep.subr.mxu0 0.0
        %2121 = vmatpush2.msra.mxu0 0.0
        %2122 = vmatprep.subr.mxu0 0.0
        %2123 = vmatpush2.msra.mxu0 0.0
        %2124 = vmatprep.subr.mxu0 0.0
        %2125 = vmatpush2.msra.mxu0 0.0
        %2126 = vmatprep.subr.mxu0 0.0
        %2127 = vmatpush2.msra.mxu0 0.0
        %2128 = vmatprep.mubr.f32.mxu0 0.0
        %2129 = vmatmul.mubr.f32.gmra.mxu0 %v2041
        %v2130 = vpop.f32.mrf.mxu0
        %v2131 = vadd.f32 0.0, %v2130
        %v2132 = vpop.f32.mrf.mxu0
        %2133 = vmatprep.mubr.f32.mxu0 0.0
        %2134 = vmatmul.mubr.f32.gmra.mxu0 %v2044
        %v2135 = vpop.f32.mrf.mxu0
        %v2136 = vadd.f32 0.0, %v2135
        %v2137 = vpop.f32.mrf.mxu0
        %2138 = vmatprep.mubr.f32.mxu0 0.0
        %2139 = vmatmul.mubr.f32.gmra.mxu0 %v2047
        %v2140 = vpop.f32.mrf.mxu0
        %v2141 = vadd.f32 0.0, %v2140
        %v2142 = vpop.f32.mrf.mxu0
        %2143 = vmatprep.mubr.f32.mxu0 0.0
        %2144 = vmatmul.mubr.f32.gmra.mxu0 %v2050
        %v2145 = vpop.f32.mrf.mxu0
        %v2146 = vadd.f32 0.0, %v2145
        %v2147 = vpop.f32.mrf.mxu0
        %2148 = vmatprep.mubr.f32.mxu0 0.0
        %2149 = vmatmul.mubr.f32.gmra.mxu0 %v2053
        %v2150 = vpop.f32.mrf.mxu0
        %v2151 = vadd.f32 0.0, %v2150
        %v2152 = vpop.f32.mrf.mxu0
        %2153 = vmatprep.mubr.f32.mxu0 0.0
        %2154 = vmatmul.mubr.f32.gmra.mxu0 %v2056
        %v2155 = vpop.f32.mrf.mxu0
        %v2156 = vadd.f32 0.0, %v2155
        %v2157 = vpop.f32.mrf.mxu0
        %2158 = vmatprep.mubr.f32.mxu0 0.0
        %2159 = vmatmul.mubr.f32.gmra.mxu0 %v2059
        %v2160 = vpop.f32.mrf.mxu0
        %v2161 = vadd.f32 0.0, %v2160
        %v2162 = vpop.f32.mrf.mxu0
        %2163 = vmatprep.mubr.f32.mxu0 0.0
        %2164 = vmatmul.mubr.f32.gmra.mxu0 %v2062
        %v2165 = vpop.f32.mrf.mxu0
        %v2166 = vadd.f32 0.0, %v2165
        %v2167 = vpop.f32.mrf.mxu0
        %2168 = vdwg.mxu0
        %v2169 = vadd.f32 %v1933, %v2131
        %v2170 = vadd.f32 %v1934, %v2136
        %v2171 = vadd.f32 %v1935, %v2141
        %v2172 = vadd.f32 %v1936, %v2146
        %v2173 = vadd.f32 %v1937, %v2151
        %v2174 = vadd.f32 %v1938, %v2156
        %v2175 = vadd.f32 %v1939, %v2161
        %v2176 = vadd.f32 %v1940, %v2166
        %v2177 = vstv %s1237
        %v2178 = vadd.f32 %v2169, %v2177
        %v2179 = vadd.f32 %v2170, %v2177
        %v2180 = vadd.f32 %v2171, %v2177
        %v2181 = vadd.f32 %v2172, %v2177
        %v2182 = vadd.f32 %v2173, %v2177
        %v2183 = vadd.f32 %v2174, %v2177
        %v2184 = vadd.f32 %v2175, %v2177
        %v2185 = vadd.f32 %v2176, %v2177
        %v2186 = vmax.f32 %v2178, 0.0
        %v2187 = vmax.f32 %v2179, 0.0
        %v2188 = vmax.f32 %v2180, 0.0
        %v2189 = vmax.f32 %v2181, 0.0
        %v2190 = vmax.f32 %v2182, 0.0
        %v2191 = vmax.f32 %v2183, 0.0
        %v2192 = vmax.f32 %v2184, 0.0
        %v2193 = vmax.f32 %v2185, 0.0
        %s2194 = sld [smem:[#allocation4 + $0x2]]
        %v2195 = vld [vmem:[%s9] sm:$0xff]
        %v2196 = vld [vmem:[%s9 + $0x8] sm:$0xff]
        %v2197 = vld [vmem:[%s9 + $0x10] sm:$0xff]
        %v2198 = vld [vmem:[%s9 + $0x18] sm:$0xff]
        %v2199 = vld [vmem:[%s9 + $0x20] sm:$0xff]
        %v2200 = vld [vmem:[%s9 + $0x28] sm:$0xff]
        %v2201 = vld [vmem:[%s9 + $0x30] sm:$0xff]
        %v2202 = vld [vmem:[%s9 + $0x38] sm:$0xff]
        %vm2203 = vcmask 523264
        %v2205 = vsel %vm2203, %v2186, 0
        %v2208 = vsel %vm2203, %v2187, 0
        %v2211 = vsel %vm2203, %v2188, 0
        %v2214 = vsel %vm2203, %v2189, 0
        %v2217 = vsel %vm2203, %v2190, 0
        %v2220 = vsel %vm2203, %v2191, 0
        %v2223 = vsel %vm2203, %v2192, 0
        %v2226 = vsel %vm2203, %v2193, 0
        %2228 = vmatprep.subr.mxu0 0.0
        %2229 = vmatpush1.msra.mxu0 0.0
        %2230 = vmatprep.subr.mxu0 0.0
        %2231 = vmatpush1.msra.mxu0 0.0
        %2232 = vmatprep.subr.mxu0 0.0
        %2233 = vmatpush1.msra.mxu0 0.0
        %2234 = vmatprep.subr.mxu0 0.0
        %2235 = vmatpush1.msra.mxu0 0.0
        %2236 = vmatprep.subr.mxu0 0.0
        %2237 = vmatpush1.msra.mxu0 0.0
        %2238 = vmatprep.subr.mxu0 0.0
        %2239 = vmatpush1.msra.mxu0 0.0
        %2240 = vmatprep.subr.mxu0 0.0
        %2241 = vmatpush1.msra.mxu0 0.0
        %2242 = vmatprep.subr.mxu0 0.0
        %2243 = vmatpush1.msra.mxu0 0.0
        %2244 = vmatprep.subr.mxu0 0.0
        %2245 = vmatpush1.msra.mxu0 %v2202
        %2246 = vmatprep.subr.mxu0 0.0
        %2247 = vmatpush1.msra.mxu0 %v2201
        %2248 = vmatprep.subr.mxu0 0.0
        %2249 = vmatpush1.msra.mxu0 %v2200
        %2250 = vmatprep.subr.mxu0 0.0
        %2251 = vmatpush1.msra.mxu0 %v2199
        %2252 = vmatprep.subr.mxu0 0.0
        %2253 = vmatpush1.msra.mxu0 %v2198
        %2254 = vmatprep.subr.mxu0 0.0
        %2255 = vmatpush1.msra.mxu0 %v2197
        %2256 = vmatprep.subr.mxu0 0.0
        %2257 = vmatpush1.msra.mxu0 %v2196
        %2258 = vmatprep.subr.mxu0 0.0
        %2259 = vmatpush1.msra.mxu0 %v2195
        %2260 = vmatprep.subr.mxu0 0.0
        %2261 = vmatpush2.msra.mxu0 0.0
        %2262 = vmatprep.subr.mxu0 0.0
        %2263 = vmatpush2.msra.mxu0 0.0
        %2264 = vmatprep.subr.mxu0 0.0
        %2265 = vmatpush2.msra.mxu0 0.0
        %2266 = vmatprep.subr.mxu0 0.0
        %2267 = vmatpush2.msra.mxu0 0.0
        %2268 = vmatprep.subr.mxu0 0.0
        %2269 = vmatpush2.msra.mxu0 0.0
        %2270 = vmatprep.subr.mxu0 0.0
        %2271 = vmatpush2.msra.mxu0 0.0
        %2272 = vmatprep.subr.mxu0 0.0
        %2273 = vmatpush2.msra.mxu0 0.0
        %2274 = vmatprep.subr.mxu0 0.0
        %2275 = vmatpush2.msra.mxu0 0.0
        %2276 = vmatprep.subr.mxu0 0.0
        %2277 = vmatpush2.msra.mxu0 0.0
        %2278 = vmatprep.subr.mxu0 0.0
        %2279 = vmatpush2.msra.mxu0 0.0
        %2280 = vmatprep.subr.mxu0 0.0
        %2281 = vmatpush2.msra.mxu0 0.0
        %2282 = vmatprep.subr.mxu0 0.0
        %2283 = vmatpush2.msra.mxu0 0.0
        %2284 = vmatprep.subr.mxu0 0.0
        %2285 = vmatpush2.msra.mxu0 0.0
        %2286 = vmatprep.subr.mxu0 0.0
        %2287 = vmatpush2.msra.mxu0 0.0
        %2288 = vmatprep.subr.mxu0 0.0
        %2289 = vmatpush2.msra.mxu0 0.0
        %2290 = vmatprep.subr.mxu0 0.0
        %2291 = vmatpush2.msra.mxu0 0.0
        %2292 = vmatprep.mubr.f32.mxu0 0.0
        %2293 = vmatmul.mubr.f32.gmra.mxu0 %v2205
        %v2294 = vpop.f32.mrf.mxu0
        %v2295 = vadd.f32 0.0, %v2294
        %v2296 = vpop.f32.mrf.mxu0
        %2297 = vmatprep.mubr.f32.mxu0 0.0
        %2298 = vmatmul.mubr.f32.gmra.mxu0 %v2208
        %v2299 = vpop.f32.mrf.mxu0
        %v2300 = vadd.f32 0.0, %v2299
        %v2301 = vpop.f32.mrf.mxu0
        %2302 = vmatprep.mubr.f32.mxu0 0.0
        %2303 = vmatmul.mubr.f32.gmra.mxu0 %v2211
        %v2304 = vpop.f32.mrf.mxu0
        %v2305 = vadd.f32 0.0, %v2304
        %v2306 = vpop.f32.mrf.mxu0
        %2307 = vmatprep.mubr.f32.mxu0 0.0
        %2308 = vmatmul.mubr.f32.gmra.mxu0 %v2214
        %v2309 = vpop.f32.mrf.mxu0
        %v2310 = vadd.f32 0.0, %v2309
        %v2311 = vpop.f32.mrf.mxu0
        %2312 = vmatprep.mubr.f32.mxu0 0.0
        %2313 = vmatmul.mubr.f32.gmra.mxu0 %v2217
        %v2314 = vpop.f32.mrf.mxu0
        %v2315 = vadd.f32 0.0, %v2314
        %v2316 = vpop.f32.mrf.mxu0
        %2317 = vmatprep.mubr.f32.mxu0 0.0
        %2318 = vmatmul.mubr.f32.gmra.mxu0 %v2220
        %v2319 = vpop.f32.mrf.mxu0
        %v2320 = vadd.f32 0.0, %v2319
        %v2321 = vpop.f32.mrf.mxu0
        %2322 = vmatprep.mubr.f32.mxu0 0.0
        %2323 = vmatmul.mubr.f32.gmra.mxu0 %v2223
        %v2324 = vpop.f32.mrf.mxu0
        %v2325 = vadd.f32 0.0, %v2324
        %v2326 = vpop.f32.mrf.mxu0
        %2327 = vmatprep.mubr.f32.mxu0 0.0
        %2328 = vmatmul.mubr.f32.gmra.mxu0 %v2226
        %v2329 = vpop.f32.mrf.mxu0
        %v2330 = vadd.f32 0.0, %v2329
        %v2331 = vpop.f32.mrf.mxu0
        %2332 = vdwg.mxu0
        %v2333 = vld [vmem:[%s8] sm:$0xff]
        %v2334 = vld [vmem:[%s8 + $0x8] sm:$0xff]
        %v2335 = vld [vmem:[%s8 + $0x10] sm:$0xff]
        %v2336 = vld [vmem:[%s8 + $0x18] sm:$0xff]
        %v2337 = vld [vmem:[%s8 + $0x20] sm:$0xff]
        %v2338 = vld [vmem:[%s8 + $0x28] sm:$0xff]
        %v2339 = vld [vmem:[%s8 + $0x30] sm:$0xff]
        %v2340 = vld [vmem:[%s8 + $0x38] sm:$0xff]
        %v2341 = vld [vmem:[%s8 + $0x40] sm:$0xff]
        %v2342 = vld [vmem:[%s8 + $0x48] sm:$0xff]
        %v2343 = vld [vmem:[%s8 + $0x50] sm:$0xff]
        %v2344 = vld [vmem:[%s8 + $0x58] sm:$0xff]
        %v2345 = vld [vmem:[%s8 + $0x60] sm:$0xff]
        %v2346 = vld [vmem:[%s8 + $0x68] sm:$0xff]
        %v2347 = vld [vmem:[%s8 + $0x70] sm:$0xff]
        %v2348 = vld [vmem:[%s8 + $0x78] sm:$0xff]
        %s2349 = scalar_lea.vmem %s9, 64
        %v2350 = vld [vmem:[%s2349] sm:$0xff]
        %v2351 = vld [vmem:[%s2349 + $0x8] sm:$0xff]
        %v2352 = vld [vmem:[%s2349 + $0x10] sm:$0xff]
        %v2353 = vld [vmem:[%s2349 + $0x18] sm:$0xff]
        %v2354 = vld [vmem:[%s2349 + $0x20] sm:$0xff]
        %v2355 = vld [vmem:[%s2349 + $0x28] sm:$0xff]
        %v2356 = vld [vmem:[%s2349 + $0x30] sm:$0xff]
        %v2357 = vld [vmem:[%s2349 + $0x38] sm:$0xff]
        %2358 = vmatprep.subr.mxu0 0.0
        %2359 = vmatpush1.msra.mxu0 0.0
        %2360 = vmatprep.subr.mxu0 0.0
        %2361 = vmatpush1.msra.mxu0 0.0
        %2362 = vmatprep.subr.mxu0 0.0
        %2363 = vmatpush1.msra.mxu0 0.0
        %2364 = vmatprep.subr.mxu0 0.0
        %2365 = vmatpush1.msra.mxu0 0.0
        %2366 = vmatprep.subr.mxu0 0.0
        %2367 = vmatpush1.msra.mxu0 0.0
        %2368 = vmatprep.subr.mxu0 0.0
        %2369 = vmatpush1.msra.mxu0 0.0
        %2370 = vmatprep.subr.mxu0 0.0
        %2371 = vmatpush1.msra.mxu0 0.0
        %2372 = vmatprep.subr.mxu0 0.0
        %2373 = vmatpush1.msra.mxu0 0.0
        %2374 = vmatprep.subr.mxu0 0.0
        %2375 = vmatpush1.msra.mxu0 %v2357
        %2376 = vmatprep.subr.mxu0 0.0
        %2377 = vmatpush1.msra.mxu0 %v2356
        %2378 = vmatprep.subr.mxu0 0.0
        %2379 = vmatpush1.msra.mxu0 %v2355
        %2380 = vmatprep.subr.mxu0 0.0
        %2381 = vmatpush1.msra.mxu0 %v2354
        %2382 = vmatprep.subr.mxu0 0.0
        %2383 = vmatpush1.msra.mxu0 %v2353
        %2384 = vmatprep.subr.mxu0 0.0
        %2385 = vmatpush1.msra.mxu0 %v2352
        %2386 = vmatprep.subr.mxu0 0.0
        %2387 = vmatpush1.msra.mxu0 %v2351
        %2388 = vmatprep.subr.mxu0 0.0
        %2389 = vmatpush1.msra.mxu0 %v2350
        %2390 = vmatprep.subr.mxu0 0.0
        %2391 = vmatpush2.msra.mxu0 0.0
        %2392 = vmatprep.subr.mxu0 0.0
        %2393 = vmatpush2.msra.mxu0 0.0
        %2394 = vmatprep.subr.mxu0 0.0
        %2395 = vmatpush2.msra.mxu0 0.0
        %2396 = vmatprep.subr.mxu0 0.0
        %2397 = vmatpush2.msra.mxu0 0.0
        %2398 = vmatprep.subr.mxu0 0.0
        %2399 = vmatpush2.msra.mxu0 0.0
        %2400 = vmatprep.subr.mxu0 0.0
        %2401 = vmatpush2.msra.mxu0 0.0
        %2402 = vmatprep.subr.mxu0 0.0
        %2403 = vmatpush2.msra.mxu0 0.0
        %2404 = vmatprep.subr.mxu0 0.0
        %2405 = vmatpush2.msra.mxu0 0.0
        %2406 = vmatprep.subr.mxu0 0.0
        %2407 = vmatpush2.msra.mxu0 0.0
        %2408 = vmatprep.subr.mxu0 0.0
        %2409 = vmatpush2.msra.mxu0 0.0
        %2410 = vmatprep.subr.mxu0 0.0
        %2411 = vmatpush2.msra.mxu0 0.0
        %2412 = vmatprep.subr.mxu0 0.0
        %2413 = vmatpush2.msra.mxu0 0.0
        %2414 = vmatprep.subr.mxu0 0.0
        %2415 = vmatpush2.msra.mxu0 0.0
        %2416 = vmatprep.subr.mxu0 0.0
        %2417 = vmatpush2.msra.mxu0 0.0
        %2418 = vmatprep.subr.mxu0 0.0
        %2419 = vmatpush2.msra.mxu0 0.0
        %2420 = vmatprep.subr.mxu0 0.0
        %2421 = vmatpush2.msra.mxu0 0.0
        %2422 = vmatprep.mubr.f32.mxu0 0.0
        %2423 = vmatmul.mubr.f32.gmra.mxu0 %v2205
        %v2424 = vpop.f32.mrf.mxu0
        %v2425 = vadd.f32 0.0, %v2424
        %v2426 = vpop.f32.mrf.mxu0
        %2427 = vmatprep.mubr.f32.mxu0 0.0
        %2428 = vmatmul.mubr.f32.gmra.mxu0 %v2208
        %v2429 = vpop.f32.mrf.mxu0
        %v2430 = vadd.f32 0.0, %v2429
        %v2431 = vpop.f32.mrf.mxu0
        %2432 = vmatprep.mubr.f32.mxu0 0.0
        %2433 = vmatmul.mubr.f32.gmra.mxu0 %v2211
        %v2434 = vpop.f32.mrf.mxu0
        %v2435 = vadd.f32 0.0, %v2434
        %v2436 = vpop.f32.mrf.mxu0
        %2437 = vmatprep.mubr.f32.mxu0 0.0
        %2438 = vmatmul.mubr.f32.gmra.mxu0 %v2214
        %v2439 = vpop.f32.mrf.mxu0
        %v2440 = vadd.f32 0.0, %v2439
        %v2441 = vpop.f32.mrf.mxu0
        %2442 = vmatprep.mubr.f32.mxu0 0.0
        %2443 = vmatmul.mubr.f32.gmra.mxu0 %v2217
        %v2444 = vpop.f32.mrf.mxu0
        %v2445 = vadd.f32 0.0, %v2444
        %v2446 = vpop.f32.mrf.mxu0
        %2447 = vmatprep.mubr.f32.mxu0 0.0
        %2448 = vmatmul.mubr.f32.gmra.mxu0 %v2220
        %v2449 = vpop.f32.mrf.mxu0
        %v2450 = vadd.f32 0.0, %v2449
        %v2451 = vpop.f32.mrf.mxu0
        %2452 = vmatprep.mubr.f32.mxu0 0.0
        %2453 = vmatmul.mubr.f32.gmra.mxu0 %v2223
        %v2454 = vpop.f32.mrf.mxu0
        %v2455 = vadd.f32 0.0, %v2454
        %v2456 = vpop.f32.mrf.mxu0
        %2457 = vmatprep.mubr.f32.mxu0 0.0
        %2458 = vmatmul.mubr.f32.gmra.mxu0 %v2226
        %v2459 = vpop.f32.mrf.mxu0
        %v2460 = vadd.f32 0.0, %v2459
        %v2461 = vpop.f32.mrf.mxu0
        %2462 = vdwg.mxu0
        %s2463 = scalar_lea.vmem %s8, 128
        %v2464 = vld [vmem:[%s2463] sm:$0xff]
        %v2465 = vld [vmem:[%s2463 + $0x8] sm:$0xff]
        %v2466 = vld [vmem:[%s2463 + $0x10] sm:$0xff]
        %v2467 = vld [vmem:[%s2463 + $0x18] sm:$0xff]
        %v2468 = vld [vmem:[%s2463 + $0x20] sm:$0xff]
        %v2469 = vld [vmem:[%s2463 + $0x28] sm:$0xff]
        %v2470 = vld [vmem:[%s2463 + $0x30] sm:$0xff]
        %v2471 = vld [vmem:[%s2463 + $0x38] sm:$0xff]
        %v2472 = vld [vmem:[%s2463 + $0x40] sm:$0xff]
        %v2473 = vld [vmem:[%s2463 + $0x48] sm:$0xff]
        %v2474 = vld [vmem:[%s2463 + $0x50] sm:$0xff]
        %v2475 = vld [vmem:[%s2463 + $0x58] sm:$0xff]
        %v2476 = vld [vmem:[%s2463 + $0x60] sm:$0xff]
        %v2477 = vld [vmem:[%s2463 + $0x68] sm:$0xff]
        %v2478 = vld [vmem:[%s2463 + $0x70] sm:$0xff]
        %v2479 = vld [vmem:[%s2463 + $0x78] sm:$0xff]
        %v2481 = vsel %vm2203, %v2464, 0
        %v2484 = vsel %vm2203, %v2465, 0
        %v2487 = vsel %vm2203, %v2466, 0
        %v2490 = vsel %vm2203, %v2467, 0
        %v2493 = vsel %vm2203, %v2468, 0
        %v2496 = vsel %vm2203, %v2469, 0
        %v2499 = vsel %vm2203, %v2470, 0
        %v2502 = vsel %vm2203, %v2471, 0
        %v2505 = vsel %vm2203, %v2472, 0
        %v2508 = vsel %vm2203, %v2473, 0
        %v2511 = vsel %vm2203, %v2474, 0
        %v2514 = vsel %vm2203, %v2475, 0
        %v2517 = vsel %vm2203, %v2476, 0
        %v2520 = vsel %vm2203, %v2477, 0
        %v2523 = vsel %vm2203, %v2478, 0
        %v2526 = vsel %vm2203, %v2479, 0
        %2528 = vmatprep.subr.mxu0 0.0
        %2529 = vmatpush1.msra.mxu0 0.0
        %2530 = vmatprep.subr.mxu0 0.0
        %2531 = vmatpush1.msra.mxu0 0.0
        %2532 = vmatprep.subr.mxu0 0.0
        %2533 = vmatpush1.msra.mxu0 0.0
        %2534 = vmatprep.subr.mxu0 0.0
        %2535 = vmatpush1.msra.mxu0 0.0
        %2536 = vmatprep.subr.mxu0 0.0
        %2537 = vmatpush1.msra.mxu0 0.0
        %2538 = vmatprep.subr.mxu0 0.0
        %2539 = vmatpush1.msra.mxu0 0.0
        %2540 = vmatprep.subr.mxu0 0.0
        %2541 = vmatpush1.msra.mxu0 0.0
        %2542 = vmatprep.subr.mxu0 0.0
        %2543 = vmatpush1.msra.mxu0 0.0
        %2544 = vmatprep.subr.mxu0 0.0
        %2545 = vmatpush1.msra.mxu0 %v2460
        %2546 = vmatprep.subr.mxu0 0.0
        %2547 = vmatpush1.msra.mxu0 %v2455
        %2548 = vmatprep.subr.mxu0 0.0
        %2549 = vmatpush1.msra.mxu0 %v2450
        %2550 = vmatprep.subr.mxu0 0.0
        %2551 = vmatpush1.msra.mxu0 %v2445
        %2552 = vmatprep.subr.mxu0 0.0
        %2553 = vmatpush1.msra.mxu0 %v2440
        %2554 = vmatprep.subr.mxu0 0.0
        %2555 = vmatpush1.msra.mxu0 %v2435
        %2556 = vmatprep.subr.mxu0 0.0
        %2557 = vmatpush1.msra.mxu0 %v2430
        %2558 = vmatprep.subr.mxu0 0.0
        %2559 = vmatpush1.msra.mxu0 %v2425
        %2560 = vmatprep.subr.mxu0 0.0
        %2561 = vmatpush2.msra.mxu0 0.0
        %2562 = vmatprep.subr.mxu0 0.0
        %2563 = vmatpush2.msra.mxu0 0.0
        %2564 = vmatprep.subr.mxu0 0.0
        %2565 = vmatpush2.msra.mxu0 0.0
        %2566 = vmatprep.subr.mxu0 0.0
        %2567 = vmatpush2.msra.mxu0 0.0
        %2568 = vmatprep.subr.mxu0 0.0
        %2569 = vmatpush2.msra.mxu0 0.0
        %2570 = vmatprep.subr.mxu0 0.0
        %2571 = vmatpush2.msra.mxu0 0.0
        %2572 = vmatprep.subr.mxu0 0.0
        %2573 = vmatpush2.msra.mxu0 0.0
        %2574 = vmatprep.subr.mxu0 0.0
        %2575 = vmatpush2.msra.mxu0 0.0
        %2576 = vmatprep.subr.mxu0 0.0
        %2577 = vmatpush2.msra.mxu0 0.0
        %2578 = vmatprep.subr.mxu0 0.0
        %2579 = vmatpush2.msra.mxu0 0.0
        %2580 = vmatprep.subr.mxu0 0.0
        %2581 = vmatpush2.msra.mxu0 0.0
        %2582 = vmatprep.subr.mxu0 0.0
        %2583 = vmatpush2.msra.mxu0 0.0
        %2584 = vmatprep.subr.mxu0 0.0
        %2585 = vmatpush2.msra.mxu0 0.0
        %2586 = vmatprep.subr.mxu0 0.0
        %2587 = vmatpush2.msra.mxu0 0.0
        %2588 = vmatprep.subr.mxu0 0.0
        %2589 = vmatpush2.msra.mxu0 0.0
        %2590 = vmatprep.subr.mxu0 0.0
        %2591 = vmatpush2.msra.mxu0 0.0
        %2592 = vmatprep.mubr.f32.mxu0 0.0
        %2593 = vmatmul.mubr.f32.gmra.mxu0 %v2481
        %v2594 = vpop.f32.mrf.mxu0
        %v2595 = vadd.f32 0.0, %v2594
        %v2596 = vpop.f32.mrf.mxu0
        %2597 = vmatprep.mubr.f32.mxu0 0.0
        %2598 = vmatmul.mubr.f32.gmra.mxu0 %v2484
        %v2599 = vpop.f32.mrf.mxu0
        %v2600 = vadd.f32 0.0, %v2599
        %v2601 = vpop.f32.mrf.mxu0
        %2602 = vmatprep.mubr.f32.mxu0 0.0
        %2603 = vmatmul.mubr.f32.gmra.mxu0 %v2487
        %v2604 = vpop.f32.mrf.mxu0
        %v2605 = vadd.f32 0.0, %v2604
        %v2606 = vpop.f32.mrf.mxu0
        %2607 = vmatprep.mubr.f32.mxu0 0.0
        %2608 = vmatmul.mubr.f32.gmra.mxu0 %v2490
        %v2609 = vpop.f32.mrf.mxu0
        %v2610 = vadd.f32 0.0, %v2609
        %v2611 = vpop.f32.mrf.mxu0
        %2612 = vmatprep.mubr.f32.mxu0 0.0
        %2613 = vmatmul.mubr.f32.gmra.mxu0 %v2493
        %v2614 = vpop.f32.mrf.mxu0
        %v2615 = vadd.f32 0.0, %v2614
        %v2616 = vpop.f32.mrf.mxu0
        %2617 = vmatprep.mubr.f32.mxu0 0.0
        %2618 = vmatmul.mubr.f32.gmra.mxu0 %v2496
        %v2619 = vpop.f32.mrf.mxu0
        %v2620 = vadd.f32 0.0, %v2619
        %v2621 = vpop.f32.mrf.mxu0
        %2622 = vmatprep.mubr.f32.mxu0 0.0
        %2623 = vmatmul.mubr.f32.gmra.mxu0 %v2499
        %v2624 = vpop.f32.mrf.mxu0
        %v2625 = vadd.f32 0.0, %v2624
        %v2626 = vpop.f32.mrf.mxu0
        %2627 = vmatprep.mubr.f32.mxu0 0.0
        %2628 = vmatmul.mubr.f32.gmra.mxu0 %v2502
        %v2629 = vpop.f32.mrf.mxu0
        %v2630 = vadd.f32 0.0, %v2629
        %v2631 = vpop.f32.mrf.mxu0
        %2632 = vmatprep.mubr.f32.mxu0 0.0
        %2633 = vmatmul.mubr.f32.gmra.mxu0 %v2505
        %v2634 = vpop.f32.mrf.mxu0
        %v2635 = vadd.f32 0.0, %v2634
        %v2636 = vpop.f32.mrf.mxu0
        %2637 = vmatprep.mubr.f32.mxu0 0.0
        %2638 = vmatmul.mubr.f32.gmra.mxu0 %v2508
        %v2639 = vpop.f32.mrf.mxu0
        %v2640 = vadd.f32 0.0, %v2639
        %v2641 = vpop.f32.mrf.mxu0
        %2642 = vmatprep.mubr.f32.mxu0 0.0
        %2643 = vmatmul.mubr.f32.gmra.mxu0 %v2511
        %v2644 = vpop.f32.mrf.mxu0
        %v2645 = vadd.f32 0.0, %v2644
        %v2646 = vpop.f32.mrf.mxu0
        %2647 = vmatprep.mubr.f32.mxu0 0.0
        %2648 = vmatmul.mubr.f32.gmra.mxu0 %v2514
        %v2649 = vpop.f32.mrf.mxu0
        %v2650 = vadd.f32 0.0, %v2649
        %v2651 = vpop.f32.mrf.mxu0
        %2652 = vmatprep.mubr.f32.mxu0 0.0
        %2653 = vmatmul.mubr.f32.gmra.mxu0 %v2517
        %v2654 = vpop.f32.mrf.mxu0
        %v2655 = vadd.f32 0.0, %v2654
        %v2656 = vpop.f32.mrf.mxu0
        %2657 = vmatprep.mubr.f32.mxu0 0.0
        %2658 = vmatmul.mubr.f32.gmra.mxu0 %v2520
        %v2659 = vpop.f32.mrf.mxu0
        %v2660 = vadd.f32 0.0, %v2659
        %v2661 = vpop.f32.mrf.mxu0
        %2662 = vmatprep.mubr.f32.mxu0 0.0
        %2663 = vmatmul.mubr.f32.gmra.mxu0 %v2523
        %v2664 = vpop.f32.mrf.mxu0
        %v2665 = vadd.f32 0.0, %v2664
        %v2666 = vpop.f32.mrf.mxu0
        %2667 = vmatprep.mubr.f32.mxu0 0.0
        %2668 = vmatmul.mubr.f32.gmra.mxu0 %v2526
        %v2669 = vpop.f32.mrf.mxu0
        %v2670 = vadd.f32 0.0, %v2669
        %v2671 = vpop.f32.mrf.mxu0
        %2672 = vdwg.mxu0
        %v2674 = vsel %vm2203, %v2333, 0
        %v2677 = vsel %vm2203, %v2334, 0
        %v2680 = vsel %vm2203, %v2335, 0
        %v2683 = vsel %vm2203, %v2336, 0
        %v2686 = vsel %vm2203, %v2337, 0
        %v2689 = vsel %vm2203, %v2338, 0
        %v2692 = vsel %vm2203, %v2339, 0
        %v2695 = vsel %vm2203, %v2340, 0
        %v2698 = vsel %vm2203, %v2341, 0
        %v2701 = vsel %vm2203, %v2342, 0
        %v2704 = vsel %vm2203, %v2343, 0
        %v2707 = vsel %vm2203, %v2344, 0
        %v2710 = vsel %vm2203, %v2345, 0
        %v2713 = vsel %vm2203, %v2346, 0
        %v2716 = vsel %vm2203, %v2347, 0
        %v2719 = vsel %vm2203, %v2348, 0
        %2721 = vmatprep.subr.mxu0 0.0
        %2722 = vmatpush1.msra.mxu0 0.0
        %2723 = vmatprep.subr.mxu0 0.0
        %2724 = vmatpush1.msra.mxu0 0.0
        %2725 = vmatprep.subr.mxu0 0.0
        %2726 = vmatpush1.msra.mxu0 0.0
        %2727 = vmatprep.subr.mxu0 0.0
        %2728 = vmatpush1.msra.mxu0 0.0
        %2729 = vmatprep.subr.mxu0 0.0
        %2730 = vmatpush1.msra.mxu0 0.0
        %2731 = vmatprep.subr.mxu0 0.0
        %2732 = vmatpush1.msra.mxu0 0.0
        %2733 = vmatprep.subr.mxu0 0.0
        %2734 = vmatpush1.msra.mxu0 0.0
        %2735 = vmatprep.subr.mxu0 0.0
        %2736 = vmatpush1.msra.mxu0 0.0
        %2737 = vmatprep.subr.mxu0 0.0
        %2738 = vmatpush1.msra.mxu0 %v2330
        %2739 = vmatprep.subr.mxu0 0.0
        %2740 = vmatpush1.msra.mxu0 %v2325
        %2741 = vmatprep.subr.mxu0 0.0
        %2742 = vmatpush1.msra.mxu0 %v2320
        %2743 = vmatprep.subr.mxu0 0.0
        %2744 = vmatpush1.msra.mxu0 %v2315
        %2745 = vmatprep.subr.mxu0 0.0
        %2746 = vmatpush1.msra.mxu0 %v2310
        %2747 = vmatprep.subr.mxu0 0.0
        %2748 = vmatpush1.msra.mxu0 %v2305
        %2749 = vmatprep.subr.mxu0 0.0
        %2750 = vmatpush1.msra.mxu0 %v2300
        %2751 = vmatprep.subr.mxu0 0.0
        %2752 = vmatpush1.msra.mxu0 %v2295
        %2753 = vmatprep.subr.mxu0 0.0
        %2754 = vmatpush2.msra.mxu0 0.0
        %2755 = vmatprep.subr.mxu0 0.0
        %2756 = vmatpush2.msra.mxu0 0.0
        %2757 = vmatprep.subr.mxu0 0.0
        %2758 = vmatpush2.msra.mxu0 0.0
        %2759 = vmatprep.subr.mxu0 0.0
        %2760 = vmatpush2.msra.mxu0 0.0
        %2761 = vmatprep.subr.mxu0 0.0
        %2762 = vmatpush2.msra.mxu0 0.0
        %2763 = vmatprep.subr.mxu0 0.0
        %2764 = vmatpush2.msra.mxu0 0.0
        %2765 = vmatprep.subr.mxu0 0.0
        %2766 = vmatpush2.msra.mxu0 0.0
        %2767 = vmatprep.subr.mxu0 0.0
        %2768 = vmatpush2.msra.mxu0 0.0
        %2769 = vmatprep.subr.mxu0 0.0
        %2770 = vmatpush2.msra.mxu0 0.0
        %2771 = vmatprep.subr.mxu0 0.0
        %2772 = vmatpush2.msra.mxu0 0.0
        %2773 = vmatprep.subr.mxu0 0.0
        %2774 = vmatpush2.msra.mxu0 0.0
        %2775 = vmatprep.subr.mxu0 0.0
        %2776 = vmatpush2.msra.mxu0 0.0
        %2777 = vmatprep.subr.mxu0 0.0
        %2778 = vmatpush2.msra.mxu0 0.0
        %2779 = vmatprep.subr.mxu0 0.0
        %2780 = vmatpush2.msra.mxu0 0.0
        %2781 = vmatprep.subr.mxu0 0.0
        %2782 = vmatpush2.msra.mxu0 0.0
        %2783 = vmatprep.subr.mxu0 0.0
        %2784 = vmatpush2.msra.mxu0 0.0
        %2785 = vmatprep.mubr.f32.mxu0 0.0
        %2786 = vmatmul.mubr.f32.gmra.mxu0 %v2674
        %v2787 = vpop.f32.mrf.mxu0
        %v2788 = vadd.f32 %v2595, %v2787
        %v2789 = vpop.f32.mrf.mxu0
        %2790 = vmatprep.mubr.f32.mxu0 0.0
        %2791 = vmatmul.mubr.f32.gmra.mxu0 %v2677
        %v2792 = vpop.f32.mrf.mxu0
        %v2793 = vadd.f32 %v2600, %v2792
        %v2794 = vpop.f32.mrf.mxu0
        %2795 = vmatprep.mubr.f32.mxu0 0.0
        %2796 = vmatmul.mubr.f32.gmra.mxu0 %v2680
        %v2797 = vpop.f32.mrf.mxu0
        %v2798 = vadd.f32 %v2605, %v2797
        %v2799 = vpop.f32.mrf.mxu0
        %2800 = vmatprep.mubr.f32.mxu0 0.0
        %2801 = vmatmul.mubr.f32.gmra.mxu0 %v2683
        %v2802 = vpop.f32.mrf.mxu0
        %v2803 = vadd.f32 %v2610, %v2802
        %v2804 = vpop.f32.mrf.mxu0
        %2805 = vmatprep.mubr.f32.mxu0 0.0
        %2806 = vmatmul.mubr.f32.gmra.mxu0 %v2686
        %v2807 = vpop.f32.mrf.mxu0
        %v2808 = vadd.f32 %v2615, %v2807
        %v2809 = vpop.f32.mrf.mxu0
        %2810 = vmatprep.mubr.f32.mxu0 0.0
        %2811 = vmatmul.mubr.f32.gmra.mxu0 %v2689
        %v2812 = vpop.f32.mrf.mxu0
        %v2813 = vadd.f32 %v2620, %v2812
        %v2814 = vpop.f32.mrf.mxu0
        %2815 = vmatprep.mubr.f32.mxu0 0.0
        %2816 = vmatmul.mubr.f32.gmra.mxu0 %v2692
        %v2817 = vpop.f32.mrf.mxu0
        %v2818 = vadd.f32 %v2625, %v2817
        %v2819 = vpop.f32.mrf.mxu0
        %2820 = vmatprep.mubr.f32.mxu0 0.0
        %2821 = vmatmul.mubr.f32.gmra.mxu0 %v2695
        %v2822 = vpop.f32.mrf.mxu0
        %v2823 = vadd.f32 %v2630, %v2822
        %v2824 = vpop.f32.mrf.mxu0
        %2825 = vmatprep.mubr.f32.mxu0 0.0
        %2826 = vmatmul.mubr.f32.gmra.mxu0 %v2698
        %v2827 = vpop.f32.mrf.mxu0
        %v2828 = vadd.f32 %v2635, %v2827
        %v2829 = vpop.f32.mrf.mxu0
        %2830 = vmatprep.mubr.f32.mxu0 0.0
        %2831 = vmatmul.mubr.f32.gmra.mxu0 %v2701
        %v2832 = vpop.f32.mrf.mxu0
        %v2833 = vadd.f32 %v2640, %v2832
        %v2834 = vpop.f32.mrf.mxu0
        %2835 = vmatprep.mubr.f32.mxu0 0.0
        %2836 = vmatmul.mubr.f32.gmra.mxu0 %v2704
        %v2837 = vpop.f32.mrf.mxu0
        %v2838 = vadd.f32 %v2645, %v2837
        %v2839 = vpop.f32.mrf.mxu0
        %2840 = vmatprep.mubr.f32.mxu0 0.0
        %2841 = vmatmul.mubr.f32.gmra.mxu0 %v2707
        %v2842 = vpop.f32.mrf.mxu0
        %v2843 = vadd.f32 %v2650, %v2842
        %v2844 = vpop.f32.mrf.mxu0
        %2845 = vmatprep.mubr.f32.mxu0 0.0
        %2846 = vmatmul.mubr.f32.gmra.mxu0 %v2710
        %v2847 = vpop.f32.mrf.mxu0
        %v2848 = vadd.f32 %v2655, %v2847
        %v2849 = vpop.f32.mrf.mxu0
        %2850 = vmatprep.mubr.f32.mxu0 0.0
        %2851 = vmatmul.mubr.f32.gmra.mxu0 %v2713
        %v2852 = vpop.f32.mrf.mxu0
        %v2853 = vadd.f32 %v2660, %v2852
        %v2854 = vpop.f32.mrf.mxu0
        %2855 = vmatprep.mubr.f32.mxu0 0.0
        %2856 = vmatmul.mubr.f32.gmra.mxu0 %v2716
        %v2857 = vpop.f32.mrf.mxu0
        %v2858 = vadd.f32 %v2665, %v2857
        %v2859 = vpop.f32.mrf.mxu0
        %2860 = vmatprep.mubr.f32.mxu0 0.0
        %2861 = vmatmul.mubr.f32.gmra.mxu0 %v2719
        %v2862 = vpop.f32.mrf.mxu0
        %v2863 = vadd.f32 %v2670, %v2862
        %v2864 = vpop.f32.mrf.mxu0
        %2865 = vdwg.mxu0
        %s2866 = scalar_lea.vmem %s9, 128
        %v2867 = vld [vmem:[%s2866] sm:$0xff]
        %v2868 = vld [vmem:[%s2866 + $0x8] sm:$0xff]
        %v2869 = vld [vmem:[%s2866 + $0x10] sm:$0xff]
        %v2870 = vld [vmem:[%s2866 + $0x18] sm:$0xff]
        %v2871 = vld [vmem:[%s2866 + $0x20] sm:$0xff]
        %v2872 = vld [vmem:[%s2866 + $0x28] sm:$0xff]
        %v2873 = vld [vmem:[%s2866 + $0x30] sm:$0xff]
        %v2874 = vld [vmem:[%s2866 + $0x38] sm:$0xff]
        %2875 = vmatprep.subr.mxu0 0.0
        %2876 = vmatpush1.msra.mxu0 0.0
        %2877 = vmatprep.subr.mxu0 0.0
        %2878 = vmatpush1.msra.mxu0 0.0
        %2879 = vmatprep.subr.mxu0 0.0
        %2880 = vmatpush1.msra.mxu0 0.0
        %2881 = vmatprep.subr.mxu0 0.0
        %2882 = vmatpush1.msra.mxu0 0.0
        %2883 = vmatprep.subr.mxu0 0.0
        %2884 = vmatpush1.msra.mxu0 0.0
        %2885 = vmatprep.subr.mxu0 0.0
        %2886 = vmatpush1.msra.mxu0 0.0
        %2887 = vmatprep.subr.mxu0 0.0
        %2888 = vmatpush1.msra.mxu0 0.0
        %2889 = vmatprep.subr.mxu0 0.0
        %2890 = vmatpush1.msra.mxu0 0.0
        %2891 = vmatprep.subr.mxu0 0.0
        %2892 = vmatpush1.msra.mxu0 %v2874
        %2893 = vmatprep.subr.mxu0 0.0
        %2894 = vmatpush1.msra.mxu0 %v2873
        %2895 = vmatprep.subr.mxu0 0.0
        %2896 = vmatpush1.msra.mxu0 %v2872
        %2897 = vmatprep.subr.mxu0 0.0
        %2898 = vmatpush1.msra.mxu0 %v2871
        %2899 = vmatprep.subr.mxu0 0.0
        %2900 = vmatpush1.msra.mxu0 %v2870
        %2901 = vmatprep.subr.mxu0 0.0
        %2902 = vmatpush1.msra.mxu0 %v2869
        %2903 = vmatprep.subr.mxu0 0.0
        %2904 = vmatpush1.msra.mxu0 %v2868
        %2905 = vmatprep.subr.mxu0 0.0
        %2906 = vmatpush1.msra.mxu0 %v2867
        %2907 = vmatprep.subr.mxu0 0.0
        %2908 = vmatpush2.msra.mxu0 0.0
        %2909 = vmatprep.subr.mxu0 0.0
        %2910 = vmatpush2.msra.mxu0 0.0
        %2911 = vmatprep.subr.mxu0 0.0
        %2912 = vmatpush2.msra.mxu0 0.0
        %2913 = vmatprep.subr.mxu0 0.0
        %2914 = vmatpush2.msra.mxu0 0.0
        %2915 = vmatprep.subr.mxu0 0.0
        %2916 = vmatpush2.msra.mxu0 0.0
        %2917 = vmatprep.subr.mxu0 0.0
        %2918 = vmatpush2.msra.mxu0 0.0
        %2919 = vmatprep.subr.mxu0 0.0
        %2920 = vmatpush2.msra.mxu0 0.0
        %2921 = vmatprep.subr.mxu0 0.0
        %2922 = vmatpush2.msra.mxu0 0.0
        %2923 = vmatprep.subr.mxu0 0.0
        %2924 = vmatpush2.msra.mxu0 0.0
        %2925 = vmatprep.subr.mxu0 0.0
        %2926 = vmatpush2.msra.mxu0 0.0
        %2927 = vmatprep.subr.mxu0 0.0
        %2928 = vmatpush2.msra.mxu0 0.0
        %2929 = vmatprep.subr.mxu0 0.0
        %2930 = vmatpush2.msra.mxu0 0.0
        %2931 = vmatprep.subr.mxu0 0.0
        %2932 = vmatpush2.msra.mxu0 0.0
        %2933 = vmatprep.subr.mxu0 0.0
        %2934 = vmatpush2.msra.mxu0 0.0
        %2935 = vmatprep.subr.mxu0 0.0
        %2936 = vmatpush2.msra.mxu0 0.0
        %2937 = vmatprep.subr.mxu0 0.0
        %2938 = vmatpush2.msra.mxu0 0.0
        %2939 = vmatprep.mubr.f32.mxu0 0.0
        %2940 = vmatmul.mubr.f32.gmra.mxu0 %v2205
        %v2941 = vpop.f32.mrf.mxu0
        %v2942 = vadd.f32 0.0, %v2941
        %v2943 = vpop.f32.mrf.mxu0
        %2944 = vmatprep.mubr.f32.mxu0 0.0
        %2945 = vmatmul.mubr.f32.gmra.mxu0 %v2208
        %v2946 = vpop.f32.mrf.mxu0
        %v2947 = vadd.f32 0.0, %v2946
        %v2948 = vpop.f32.mrf.mxu0
        %2949 = vmatprep.mubr.f32.mxu0 0.0
        %2950 = vmatmul.mubr.f32.gmra.mxu0 %v2211
        %v2951 = vpop.f32.mrf.mxu0
        %v2952 = vadd.f32 0.0, %v2951
        %v2953 = vpop.f32.mrf.mxu0
        %2954 = vmatprep.mubr.f32.mxu0 0.0
        %2955 = vmatmul.mubr.f32.gmra.mxu0 %v2214
        %v2956 = vpop.f32.mrf.mxu0
        %v2957 = vadd.f32 0.0, %v2956
        %v2958 = vpop.f32.mrf.mxu0
        %2959 = vmatprep.mubr.f32.mxu0 0.0
        %2960 = vmatmul.mubr.f32.gmra.mxu0 %v2217
        %v2961 = vpop.f32.mrf.mxu0
        %v2962 = vadd.f32 0.0, %v2961
        %v2963 = vpop.f32.mrf.mxu0
        %2964 = vmatprep.mubr.f32.mxu0 0.0
        %2965 = vmatmul.mubr.f32.gmra.mxu0 %v2220
        %v2966 = vpop.f32.mrf.mxu0
        %v2967 = vadd.f32 0.0, %v2966
        %v2968 = vpop.f32.mrf.mxu0
        %2969 = vmatprep.mubr.f32.mxu0 0.0
        %2970 = vmatmul.mubr.f32.gmra.mxu0 %v2223
        %v2971 = vpop.f32.mrf.mxu0
        %v2972 = vadd.f32 0.0, %v2971
        %v2973 = vpop.f32.mrf.mxu0
        %2974 = vmatprep.mubr.f32.mxu0 0.0
        %2975 = vmatmul.mubr.f32.gmra.mxu0 %v2226
        %v2976 = vpop.f32.mrf.mxu0
        %v2977 = vadd.f32 0.0, %v2976
        %v2978 = vpop.f32.mrf.mxu0
        %2979 = vdwg.mxu0
        %s2980 = scalar_lea.vmem %s8, 256
        %v2981 = vld [vmem:[%s2980] sm:$0xff]
        %v2982 = vld [vmem:[%s2980 + $0x8] sm:$0xff]
        %v2983 = vld [vmem:[%s2980 + $0x10] sm:$0xff]
        %v2984 = vld [vmem:[%s2980 + $0x18] sm:$0xff]
        %v2985 = vld [vmem:[%s2980 + $0x20] sm:$0xff]
        %v2986 = vld [vmem:[%s2980 + $0x28] sm:$0xff]
        %v2987 = vld [vmem:[%s2980 + $0x30] sm:$0xff]
        %v2988 = vld [vmem:[%s2980 + $0x38] sm:$0xff]
        %v2989 = vld [vmem:[%s2980 + $0x40] sm:$0xff]
        %v2990 = vld [vmem:[%s2980 + $0x48] sm:$0xff]
        %v2991 = vld [vmem:[%s2980 + $0x50] sm:$0xff]
        %v2992 = vld [vmem:[%s2980 + $0x58] sm:$0xff]
        %v2993 = vld [vmem:[%s2980 + $0x60] sm:$0xff]
        %v2994 = vld [vmem:[%s2980 + $0x68] sm:$0xff]
        %v2995 = vld [vmem:[%s2980 + $0x70] sm:$0xff]
        %v2996 = vld [vmem:[%s2980 + $0x78] sm:$0xff]
        %v2998 = vsel %vm2203, %v2981, 0
        %v3001 = vsel %vm2203, %v2982, 0
        %v3004 = vsel %vm2203, %v2983, 0
        %v3007 = vsel %vm2203, %v2984, 0
        %v3010 = vsel %vm2203, %v2985, 0
        %v3013 = vsel %vm2203, %v2986, 0
        %v3016 = vsel %vm2203, %v2987, 0
        %v3019 = vsel %vm2203, %v2988, 0
        %v3022 = vsel %vm2203, %v2989, 0
        %v3025 = vsel %vm2203, %v2990, 0
        %v3028 = vsel %vm2203, %v2991, 0
        %v3031 = vsel %vm2203, %v2992, 0
        %v3034 = vsel %vm2203, %v2993, 0
        %v3037 = vsel %vm2203, %v2994, 0
        %v3040 = vsel %vm2203, %v2995, 0
        %v3043 = vsel %vm2203, %v2996, 0
        %3045 = vmatprep.subr.mxu0 0.0
        %3046 = vmatpush1.msra.mxu0 0.0
        %3047 = vmatprep.subr.mxu0 0.0
        %3048 = vmatpush1.msra.mxu0 0.0
        %3049 = vmatprep.subr.mxu0 0.0
        %3050 = vmatpush1.msra.mxu0 0.0
        %3051 = vmatprep.subr.mxu0 0.0
        %3052 = vmatpush1.msra.mxu0 0.0
        %3053 = vmatprep.subr.mxu0 0.0
        %3054 = vmatpush1.msra.mxu0 0.0
        %3055 = vmatprep.subr.mxu0 0.0
        %3056 = vmatpush1.msra.mxu0 0.0
        %3057 = vmatprep.subr.mxu0 0.0
        %3058 = vmatpush1.msra.mxu0 0.0
        %3059 = vmatprep.subr.mxu0 0.0
        %3060 = vmatpush1.msra.mxu0 0.0
        %3061 = vmatprep.subr.mxu0 0.0
        %3062 = vmatpush1.msra.mxu0 %v2977
        %3063 = vmatprep.subr.mxu0 0.0
        %3064 = vmatpush1.msra.mxu0 %v2972
        %3065 = vmatprep.subr.mxu0 0.0
        %3066 = vmatpush1.msra.mxu0 %v2967
        %3067 = vmatprep.subr.mxu0 0.0
        %3068 = vmatpush1.msra.mxu0 %v2962
        %3069 = vmatprep.subr.mxu0 0.0
        %3070 = vmatpush1.msra.mxu0 %v2957
        %3071 = vmatprep.subr.mxu0 0.0
        %3072 = vmatpush1.msra.mxu0 %v2952
        %3073 = vmatprep.subr.mxu0 0.0
        %3074 = vmatpush1.msra.mxu0 %v2947
        %3075 = vmatprep.subr.mxu0 0.0
        %3076 = vmatpush1.msra.mxu0 %v2942
        %3077 = vmatprep.subr.mxu0 0.0
        %3078 = vmatpush2.msra.mxu0 0.0
        %3079 = vmatprep.subr.mxu0 0.0
        %3080 = vmatpush2.msra.mxu0 0.0
        %3081 = vmatprep.subr.mxu0 0.0
        %3082 = vmatpush2.msra.mxu0 0.0
        %3083 = vmatprep.subr.mxu0 0.0
        %3084 = vmatpush2.msra.mxu0 0.0
        %3085 = vmatprep.subr.mxu0 0.0
        %3086 = vmatpush2.msra.mxu0 0.0
        %3087 = vmatprep.subr.mxu0 0.0
        %3088 = vmatpush2.msra.mxu0 0.0
        %3089 = vmatprep.subr.mxu0 0.0
        %3090 = vmatpush2.msra.mxu0 0.0
        %3091 = vmatprep.subr.mxu0 0.0
        %3092 = vmatpush2.msra.mxu0 0.0
        %3093 = vmatprep.subr.mxu0 0.0
        %3094 = vmatpush2.msra.mxu0 0.0
        %3095 = vmatprep.subr.mxu0 0.0
        %3096 = vmatpush2.msra.mxu0 0.0
        %3097 = vmatprep.subr.mxu0 0.0
        %3098 = vmatpush2.msra.mxu0 0.0
        %3099 = vmatprep.subr.mxu0 0.0
        %3100 = vmatpush2.msra.mxu0 0.0
        %3101 = vmatprep.subr.mxu0 0.0
        %3102 = vmatpush2.msra.mxu0 0.0
        %3103 = vmatprep.subr.mxu0 0.0
        %3104 = vmatpush2.msra.mxu0 0.0
        %3105 = vmatprep.subr.mxu0 0.0
        %3106 = vmatpush2.msra.mxu0 0.0
        %3107 = vmatprep.subr.mxu0 0.0
        %3108 = vmatpush2.msra.mxu0 0.0
        %3109 = vmatprep.mubr.f32.mxu0 0.0
        %3110 = vmatmul.mubr.f32.gmra.mxu0 %v2998
        %v3111 = vpop.f32.mrf.mxu0
        %v3112 = vadd.f32 0.0, %v3111
        %v3113 = vpop.f32.mrf.mxu0
        %3114 = vmatprep.mubr.f32.mxu0 0.0
        %3115 = vmatmul.mubr.f32.gmra.mxu0 %v3001
        %v3116 = vpop.f32.mrf.mxu0
        %v3117 = vadd.f32 0.0, %v3116
        %v3118 = vpop.f32.mrf.mxu0
        %3119 = vmatprep.mubr.f32.mxu0 0.0
        %3120 = vmatmul.mubr.f32.gmra.mxu0 %v3004
        %v3121 = vpop.f32.mrf.mxu0
        %v3122 = vadd.f32 0.0, %v3121
        %v3123 = vpop.f32.mrf.mxu0
        %3124 = vmatprep.mubr.f32.mxu0 0.0
        %3125 = vmatmul.mubr.f32.gmra.mxu0 %v3007
        %v3126 = vpop.f32.mrf.mxu0
        %v3127 = vadd.f32 0.0, %v3126
        %v3128 = vpop.f32.mrf.mxu0
        %3129 = vmatprep.mubr.f32.mxu0 0.0
        %3130 = vmatmul.mubr.f32.gmra.mxu0 %v3010
        %v3131 = vpop.f32.mrf.mxu0
        %v3132 = vadd.f32 0.0, %v3131
        %v3133 = vpop.f32.mrf.mxu0
        %3134 = vmatprep.mubr.f32.mxu0 0.0
        %3135 = vmatmul.mubr.f32.gmra.mxu0 %v3013
        %v3136 = vpop.f32.mrf.mxu0
        %v3137 = vadd.f32 0.0, %v3136
        %v3138 = vpop.f32.mrf.mxu0
        %3139 = vmatprep.mubr.f32.mxu0 0.0
        %3140 = vmatmul.mubr.f32.gmra.mxu0 %v3016
        %v3141 = vpop.f32.mrf.mxu0
        %v3142 = vadd.f32 0.0, %v3141
        %v3143 = vpop.f32.mrf.mxu0
        %3144 = vmatprep.mubr.f32.mxu0 0.0
        %3145 = vmatmul.mubr.f32.gmra.mxu0 %v3019
        %v3146 = vpop.f32.mrf.mxu0
        %v3147 = vadd.f32 0.0, %v3146
        %v3148 = vpop.f32.mrf.mxu0
        %3149 = vmatprep.mubr.f32.mxu0 0.0
        %3150 = vmatmul.mubr.f32.gmra.mxu0 %v3022
        %v3151 = vpop.f32.mrf.mxu0
        %v3152 = vadd.f32 0.0, %v3151
        %v3153 = vpop.f32.mrf.mxu0
        %3154 = vmatprep.mubr.f32.mxu0 0.0
        %3155 = vmatmul.mubr.f32.gmra.mxu0 %v3025
        %v3156 = vpop.f32.mrf.mxu0
        %v3157 = vadd.f32 0.0, %v3156
        %v3158 = vpop.f32.mrf.mxu0
        %3159 = vmatprep.mubr.f32.mxu0 0.0
        %3160 = vmatmul.mubr.f32.gmra.mxu0 %v3028
        %v3161 = vpop.f32.mrf.mxu0
        %v3162 = vadd.f32 0.0, %v3161
        %v3163 = vpop.f32.mrf.mxu0
        %3164 = vmatprep.mubr.f32.mxu0 0.0
        %3165 = vmatmul.mubr.f32.gmra.mxu0 %v3031
        %v3166 = vpop.f32.mrf.mxu0
        %v3167 = vadd.f32 0.0, %v3166
        %v3168 = vpop.f32.mrf.mxu0
        %3169 = vmatprep.mubr.f32.mxu0 0.0
        %3170 = vmatmul.mubr.f32.gmra.mxu0 %v3034
        %v3171 = vpop.f32.mrf.mxu0
        %v3172 = vadd.f32 0.0, %v3171
        %v3173 = vpop.f32.mrf.mxu0
        %3174 = vmatprep.mubr.f32.mxu0 0.0
        %3175 = vmatmul.mubr.f32.gmra.mxu0 %v3037
        %v3176 = vpop.f32.mrf.mxu0
        %v3177 = vadd.f32 0.0, %v3176
        %v3178 = vpop.f32.mrf.mxu0
        %3179 = vmatprep.mubr.f32.mxu0 0.0
        %3180 = vmatmul.mubr.f32.gmra.mxu0 %v3040
        %v3181 = vpop.f32.mrf.mxu0
        %v3182 = vadd.f32 0.0, %v3181
        %v3183 = vpop.f32.mrf.mxu0
        %3184 = vmatprep.mubr.f32.mxu0 0.0
        %3185 = vmatmul.mubr.f32.gmra.mxu0 %v3043
        %v3186 = vpop.f32.mrf.mxu0
        %v3187 = vadd.f32 0.0, %v3186
        %v3188 = vpop.f32.mrf.mxu0
        %3189 = vdwg.mxu0
        %v3190 = vadd.f32 %v2788, %v3112
        %v3191 = vadd.f32 %v2793, %v3117
        %v3192 = vadd.f32 %v2798, %v3122
        %v3193 = vadd.f32 %v2803, %v3127
        %v3194 = vadd.f32 %v2808, %v3132
        %v3195 = vadd.f32 %v2813, %v3137
        %v3196 = vadd.f32 %v2818, %v3142
        %v3197 = vadd.f32 %v2823, %v3147
        %v3198 = vadd.f32 %v2828, %v3152
        %v3199 = vadd.f32 %v2833, %v3157
        %v3200 = vadd.f32 %v2838, %v3162
        %v3201 = vadd.f32 %v2843, %v3167
        %v3202 = vadd.f32 %v2848, %v3172
        %v3203 = vadd.f32 %v2853, %v3177
        %v3204 = vadd.f32 %v2858, %v3182
        %v3205 = vadd.f32 %v2863, %v3187
        %s3206 = scalar_lea.vmem %s9, 192
        %v3207 = vld [vmem:[%s3206] sm:$0xff]
        %v3208 = vld [vmem:[%s3206 + $0x8] sm:$0xff]
        %v3209 = vld [vmem:[%s3206 + $0x10] sm:$0xff]
        %v3210 = vld [vmem:[%s3206 + $0x18] sm:$0xff]
        %v3211 = vld [vmem:[%s3206 + $0x20] sm:$0xff]
        %v3212 = vld [vmem:[%s3206 + $0x28] sm:$0xff]
        %v3213 = vld [vmem:[%s3206 + $0x30] sm:$0xff]
        %v3214 = vld [vmem:[%s3206 + $0x38] sm:$0xff]
        %3215 = vmatprep.subr.mxu0 0.0
        %3216 = vmatpush1.msra.mxu0 0.0
        %3217 = vmatprep.subr.mxu0 0.0
        %3218 = vmatpush1.msra.mxu0 0.0
        %3219 = vmatprep.subr.mxu0 0.0
        %3220 = vmatpush1.msra.mxu0 0.0
        %3221 = vmatprep.subr.mxu0 0.0
        %3222 = vmatpush1.msra.mxu0 0.0
        %3223 = vmatprep.subr.mxu0 0.0
        %3224 = vmatpush1.msra.mxu0 0.0
        %3225 = vmatprep.subr.mxu0 0.0
        %3226 = vmatpush1.msra.mxu0 0.0
        %3227 = vmatprep.subr.mxu0 0.0
        %3228 = vmatpush1.msra.mxu0 0.0
        %3229 = vmatprep.subr.mxu0 0.0
        %3230 = vmatpush1.msra.mxu0 0.0
        %3231 = vmatprep.subr.mxu0 0.0
        %3232 = vmatpush1.msra.mxu0 %v3214
        %3233 = vmatprep.subr.mxu0 0.0
        %3234 = vmatpush1.msra.mxu0 %v3213
        %3235 = vmatprep.subr.mxu0 0.0
        %3236 = vmatpush1.msra.mxu0 %v3212
        %3237 = vmatprep.subr.mxu0 0.0
        %3238 = vmatpush1.msra.mxu0 %v3211
        %3239 = vmatprep.subr.mxu0 0.0
        %3240 = vmatpush1.msra.mxu0 %v3210
        %3241 = vmatprep.subr.mxu0 0.0
        %3242 = vmatpush1.msra.mxu0 %v3209
        %3243 = vmatprep.subr.mxu0 0.0
        %3244 = vmatpush1.msra.mxu0 %v3208
        %3245 = vmatprep.subr.mxu0 0.0
        %3246 = vmatpush1.msra.mxu0 %v3207
        %3247 = vmatprep.subr.mxu0 0.0
        %3248 = vmatpush2.msra.mxu0 0.0
        %3249 = vmatprep.subr.mxu0 0.0
        %3250 = vmatpush2.msra.mxu0 0.0
        %3251 = vmatprep.subr.mxu0 0.0
        %3252 = vmatpush2.msra.mxu0 0.0
        %3253 = vmatprep.subr.mxu0 0.0
        %3254 = vmatpush2.msra.mxu0 0.0
        %3255 = vmatprep.subr.mxu0 0.0
        %3256 = vmatpush2.msra.mxu0 0.0
        %3257 = vmatprep.subr.mxu0 0.0
        %3258 = vmatpush2.msra.mxu0 0.0
        %3259 = vmatprep.subr.mxu0 0.0
        %3260 = vmatpush2.msra.mxu0 0.0
        %3261 = vmatprep.subr.mxu0 0.0
        %3262 = vmatpush2.msra.mxu0 0.0
        %3263 = vmatprep.subr.mxu0 0.0
        %3264 = vmatpush2.msra.mxu0 0.0
        %3265 = vmatprep.subr.mxu0 0.0
        %3266 = vmatpush2.msra.mxu0 0.0
        %3267 = vmatprep.subr.mxu0 0.0
        %3268 = vmatpush2.msra.mxu0 0.0
        %3269 = vmatprep.subr.mxu0 0.0
        %3270 = vmatpush2.msra.mxu0 0.0
        %3271 = vmatprep.subr.mxu0 0.0
        %3272 = vmatpush2.msra.mxu0 0.0
        %3273 = vmatprep.subr.mxu0 0.0
        %3274 = vmatpush2.msra.mxu0 0.0
        %3275 = vmatprep.subr.mxu0 0.0
        %3276 = vmatpush2.msra.mxu0 0.0
        %3277 = vmatprep.subr.mxu0 0.0
        %3278 = vmatpush2.msra.mxu0 0.0
        %3279 = vmatprep.mubr.f32.mxu0 0.0
        %3280 = vmatmul.mubr.f32.gmra.mxu0 %v2205
        %v3281 = vpop.f32.mrf.mxu0
        %v3282 = vadd.f32 0.0, %v3281
        %v3283 = vpop.f32.mrf.mxu0
        %3284 = vmatprep.mubr.f32.mxu0 0.0
        %3285 = vmatmul.mubr.f32.gmra.mxu0 %v2208
        %v3286 = vpop.f32.mrf.mxu0
        %v3287 = vadd.f32 0.0, %v3286
        %v3288 = vpop.f32.mrf.mxu0
        %3289 = vmatprep.mubr.f32.mxu0 0.0
        %3290 = vmatmul.mubr.f32.gmra.mxu0 %v2211
        %v3291 = vpop.f32.mrf.mxu0
        %v3292 = vadd.f32 0.0, %v3291
        %v3293 = vpop.f32.mrf.mxu0
        %3294 = vmatprep.mubr.f32.mxu0 0.0
        %3295 = vmatmul.mubr.f32.gmra.mxu0 %v2214
        %v3296 = vpop.f32.mrf.mxu0
        %v3297 = vadd.f32 0.0, %v3296
        %v3298 = vpop.f32.mrf.mxu0
        %3299 = vmatprep.mubr.f32.mxu0 0.0
        %3300 = vmatmul.mubr.f32.gmra.mxu0 %v2217
        %v3301 = vpop.f32.mrf.mxu0
        %v3302 = vadd.f32 0.0, %v3301
        %v3303 = vpop.f32.mrf.mxu0
        %3304 = vmatprep.mubr.f32.mxu0 0.0
        %3305 = vmatmul.mubr.f32.gmra.mxu0 %v2220
        %v3306 = vpop.f32.mrf.mxu0
        %v3307 = vadd.f32 0.0, %v3306
        %v3308 = vpop.f32.mrf.mxu0
        %3309 = vmatprep.mubr.f32.mxu0 0.0
        %3310 = vmatmul.mubr.f32.gmra.mxu0 %v2223
        %v3311 = vpop.f32.mrf.mxu0
        %v3312 = vadd.f32 0.0, %v3311
        %v3313 = vpop.f32.mrf.mxu0
        %3314 = vmatprep.mubr.f32.mxu0 0.0
        %3315 = vmatmul.mubr.f32.gmra.mxu0 %v2226
        %v3316 = vpop.f32.mrf.mxu0
        %v3317 = vadd.f32 0.0, %v3316
        %v3318 = vpop.f32.mrf.mxu0
        %3319 = vdwg.mxu0
        %s3320 = scalar_lea.vmem %s8, 384
        %v3321 = vld [vmem:[%s3320] sm:$0xff]
        %v3322 = vld [vmem:[%s3320 + $0x8] sm:$0xff]
        %v3323 = vld [vmem:[%s3320 + $0x10] sm:$0xff]
        %v3324 = vld [vmem:[%s3320 + $0x18] sm:$0xff]
        %v3325 = vld [vmem:[%s3320 + $0x20] sm:$0xff]
        %v3326 = vld [vmem:[%s3320 + $0x28] sm:$0xff]
        %v3327 = vld [vmem:[%s3320 + $0x30] sm:$0xff]
        %v3328 = vld [vmem:[%s3320 + $0x38] sm:$0xff]
        %v3329 = vld [vmem:[%s3320 + $0x40] sm:$0xff]
        %v3330 = vld [vmem:[%s3320 + $0x48] sm:$0xff]
        %v3331 = vld [vmem:[%s3320 + $0x50] sm:$0xff]
        %v3332 = vld [vmem:[%s3320 + $0x58] sm:$0xff]
        %v3333 = vld [vmem:[%s3320 + $0x60] sm:$0xff]
        %v3334 = vld [vmem:[%s3320 + $0x68] sm:$0xff]
        %v3335 = vld [vmem:[%s3320 + $0x70] sm:$0xff]
        %v3336 = vld [vmem:[%s3320 + $0x78] sm:$0xff]
        %v3338 = vsel %vm2203, %v3321, 0
        %v3341 = vsel %vm2203, %v3322, 0
        %v3344 = vsel %vm2203, %v3323, 0
        %v3347 = vsel %vm2203, %v3324, 0
        %v3350 = vsel %vm2203, %v3325, 0
        %v3353 = vsel %vm2203, %v3326, 0
        %v3356 = vsel %vm2203, %v3327, 0
        %v3359 = vsel %vm2203, %v3328, 0
        %v3362 = vsel %vm2203, %v3329, 0
        %v3365 = vsel %vm2203, %v3330, 0
        %v3368 = vsel %vm2203, %v3331, 0
        %v3371 = vsel %vm2203, %v3332, 0
        %v3374 = vsel %vm2203, %v3333, 0
        %v3377 = vsel %vm2203, %v3334, 0
        %v3380 = vsel %vm2203, %v3335, 0
        %v3383 = vsel %vm2203, %v3336, 0
        %3385 = vmatprep.subr.mxu0 0.0
        %3386 = vmatpush1.msra.mxu0 0.0
        %3387 = vmatprep.subr.mxu0 0.0
        %3388 = vmatpush1.msra.mxu0 0.0
        %3389 = vmatprep.subr.mxu0 0.0
        %3390 = vmatpush1.msra.mxu0 0.0
        %3391 = vmatprep.subr.mxu0 0.0
        %3392 = vmatpush1.msra.mxu0 0.0
        %3393 = vmatprep.subr.mxu0 0.0
        %3394 = vmatpush1.msra.mxu0 0.0
        %3395 = vmatprep.subr.mxu0 0.0
        %3396 = vmatpush1.msra.mxu0 0.0
        %3397 = vmatprep.subr.mxu0 0.0
        %3398 = vmatpush1.msra.mxu0 0.0
        %3399 = vmatprep.subr.mxu0 0.0
        %3400 = vmatpush1.msra.mxu0 0.0
        %3401 = vmatprep.subr.mxu0 0.0
        %3402 = vmatpush1.msra.mxu0 %v3317
        %3403 = vmatprep.subr.mxu0 0.0
        %3404 = vmatpush1.msra.mxu0 %v3312
        %3405 = vmatprep.subr.mxu0 0.0
        %3406 = vmatpush1.msra.mxu0 %v3307
        %3407 = vmatprep.subr.mxu0 0.0
        %3408 = vmatpush1.msra.mxu0 %v3302
        %3409 = vmatprep.subr.mxu0 0.0
        %3410 = vmatpush1.msra.mxu0 %v3297
        %3411 = vmatprep.subr.mxu0 0.0
        %3412 = vmatpush1.msra.mxu0 %v3292
        %3413 = vmatprep.subr.mxu0 0.0
        %3414 = vmatpush1.msra.mxu0 %v3287
        %3415 = vmatprep.subr.mxu0 0.0
        %3416 = vmatpush1.msra.mxu0 %v3282
        %3417 = vmatprep.subr.mxu0 0.0
        %3418 = vmatpush2.msra.mxu0 0.0
        %3419 = vmatprep.subr.mxu0 0.0
        %3420 = vmatpush2.msra.mxu0 0.0
        %3421 = vmatprep.subr.mxu0 0.0
        %3422 = vmatpush2.msra.mxu0 0.0
        %3423 = vmatprep.subr.mxu0 0.0
        %3424 = vmatpush2.msra.mxu0 0.0
        %3425 = vmatprep.subr.mxu0 0.0
        %3426 = vmatpush2.msra.mxu0 0.0
        %3427 = vmatprep.subr.mxu0 0.0
        %3428 = vmatpush2.msra.mxu0 0.0
        %3429 = vmatprep.subr.mxu0 0.0
        %3430 = vmatpush2.msra.mxu0 0.0
        %3431 = vmatprep.subr.mxu0 0.0
        %3432 = vmatpush2.msra.mxu0 0.0
        %3433 = vmatprep.subr.mxu0 0.0
        %3434 = vmatpush2.msra.mxu0 0.0
        %3435 = vmatprep.subr.mxu0 0.0
        %3436 = vmatpush2.msra.mxu0 0.0
        %3437 = vmatprep.subr.mxu0 0.0
        %3438 = vmatpush2.msra.mxu0 0.0
        %3439 = vmatprep.subr.mxu0 0.0
        %3440 = vmatpush2.msra.mxu0 0.0
        %3441 = vmatprep.subr.mxu0 0.0
        %3442 = vmatpush2.msra.mxu0 0.0
        %3443 = vmatprep.subr.mxu0 0.0
        %3444 = vmatpush2.msra.mxu0 0.0
        %3445 = vmatprep.subr.mxu0 0.0
        %3446 = vmatpush2.msra.mxu0 0.0
        %3447 = vmatprep.subr.mxu0 0.0
        %3448 = vmatpush2.msra.mxu0 0.0
        %3449 = vmatprep.mubr.f32.mxu0 0.0
        %3450 = vmatmul.mubr.f32.gmra.mxu0 %v3338
        %v3451 = vpop.f32.mrf.mxu0
        %v3452 = vadd.f32 0.0, %v3451
        %v3453 = vpop.f32.mrf.mxu0
        %3454 = vmatprep.mubr.f32.mxu0 0.0
        %3455 = vmatmul.mubr.f32.gmra.mxu0 %v3341
        %v3456 = vpop.f32.mrf.mxu0
        %v3457 = vadd.f32 0.0, %v3456
        %v3458 = vpop.f32.mrf.mxu0
        %3459 = vmatprep.mubr.f32.mxu0 0.0
        %3460 = vmatmul.mubr.f32.gmra.mxu0 %v3344
        %v3461 = vpop.f32.mrf.mxu0
        %v3462 = vadd.f32 0.0, %v3461
        %v3463 = vpop.f32.mrf.mxu0
        %3464 = vmatprep.mubr.f32.mxu0 0.0
        %3465 = vmatmul.mubr.f32.gmra.mxu0 %v3347
        %v3466 = vpop.f32.mrf.mxu0
        %v3467 = vadd.f32 0.0, %v3466
        %v3468 = vpop.f32.mrf.mxu0
        %3469 = vmatprep.mubr.f32.mxu0 0.0
        %3470 = vmatmul.mubr.f32.gmra.mxu0 %v3350
        %v3471 = vpop.f32.mrf.mxu0
        %v3472 = vadd.f32 0.0, %v3471
        %v3473 = vpop.f32.mrf.mxu0
        %3474 = vmatprep.mubr.f32.mxu0 0.0
        %3475 = vmatmul.mubr.f32.gmra.mxu0 %v3353
        %v3476 = vpop.f32.mrf.mxu0
        %v3477 = vadd.f32 0.0, %v3476
        %v3478 = vpop.f32.mrf.mxu0
        %3479 = vmatprep.mubr.f32.mxu0 0.0
        %3480 = vmatmul.mubr.f32.gmra.mxu0 %v3356
        %v3481 = vpop.f32.mrf.mxu0
        %v3482 = vadd.f32 0.0, %v3481
        %v3483 = vpop.f32.mrf.mxu0
        %3484 = vmatprep.mubr.f32.mxu0 0.0
        %3485 = vmatmul.mubr.f32.gmra.mxu0 %v3359
        %v3486 = vpop.f32.mrf.mxu0
        %v3487 = vadd.f32 0.0, %v3486
        %v3488 = vpop.f32.mrf.mxu0
        %3489 = vmatprep.mubr.f32.mxu0 0.0
        %3490 = vmatmul.mubr.f32.gmra.mxu0 %v3362
        %v3491 = vpop.f32.mrf.mxu0
        %v3492 = vadd.f32 0.0, %v3491
        %v3493 = vpop.f32.mrf.mxu0
        %3494 = vmatprep.mubr.f32.mxu0 0.0
        %3495 = vmatmul.mubr.f32.gmra.mxu0 %v3365
        %v3496 = vpop.f32.mrf.mxu0
        %v3497 = vadd.f32 0.0, %v3496
        %v3498 = vpop.f32.mrf.mxu0
        %3499 = vmatprep.mubr.f32.mxu0 0.0
        %3500 = vmatmul.mubr.f32.gmra.mxu0 %v3368
        %v3501 = vpop.f32.mrf.mxu0
        %v3502 = vadd.f32 0.0, %v3501
        %v3503 = vpop.f32.mrf.mxu0
        %3504 = vmatprep.mubr.f32.mxu0 0.0
        %3505 = vmatmul.mubr.f32.gmra.mxu0 %v3371
        %v3506 = vpop.f32.mrf.mxu0
        %v3507 = vadd.f32 0.0, %v3506
        %v3508 = vpop.f32.mrf.mxu0
        %3509 = vmatprep.mubr.f32.mxu0 0.0
        %3510 = vmatmul.mubr.f32.gmra.mxu0 %v3374
        %v3511 = vpop.f32.mrf.mxu0
        %v3512 = vadd.f32 0.0, %v3511
        %v3513 = vpop.f32.mrf.mxu0
        %3514 = vmatprep.mubr.f32.mxu0 0.0
        %3515 = vmatmul.mubr.f32.gmra.mxu0 %v3377
        %v3516 = vpop.f32.mrf.mxu0
        %v3517 = vadd.f32 0.0, %v3516
        %v3518 = vpop.f32.mrf.mxu0
        %3519 = vmatprep.mubr.f32.mxu0 0.0
        %3520 = vmatmul.mubr.f32.gmra.mxu0 %v3380
        %v3521 = vpop.f32.mrf.mxu0
        %v3522 = vadd.f32 0.0, %v3521
        %v3523 = vpop.f32.mrf.mxu0
        %3524 = vmatprep.mubr.f32.mxu0 0.0
        %3525 = vmatmul.mubr.f32.gmra.mxu0 %v3383
        %v3526 = vpop.f32.mrf.mxu0
        %v3527 = vadd.f32 0.0, %v3526
        %v3528 = vpop.f32.mrf.mxu0
        %3529 = vdwg.mxu0
        %v3530 = vadd.f32 %v3190, %v3452
        %v3531 = vadd.f32 %v3191, %v3457
        %v3532 = vadd.f32 %v3192, %v3462
        %v3533 = vadd.f32 %v3193, %v3467
        %v3534 = vadd.f32 %v3194, %v3472
        %v3535 = vadd.f32 %v3195, %v3477
        %v3536 = vadd.f32 %v3196, %v3482
        %v3537 = vadd.f32 %v3197, %v3487
        %v3538 = vadd.f32 %v3198, %v3492
        %v3539 = vadd.f32 %v3199, %v3497
        %v3540 = vadd.f32 %v3200, %v3502
        %v3541 = vadd.f32 %v3201, %v3507
        %v3542 = vadd.f32 %v3202, %v3512
        %v3543 = vadd.f32 %v3203, %v3517
        %v3544 = vadd.f32 %v3204, %v3522
        %v3545 = vadd.f32 %v3205, %v3527
        %v3546 = vstv %s2194
        %v3547 = vadd.f32 %v3530, %v3546
        %v3548 = vadd.f32 %v3531, %v3546
        %v3549 = vadd.f32 %v3532, %v3546
        %v3550 = vadd.f32 %v3533, %v3546
        %v3551 = vadd.f32 %v3534, %v3546
        %v3552 = vadd.f32 %v3535, %v3546
        %v3553 = vadd.f32 %v3536, %v3546
        %v3554 = vadd.f32 %v3537, %v3546
        %v3555 = vadd.f32 %v3538, %v3546
        %v3556 = vadd.f32 %v3539, %v3546
        %v3557 = vadd.f32 %v3540, %v3546
        %v3558 = vadd.f32 %v3541, %v3546
        %v3559 = vadd.f32 %v3542, %v3546
        %v3560 = vadd.f32 %v3543, %v3546
        %v3561 = vadd.f32 %v3544, %v3546
        %v3562 = vadd.f32 %v3545, %v3546
        %v3563 = vmax.f32 %v3547, 0.0
        %v3564 = vmax.f32 %v3548, 0.0
        %v3565 = vmax.f32 %v3549, 0.0
        %v3566 = vmax.f32 %v3550, 0.0
        %v3567 = vmax.f32 %v3551, 0.0
        %v3568 = vmax.f32 %v3552, 0.0
        %v3569 = vmax.f32 %v3553, 0.0
        %v3570 = vmax.f32 %v3554, 0.0
        %v3571 = vmax.f32 %v3555, 0.0
        %v3572 = vmax.f32 %v3556, 0.0
        %v3573 = vmax.f32 %v3557, 0.0
        %v3574 = vmax.f32 %v3558, 0.0
        %v3575 = vmax.f32 %v3559, 0.0
        %v3576 = vmax.f32 %v3560, 0.0
        %v3577 = vmax.f32 %v3561, 0.0
        %v3578 = vmax.f32 %v3562, 0.0
        %s3579 = sld [smem:[#allocation4 + $0x3]]
        %v3580 = vld [vmem:[%s11] sm:$0xff]
        %v3581 = vld [vmem:[%s11 + $0x8] sm:$0xff]
        %v3582 = vld [vmem:[%s11 + $0x10] sm:$0xff]
        %v3583 = vld [vmem:[%s11 + $0x18] sm:$0xff]
        %v3584 = vld [vmem:[%s11 + $0x20] sm:$0xff]
        %v3585 = vld [vmem:[%s11 + $0x28] sm:$0xff]
        %v3586 = vld [vmem:[%s11 + $0x30] sm:$0xff]
        %v3587 = vld [vmem:[%s11 + $0x38] sm:$0xff]
        %v3588 = vld [vmem:[%s11 + $0x40] sm:$0xff]
        %v3589 = vld [vmem:[%s11 + $0x48] sm:$0xff]
        %v3590 = vld [vmem:[%s11 + $0x50] sm:$0xff]
        %v3591 = vld [vmem:[%s11 + $0x58] sm:$0xff]
        %v3592 = vld [vmem:[%s11 + $0x60] sm:$0xff]
        %v3593 = vld [vmem:[%s11 + $0x68] sm:$0xff]
        %v3594 = vld [vmem:[%s11 + $0x70] sm:$0xff]
        %v3595 = vld [vmem:[%s11 + $0x78] sm:$0xff]
        %v3596 = vld [vmem:[%s11 + $0x80] sm:$0xff]
        %v3597 = vld [vmem:[%s11 + $0x88] sm:$0xff]
        %v3598 = vld [vmem:[%s11 + $0x90] sm:$0xff]
        %v3599 = vld [vmem:[%s11 + $0x98] sm:$0xff]
        %v3600 = vld [vmem:[%s11 + $0xa0] sm:$0xff]
        %v3601 = vld [vmem:[%s11 + $0xa8] sm:$0xff]
        %v3602 = vld [vmem:[%s11 + $0xb0] sm:$0xff]
        %v3603 = vld [vmem:[%s11 + $0xb8] sm:$0xff]
        %v3604 = vld [vmem:[%s11 + $0xc0] sm:$0xff]
        %v3605 = vld [vmem:[%s11 + $0xc8] sm:$0xff]
        %v3606 = vld [vmem:[%s11 + $0xd0] sm:$0xff]
        %v3607 = vld [vmem:[%s11 + $0xd8] sm:$0xff]
        %v3608 = vld [vmem:[%s11 + $0xe0] sm:$0xff]
        %v3609 = vld [vmem:[%s11 + $0xe8] sm:$0xff]
        %v3610 = vld [vmem:[%s11 + $0xf0] sm:$0xff]
        %v3611 = vld [vmem:[%s11 + $0xf8] sm:$0xff]
        %3612 = vmatprep.subr.mxu0 %v3611
        %3613 = vmatpush1.msra.mxu0 %v3610
        %3614 = vmatprep.subr.mxu0 %v3609
        %3615 = vmatpush1.msra.mxu0 %v3608
        %3616 = vmatprep.subr.mxu0 %v3607
        %3617 = vmatpush1.msra.mxu0 %v3606
        %3618 = vmatprep.subr.mxu0 %v3605
        %3619 = vmatpush1.msra.mxu0 %v3604
        %3620 = vmatprep.subr.mxu0 %v3603
        %3621 = vmatpush1.msra.mxu0 %v3602
        %3622 = vmatprep.subr.mxu0 %v3601
        %3623 = vmatpush1.msra.mxu0 %v3600
        %3624 = vmatprep.subr.mxu0 %v3599
        %3625 = vmatpush1.msra.mxu0 %v3598
        %3626 = vmatprep.subr.mxu0 %v3597
        %3627 = vmatpush1.msra.mxu0 %v3596
        %3628 = vmatprep.subr.mxu0 %v3595
        %3629 = vmatpush1.msra.mxu0 %v3594
        %3630 = vmatprep.subr.mxu0 %v3593
        %3631 = vmatpush1.msra.mxu0 %v3592
        %3632 = vmatprep.subr.mxu0 %v3591
        %3633 = vmatpush1.msra.mxu0 %v3590
        %3634 = vmatprep.subr.mxu0 %v3589
        %3635 = vmatpush1.msra.mxu0 %v3588
        %3636 = vmatprep.subr.mxu0 %v3587
        %3637 = vmatpush1.msra.mxu0 %v3586
        %3638 = vmatprep.subr.mxu0 %v3585
        %3639 = vmatpush1.msra.mxu0 %v3584
        %3640 = vmatprep.subr.mxu0 %v3583
        %3641 = vmatpush1.msra.mxu0 %v3582
        %3642 = vmatprep.subr.mxu0 %v3581
        %3643 = vmatpush1.msra.mxu0 %v3580
        %3644 = vmatprep.subr.mxu0 0.0
        %3645 = vmatpush2.msra.mxu0 0.0
        %3646 = vmatprep.subr.mxu0 0.0
        %3647 = vmatpush2.msra.mxu0 0.0
        %3648 = vmatprep.subr.mxu0 0.0
        %3649 = vmatpush2.msra.mxu0 0.0
        %3650 = vmatprep.subr.mxu0 0.0
        %3651 = vmatpush2.msra.mxu0 0.0
        %3652 = vmatprep.subr.mxu0 0.0
        %3653 = vmatpush2.msra.mxu0 0.0
        %3654 = vmatprep.subr.mxu0 0.0
        %3655 = vmatpush2.msra.mxu0 0.0
        %3656 = vmatprep.subr.mxu0 0.0
        %3657 = vmatpush2.msra.mxu0 0.0
        %3658 = vmatprep.subr.mxu0 0.0
        %3659 = vmatpush2.msra.mxu0 0.0
        %3660 = vmatprep.subr.mxu0 0.0
        %3661 = vmatpush2.msra.mxu0 0.0
        %3662 = vmatprep.subr.mxu0 0.0
        %3663 = vmatpush2.msra.mxu0 0.0
        %3664 = vmatprep.subr.mxu0 0.0
        %3665 = vmatpush2.msra.mxu0 0.0
        %3666 = vmatprep.subr.mxu0 0.0
        %3667 = vmatpush2.msra.mxu0 0.0
        %3668 = vmatprep.subr.mxu0 0.0
        %3669 = vmatpush2.msra.mxu0 0.0
        %3670 = vmatprep.subr.mxu0 0.0
        %3671 = vmatpush2.msra.mxu0 0.0
        %3672 = vmatprep.subr.mxu0 0.0
        %3673 = vmatpush2.msra.mxu0 0.0
        %3674 = vmatprep.subr.mxu0 0.0
        %3675 = vmatpush2.msra.mxu0 0.0
        %3676 = vmatprep.mubr.f32.mxu0 0.0
        %3677 = vmatmul.mubr.f32.gmra.mxu0 %v3563
        %v3678 = vpop.f32.mrf.mxu0
        %v3679 = vadd.f32 0.0, %v3678
        %v3680 = vpop.f32.mrf.mxu0
        %v3681 = vadd.f32 0.0, %v3680
        %3682 = vmatprep.mubr.f32.mxu0 0.0
        %3683 = vmatmul.mubr.f32.gmra.mxu0 %v3564
        %v3684 = vpop.f32.mrf.mxu0
        %v3685 = vadd.f32 0.0, %v3684
        %v3686 = vpop.f32.mrf.mxu0
        %v3687 = vadd.f32 0.0, %v3686
        %3688 = vmatprep.mubr.f32.mxu0 0.0
        %3689 = vmatmul.mubr.f32.gmra.mxu0 %v3565
        %v3690 = vpop.f32.mrf.mxu0
        %v3691 = vadd.f32 0.0, %v3690
        %v3692 = vpop.f32.mrf.mxu0
        %v3693 = vadd.f32 0.0, %v3692
        %3694 = vmatprep.mubr.f32.mxu0 0.0
        %3695 = vmatmul.mubr.f32.gmra.mxu0 %v3566
        %v3696 = vpop.f32.mrf.mxu0
        %v3697 = vadd.f32 0.0, %v3696
        %v3698 = vpop.f32.mrf.mxu0
        %v3699 = vadd.f32 0.0, %v3698
        %3700 = vmatprep.mubr.f32.mxu0 0.0
        %3701 = vmatmul.mubr.f32.gmra.mxu0 %v3567
        %v3702 = vpop.f32.mrf.mxu0
        %v3703 = vadd.f32 0.0, %v3702
        %v3704 = vpop.f32.mrf.mxu0
        %v3705 = vadd.f32 0.0, %v3704
        %3706 = vmatprep.mubr.f32.mxu0 0.0
        %3707 = vmatmul.mubr.f32.gmra.mxu0 %v3568
        %v3708 = vpop.f32.mrf.mxu0
        %v3709 = vadd.f32 0.0, %v3708
        %v3710 = vpop.f32.mrf.mxu0
        %v3711 = vadd.f32 0.0, %v3710
        %3712 = vmatprep.mubr.f32.mxu0 0.0
        %3713 = vmatmul.mubr.f32.gmra.mxu0 %v3569
        %v3714 = vpop.f32.mrf.mxu0
        %v3715 = vadd.f32 0.0, %v3714
        %v3716 = vpop.f32.mrf.mxu0
        %v3717 = vadd.f32 0.0, %v3716
        %3718 = vmatprep.mubr.f32.mxu0 0.0
        %3719 = vmatmul.mubr.f32.gmra.mxu0 %v3570
        %v3720 = vpop.f32.mrf.mxu0
        %v3721 = vadd.f32 0.0, %v3720
        %v3722 = vpop.f32.mrf.mxu0
        %v3723 = vadd.f32 0.0, %v3722
        %3724 = vmatprep.mubr.f32.mxu0 0.0
        %3725 = vmatmul.mubr.f32.gmra.mxu0 %v3571
        %v3726 = vpop.f32.mrf.mxu0
        %v3727 = vadd.f32 0.0, %v3726
        %v3728 = vpop.f32.mrf.mxu0
        %v3729 = vadd.f32 0.0, %v3728
        %3730 = vmatprep.mubr.f32.mxu0 0.0
        %3731 = vmatmul.mubr.f32.gmra.mxu0 %v3572
        %v3732 = vpop.f32.mrf.mxu0
        %v3733 = vadd.f32 0.0, %v3732
        %v3734 = vpop.f32.mrf.mxu0
        %v3735 = vadd.f32 0.0, %v3734
        %3736 = vmatprep.mubr.f32.mxu0 0.0
        %3737 = vmatmul.mubr.f32.gmra.mxu0 %v3573
        %v3738 = vpop.f32.mrf.mxu0
        %v3739 = vadd.f32 0.0, %v3738
        %v3740 = vpop.f32.mrf.mxu0
        %v3741 = vadd.f32 0.0, %v3740
        %3742 = vmatprep.mubr.f32.mxu0 0.0
        %3743 = vmatmul.mubr.f32.gmra.mxu0 %v3574
        %v3744 = vpop.f32.mrf.mxu0
        %v3745 = vadd.f32 0.0, %v3744
        %v3746 = vpop.f32.mrf.mxu0
        %v3747 = vadd.f32 0.0, %v3746
        %3748 = vmatprep.mubr.f32.mxu0 0.0
        %3749 = vmatmul.mubr.f32.gmra.mxu0 %v3575
        %v3750 = vpop.f32.mrf.mxu0
        %v3751 = vadd.f32 0.0, %v3750
        %v3752 = vpop.f32.mrf.mxu0
        %v3753 = vadd.f32 0.0, %v3752
        %3754 = vmatprep.mubr.f32.mxu0 0.0
        %3755 = vmatmul.mubr.f32.gmra.mxu0 %v3576
        %v3756 = vpop.f32.mrf.mxu0
        %v3757 = vadd.f32 0.0, %v3756
        %v3758 = vpop.f32.mrf.mxu0
        %v3759 = vadd.f32 0.0, %v3758
        %3760 = vmatprep.mubr.f32.mxu0 0.0
        %3761 = vmatmul.mubr.f32.gmra.mxu0 %v3577
        %v3762 = vpop.f32.mrf.mxu0
        %v3763 = vadd.f32 0.0, %v3762
        %v3764 = vpop.f32.mrf.mxu0
        %v3765 = vadd.f32 0.0, %v3764
        %3766 = vmatprep.mubr.f32.mxu0 0.0
        %3767 = vmatmul.mubr.f32.gmra.mxu0 %v3578
        %v3768 = vpop.f32.mrf.mxu0
        %v3769 = vadd.f32 0.0, %v3768
        %v3770 = vpop.f32.mrf.mxu0
        %v3771 = vadd.f32 0.0, %v3770
        %3772 = vdwg.mxu0
        %v3773 = vld [vmem:[%s10] sm:$0xff]
        %v3774 = vld [vmem:[%s10 + $0x8] sm:$0xff]
        %v3775 = vld [vmem:[%s10 + $0x10] sm:$0xff]
        %v3776 = vld [vmem:[%s10 + $0x18] sm:$0xff]
        %v3777 = vld [vmem:[%s10 + $0x20] sm:$0xff]
        %v3778 = vld [vmem:[%s10 + $0x28] sm:$0xff]
        %v3779 = vld [vmem:[%s10 + $0x30] sm:$0xff]
        %v3780 = vld [vmem:[%s10 + $0x38] sm:$0xff]
        %v3781 = vld [vmem:[%s10 + $0x40] sm:$0xff]
        %v3782 = vld [vmem:[%s10 + $0x48] sm:$0xff]
        %v3783 = vld [vmem:[%s10 + $0x50] sm:$0xff]
        %v3784 = vld [vmem:[%s10 + $0x58] sm:$0xff]
        %v3785 = vld [vmem:[%s10 + $0x60] sm:$0xff]
        %v3786 = vld [vmem:[%s10 + $0x68] sm:$0xff]
        %v3787 = vld [vmem:[%s10 + $0x70] sm:$0xff]
        %v3788 = vld [vmem:[%s10 + $0x78] sm:$0xff]
        %v3789 = vld [vmem:[%s10 + $0x80] sm:$0xff]
        %v3790 = vld [vmem:[%s10 + $0x88] sm:$0xff]
        %v3791 = vld [vmem:[%s10 + $0x90] sm:$0xff]
        %v3792 = vld [vmem:[%s10 + $0x98] sm:$0xff]
        %v3793 = vld [vmem:[%s10 + $0xa0] sm:$0xff]
        %v3794 = vld [vmem:[%s10 + $0xa8] sm:$0xff]
        %v3795 = vld [vmem:[%s10 + $0xb0] sm:$0xff]
        %v3796 = vld [vmem:[%s10 + $0xb8] sm:$0xff]
        %v3797 = vld [vmem:[%s10 + $0xc0] sm:$0xff]
        %v3798 = vld [vmem:[%s10 + $0xc8] sm:$0xff]
        %v3799 = vld [vmem:[%s10 + $0xd0] sm:$0xff]
        %v3800 = vld [vmem:[%s10 + $0xd8] sm:$0xff]
        %v3801 = vld [vmem:[%s10 + $0xe0] sm:$0xff]
        %v3802 = vld [vmem:[%s10 + $0xe8] sm:$0xff]
        %v3803 = vld [vmem:[%s10 + $0xf0] sm:$0xff]
        %v3804 = vld [vmem:[%s10 + $0xf8] sm:$0xff]
        %s3805 = scalar_lea.vmem %s11, 256
        %v3806 = vld [vmem:[%s3805] sm:$0xff]
        %v3807 = vld [vmem:[%s3805 + $0x8] sm:$0xff]
        %v3808 = vld [vmem:[%s3805 + $0x10] sm:$0xff]
        %v3809 = vld [vmem:[%s3805 + $0x18] sm:$0xff]
        %v3810 = vld [vmem:[%s3805 + $0x20] sm:$0xff]
        %v3811 = vld [vmem:[%s3805 + $0x28] sm:$0xff]
        %v3812 = vld [vmem:[%s3805 + $0x30] sm:$0xff]
        %v3813 = vld [vmem:[%s3805 + $0x38] sm:$0xff]
        %v3814 = vld [vmem:[%s3805 + $0x40] sm:$0xff]
        %v3815 = vld [vmem:[%s3805 + $0x48] sm:$0xff]
        %v3816 = vld [vmem:[%s3805 + $0x50] sm:$0xff]
        %v3817 = vld [vmem:[%s3805 + $0x58] sm:$0xff]
        %v3818 = vld [vmem:[%s3805 + $0x60] sm:$0xff]
        %v3819 = vld [vmem:[%s3805 + $0x68] sm:$0xff]
        %v3820 = vld [vmem:[%s3805 + $0x70] sm:$0xff]
        %v3821 = vld [vmem:[%s3805 + $0x78] sm:$0xff]
        %v3822 = vld [vmem:[%s3805 + $0x80] sm:$0xff]
        %v3823 = vld [vmem:[%s3805 + $0x88] sm:$0xff]
        %v3824 = vld [vmem:[%s3805 + $0x90] sm:$0xff]
        %v3825 = vld [vmem:[%s3805 + $0x98] sm:$0xff]
        %v3826 = vld [vmem:[%s3805 + $0xa0] sm:$0xff]
        %v3827 = vld [vmem:[%s3805 + $0xa8] sm:$0xff]
        %v3828 = vld [vmem:[%s3805 + $0xb0] sm:$0xff]
        %v3829 = vld [vmem:[%s3805 + $0xb8] sm:$0xff]
        %v3830 = vld [vmem:[%s3805 + $0xc0] sm:$0xff]
        %v3831 = vld [vmem:[%s3805 + $0xc8] sm:$0xff]
        %v3832 = vld [vmem:[%s3805 + $0xd0] sm:$0xff]
        %v3833 = vld [vmem:[%s3805 + $0xd8] sm:$0xff]
        %v3834 = vld [vmem:[%s3805 + $0xe0] sm:$0xff]
        %v3835 = vld [vmem:[%s3805 + $0xe8] sm:$0xff]
        %v3836 = vld [vmem:[%s3805 + $0xf0] sm:$0xff]
        %v3837 = vld [vmem:[%s3805 + $0xf8] sm:$0xff]
        %3838 = vmatprep.subr.mxu0 %v3837
        %3839 = vmatpush1.msra.mxu0 %v3836
        %3840 = vmatprep.subr.mxu0 %v3835
        %3841 = vmatpush1.msra.mxu0 %v3834
        %3842 = vmatprep.subr.mxu0 %v3833
        %3843 = vmatpush1.msra.mxu0 %v3832
        %3844 = vmatprep.subr.mxu0 %v3831
        %3845 = vmatpush1.msra.mxu0 %v3830
        %3846 = vmatprep.subr.mxu0 %v3829
        %3847 = vmatpush1.msra.mxu0 %v3828
        %3848 = vmatprep.subr.mxu0 %v3827
        %3849 = vmatpush1.msra.mxu0 %v3826
        %3850 = vmatprep.subr.mxu0 %v3825
        %3851 = vmatpush1.msra.mxu0 %v3824
        %3852 = vmatprep.subr.mxu0 %v3823
        %3853 = vmatpush1.msra.mxu0 %v3822
        %3854 = vmatprep.subr.mxu0 %v3821
        %3855 = vmatpush1.msra.mxu0 %v3820
        %3856 = vmatprep.subr.mxu0 %v3819
        %3857 = vmatpush1.msra.mxu0 %v3818
        %3858 = vmatprep.subr.mxu0 %v3817
        %3859 = vmatpush1.msra.mxu0 %v3816
        %3860 = vmatprep.subr.mxu0 %v3815
        %3861 = vmatpush1.msra.mxu0 %v3814
        %3862 = vmatprep.subr.mxu0 %v3813
        %3863 = vmatpush1.msra.mxu0 %v3812
        %3864 = vmatprep.subr.mxu0 %v3811
        %3865 = vmatpush1.msra.mxu0 %v3810
        %3866 = vmatprep.subr.mxu0 %v3809
        %3867 = vmatpush1.msra.mxu0 %v3808
        %3868 = vmatprep.subr.mxu0 %v3807
        %3869 = vmatpush1.msra.mxu0 %v3806
        %3870 = vmatprep.subr.mxu0 0.0
        %3871 = vmatpush2.msra.mxu0 0.0
        %3872 = vmatprep.subr.mxu0 0.0
        %3873 = vmatpush2.msra.mxu0 0.0
        %3874 = vmatprep.subr.mxu0 0.0
        %3875 = vmatpush2.msra.mxu0 0.0
        %3876 = vmatprep.subr.mxu0 0.0
        %3877 = vmatpush2.msra.mxu0 0.0
        %3878 = vmatprep.subr.mxu0 0.0
        %3879 = vmatpush2.msra.mxu0 0.0
        %3880 = vmatprep.subr.mxu0 0.0
        %3881 = vmatpush2.msra.mxu0 0.0
        %3882 = vmatprep.subr.mxu0 0.0
        %3883 = vmatpush2.msra.mxu0 0.0
        %3884 = vmatprep.subr.mxu0 0.0
        %3885 = vmatpush2.msra.mxu0 0.0
        %3886 = vmatprep.subr.mxu0 0.0
        %3887 = vmatpush2.msra.mxu0 0.0
        %3888 = vmatprep.subr.mxu0 0.0
        %3889 = vmatpush2.msra.mxu0 0.0
        %3890 = vmatprep.subr.mxu0 0.0
        %3891 = vmatpush2.msra.mxu0 0.0
        %3892 = vmatprep.subr.mxu0 0.0
        %3893 = vmatpush2.msra.mxu0 0.0
        %3894 = vmatprep.subr.mxu0 0.0
        %3895 = vmatpush2.msra.mxu0 0.0
        %3896 = vmatprep.subr.mxu0 0.0
        %3897 = vmatpush2.msra.mxu0 0.0
        %3898 = vmatprep.subr.mxu0 0.0
        %3899 = vmatpush2.msra.mxu0 0.0
        %3900 = vmatprep.subr.mxu0 0.0
        %3901 = vmatpush2.msra.mxu0 0.0
        %3902 = vmatprep.mubr.f32.mxu0 0.0
        %3903 = vmatmul.mubr.f32.gmra.mxu0 %v3563
        %v3904 = vpop.f32.mrf.mxu0
        %v3905 = vadd.f32 0.0, %v3904
        %v3906 = vpop.f32.mrf.mxu0
        %v3907 = vadd.f32 0.0, %v3906
        %3908 = vmatprep.mubr.f32.mxu0 0.0
        %3909 = vmatmul.mubr.f32.gmra.mxu0 %v3564
        %v3910 = vpop.f32.mrf.mxu0
        %v3911 = vadd.f32 0.0, %v3910
        %v3912 = vpop.f32.mrf.mxu0
        %v3913 = vadd.f32 0.0, %v3912
        %3914 = vmatprep.mubr.f32.mxu0 0.0
        %3915 = vmatmul.mubr.f32.gmra.mxu0 %v3565
        %v3916 = vpop.f32.mrf.mxu0
        %v3917 = vadd.f32 0.0, %v3916
        %v3918 = vpop.f32.mrf.mxu0
        %v3919 = vadd.f32 0.0, %v3918
        %3920 = vmatprep.mubr.f32.mxu0 0.0
        %3921 = vmatmul.mubr.f32.gmra.mxu0 %v3566
        %v3922 = vpop.f32.mrf.mxu0
        %v3923 = vadd.f32 0.0, %v3922
        %v3924 = vpop.f32.mrf.mxu0
        %v3925 = vadd.f32 0.0, %v3924
        %3926 = vmatprep.mubr.f32.mxu0 0.0
        %3927 = vmatmul.mubr.f32.gmra.mxu0 %v3567
        %v3928 = vpop.f32.mrf.mxu0
        %v3929 = vadd.f32 0.0, %v3928
        %v3930 = vpop.f32.mrf.mxu0
        %v3931 = vadd.f32 0.0, %v3930
        %3932 = vmatprep.mubr.f32.mxu0 0.0
        %3933 = vmatmul.mubr.f32.gmra.mxu0 %v3568
        %v3934 = vpop.f32.mrf.mxu0
        %v3935 = vadd.f32 0.0, %v3934
        %v3936 = vpop.f32.mrf.mxu0
        %v3937 = vadd.f32 0.0, %v3936
        %3938 = vmatprep.mubr.f32.mxu0 0.0
        %3939 = vmatmul.mubr.f32.gmra.mxu0 %v3569
        %v3940 = vpop.f32.mrf.mxu0
        %v3941 = vadd.f32 0.0, %v3940
        %v3942 = vpop.f32.mrf.mxu0
        %v3943 = vadd.f32 0.0, %v3942
        %3944 = vmatprep.mubr.f32.mxu0 0.0
        %3945 = vmatmul.mubr.f32.gmra.mxu0 %v3570
        %v3946 = vpop.f32.mrf.mxu0
        %v3947 = vadd.f32 0.0, %v3946
        %v3948 = vpop.f32.mrf.mxu0
        %v3949 = vadd.f32 0.0, %v3948
        %3950 = vmatprep.mubr.f32.mxu0 0.0
        %3951 = vmatmul.mubr.f32.gmra.mxu0 %v3571
        %v3952 = vpop.f32.mrf.mxu0
        %v3953 = vadd.f32 0.0, %v3952
        %v3954 = vpop.f32.mrf.mxu0
        %v3955 = vadd.f32 0.0, %v3954
        %3956 = vmatprep.mubr.f32.mxu0 0.0
        %3957 = vmatmul.mubr.f32.gmra.mxu0 %v3572
        %v3958 = vpop.f32.mrf.mxu0
        %v3959 = vadd.f32 0.0, %v3958
        %v3960 = vpop.f32.mrf.mxu0
        %v3961 = vadd.f32 0.0, %v3960
        %3962 = vmatprep.mubr.f32.mxu0 0.0
        %3963 = vmatmul.mubr.f32.gmra.mxu0 %v3573
        %v3964 = vpop.f32.mrf.mxu0
        %v3965 = vadd.f32 0.0, %v3964
        %v3966 = vpop.f32.mrf.mxu0
        %v3967 = vadd.f32 0.0, %v3966
        %3968 = vmatprep.mubr.f32.mxu0 0.0
        %3969 = vmatmul.mubr.f32.gmra.mxu0 %v3574
        %v3970 = vpop.f32.mrf.mxu0
        %v3971 = vadd.f32 0.0, %v3970
        %v3972 = vpop.f32.mrf.mxu0
        %v3973 = vadd.f32 0.0, %v3972
        %3974 = vmatprep.mubr.f32.mxu0 0.0
        %3975 = vmatmul.mubr.f32.gmra.mxu0 %v3575
        %v3976 = vpop.f32.mrf.mxu0
        %v3977 = vadd.f32 0.0, %v3976
        %v3978 = vpop.f32.mrf.mxu0
        %v3979 = vadd.f32 0.0, %v3978
        %3980 = vmatprep.mubr.f32.mxu0 0.0
        %3981 = vmatmul.mubr.f32.gmra.mxu0 %v3576
        %v3982 = vpop.f32.mrf.mxu0
        %v3983 = vadd.f32 0.0, %v3982
        %v3984 = vpop.f32.mrf.mxu0
        %v3985 = vadd.f32 0.0, %v3984
        %3986 = vmatprep.mubr.f32.mxu0 0.0
        %3987 = vmatmul.mubr.f32.gmra.mxu0 %v3577
        %v3988 = vpop.f32.mrf.mxu0
        %v3989 = vadd.f32 0.0, %v3988
        %v3990 = vpop.f32.mrf.mxu0
        %v3991 = vadd.f32 0.0, %v3990
        %3992 = vmatprep.mubr.f32.mxu0 0.0
        %3993 = vmatmul.mubr.f32.gmra.mxu0 %v3578
        %v3994 = vpop.f32.mrf.mxu0
        %v3995 = vadd.f32 0.0, %v3994
        %v3996 = vpop.f32.mrf.mxu0
        %v3997 = vadd.f32 0.0, %v3996
        %3998 = vdwg.mxu0
        %s3999 = scalar_lea.vmem %s10, 256
        %v4000 = vld [vmem:[%s3999] sm:$0xff]
        %v4001 = vld [vmem:[%s3999 + $0x8] sm:$0xff]
        %v4002 = vld [vmem:[%s3999 + $0x10] sm:$0xff]
        %v4003 = vld [vmem:[%s3999 + $0x18] sm:$0xff]
        %v4004 = vld [vmem:[%s3999 + $0x20] sm:$0xff]
        %v4005 = vld [vmem:[%s3999 + $0x28] sm:$0xff]
        %v4006 = vld [vmem:[%s3999 + $0x30] sm:$0xff]
        %v4007 = vld [vmem:[%s3999 + $0x38] sm:$0xff]
        %v4008 = vld [vmem:[%s3999 + $0x40] sm:$0xff]
        %v4009 = vld [vmem:[%s3999 + $0x48] sm:$0xff]
        %v4010 = vld [vmem:[%s3999 + $0x50] sm:$0xff]
        %v4011 = vld [vmem:[%s3999 + $0x58] sm:$0xff]
        %v4012 = vld [vmem:[%s3999 + $0x60] sm:$0xff]
        %v4013 = vld [vmem:[%s3999 + $0x68] sm:$0xff]
        %v4014 = vld [vmem:[%s3999 + $0x70] sm:$0xff]
        %v4015 = vld [vmem:[%s3999 + $0x78] sm:$0xff]
        %v4016 = vld [vmem:[%s3999 + $0x80] sm:$0xff]
        %v4017 = vld [vmem:[%s3999 + $0x88] sm:$0xff]
        %v4018 = vld [vmem:[%s3999 + $0x90] sm:$0xff]
        %v4019 = vld [vmem:[%s3999 + $0x98] sm:$0xff]
        %v4020 = vld [vmem:[%s3999 + $0xa0] sm:$0xff]
        %v4021 = vld [vmem:[%s3999 + $0xa8] sm:$0xff]
        %v4022 = vld [vmem:[%s3999 + $0xb0] sm:$0xff]
        %v4023 = vld [vmem:[%s3999 + $0xb8] sm:$0xff]
        %v4024 = vld [vmem:[%s3999 + $0xc0] sm:$0xff]
        %v4025 = vld [vmem:[%s3999 + $0xc8] sm:$0xff]
        %v4026 = vld [vmem:[%s3999 + $0xd0] sm:$0xff]
        %v4027 = vld [vmem:[%s3999 + $0xd8] sm:$0xff]
        %v4028 = vld [vmem:[%s3999 + $0xe0] sm:$0xff]
        %v4029 = vld [vmem:[%s3999 + $0xe8] sm:$0xff]
        %v4030 = vld [vmem:[%s3999 + $0xf0] sm:$0xff]
        %v4031 = vld [vmem:[%s3999 + $0xf8] sm:$0xff]
        %4032 = vmatprep.subr.mxu0 %v3997
        %4033 = vmatpush1.msra.mxu0 %v3995
        %4034 = vmatprep.subr.mxu0 %v3991
        %4035 = vmatpush1.msra.mxu0 %v3989
        %4036 = vmatprep.subr.mxu0 %v3985
        %4037 = vmatpush1.msra.mxu0 %v3983
        %4038 = vmatprep.subr.mxu0 %v3979
        %4039 = vmatpush1.msra.mxu0 %v3977
        %4040 = vmatprep.subr.mxu0 %v3973
        %4041 = vmatpush1.msra.mxu0 %v3971
        %4042 = vmatprep.subr.mxu0 %v3967
        %4043 = vmatpush1.msra.mxu0 %v3965
        %4044 = vmatprep.subr.mxu0 %v3961
        %4045 = vmatpush1.msra.mxu0 %v3959
        %4046 = vmatprep.subr.mxu0 %v3955
        %4047 = vmatpush1.msra.mxu0 %v3953
        %4048 = vmatprep.subr.mxu0 %v3949
        %4049 = vmatpush1.msra.mxu0 %v3947
        %4050 = vmatprep.subr.mxu0 %v3943
        %4051 = vmatpush1.msra.mxu0 %v3941
        %4052 = vmatprep.subr.mxu0 %v3937
        %4053 = vmatpush1.msra.mxu0 %v3935
        %4054 = vmatprep.subr.mxu0 %v3931
        %4055 = vmatpush1.msra.mxu0 %v3929
        %4056 = vmatprep.subr.mxu0 %v3925
        %4057 = vmatpush1.msra.mxu0 %v3923
        %4058 = vmatprep.subr.mxu0 %v3919
        %4059 = vmatpush1.msra.mxu0 %v3917
        %4060 = vmatprep.subr.mxu0 %v3913
        %4061 = vmatpush1.msra.mxu0 %v3911
        %4062 = vmatprep.subr.mxu0 %v3907
        %4063 = vmatpush1.msra.mxu0 %v3905
        %4064 = vmatprep.subr.mxu0 0.0
        %4065 = vmatpush2.msra.mxu0 0.0
        %4066 = vmatprep.subr.mxu0 0.0
        %4067 = vmatpush2.msra.mxu0 0.0
        %4068 = vmatprep.subr.mxu0 0.0
        %4069 = vmatpush2.msra.mxu0 0.0
        %4070 = vmatprep.subr.mxu0 0.0
        %4071 = vmatpush2.msra.mxu0 0.0
        %4072 = vmatprep.subr.mxu0 0.0
        %4073 = vmatpush2.msra.mxu0 0.0
        %4074 = vmatprep.subr.mxu0 0.0
        %4075 = vmatpush2.msra.mxu0 0.0
        %4076 = vmatprep.subr.mxu0 0.0
        %4077 = vmatpush2.msra.mxu0 0.0
        %4078 = vmatprep.subr.mxu0 0.0
        %4079 = vmatpush2.msra.mxu0 0.0
        %4080 = vmatprep.subr.mxu0 0.0
        %4081 = vmatpush2.msra.mxu0 0.0
        %4082 = vmatprep.subr.mxu0 0.0
        %4083 = vmatpush2.msra.mxu0 0.0
        %4084 = vmatprep.subr.mxu0 0.0
        %4085 = vmatpush2.msra.mxu0 0.0
        %4086 = vmatprep.subr.mxu0 0.0
        %4087 = vmatpush2.msra.mxu0 0.0
        %4088 = vmatprep.subr.mxu0 0.0
        %4089 = vmatpush2.msra.mxu0 0.0
        %4090 = vmatprep.subr.mxu0 0.0
        %4091 = vmatpush2.msra.mxu0 0.0
        %4092 = vmatprep.subr.mxu0 0.0
        %4093 = vmatpush2.msra.mxu0 0.0
        %4094 = vmatprep.subr.mxu0 0.0
        %4095 = vmatpush2.msra.mxu0 0.0
        %4096 = vmatprep.mubr.f32.mxu0 0.0
        %4097 = vmatmul.mubr.f32.gmra.mxu0 %v4000
        %v4098 = vpop.f32.mrf.mxu0
        %v4099 = vadd.f32 0.0, %v4098
        %v4100 = vpop.f32.mrf.mxu0
        %v4101 = vadd.f32 0.0, %v4100
        %4102 = vmatprep.mubr.f32.mxu0 0.0
        %4103 = vmatmul.mubr.f32.gmra.mxu0 %v4001
        %v4104 = vpop.f32.mrf.mxu0
        %v4105 = vadd.f32 0.0, %v4104
        %v4106 = vpop.f32.mrf.mxu0
        %v4107 = vadd.f32 0.0, %v4106
        %4108 = vmatprep.mubr.f32.mxu0 0.0
        %4109 = vmatmul.mubr.f32.gmra.mxu0 %v4002
        %v4110 = vpop.f32.mrf.mxu0
        %v4111 = vadd.f32 0.0, %v4110
        %v4112 = vpop.f32.mrf.mxu0
        %v4113 = vadd.f32 0.0, %v4112
        %4114 = vmatprep.mubr.f32.mxu0 0.0
        %4115 = vmatmul.mubr.f32.gmra.mxu0 %v4003
        %v4116 = vpop.f32.mrf.mxu0
        %v4117 = vadd.f32 0.0, %v4116
        %v4118 = vpop.f32.mrf.mxu0
        %v4119 = vadd.f32 0.0, %v4118
        %4120 = vmatprep.mubr.f32.mxu0 0.0
        %4121 = vmatmul.mubr.f32.gmra.mxu0 %v4004
        %v4122 = vpop.f32.mrf.mxu0
        %v4123 = vadd.f32 0.0, %v4122
        %v4124 = vpop.f32.mrf.mxu0
        %v4125 = vadd.f32 0.0, %v4124
        %4126 = vmatprep.mubr.f32.mxu0 0.0
        %4127 = vmatmul.mubr.f32.gmra.mxu0 %v4005
        %v4128 = vpop.f32.mrf.mxu0
        %v4129 = vadd.f32 0.0, %v4128
        %v4130 = vpop.f32.mrf.mxu0
        %v4131 = vadd.f32 0.0, %v4130
        %4132 = vmatprep.mubr.f32.mxu0 0.0
        %4133 = vmatmul.mubr.f32.gmra.mxu0 %v4006
        %v4134 = vpop.f32.mrf.mxu0
        %v4135 = vadd.f32 0.0, %v4134
        %v4136 = vpop.f32.mrf.mxu0
        %v4137 = vadd.f32 0.0, %v4136
        %4138 = vmatprep.mubr.f32.mxu0 0.0
        %4139 = vmatmul.mubr.f32.gmra.mxu0 %v4007
        %v4140 = vpop.f32.mrf.mxu0
        %v4141 = vadd.f32 0.0, %v4140
        %v4142 = vpop.f32.mrf.mxu0
        %v4143 = vadd.f32 0.0, %v4142
        %4144 = vmatprep.mubr.f32.mxu0 0.0
        %4145 = vmatmul.mubr.f32.gmra.mxu0 %v4008
        %v4146 = vpop.f32.mrf.mxu0
        %v4147 = vadd.f32 0.0, %v4146
        %v4148 = vpop.f32.mrf.mxu0
        %v4149 = vadd.f32 0.0, %v4148
        %4150 = vmatprep.mubr.f32.mxu0 0.0
        %4151 = vmatmul.mubr.f32.gmra.mxu0 %v4009
        %v4152 = vpop.f32.mrf.mxu0
        %v4153 = vadd.f32 0.0, %v4152
        %v4154 = vpop.f32.mrf.mxu0
        %v4155 = vadd.f32 0.0, %v4154
        %4156 = vmatprep.mubr.f32.mxu0 0.0
        %4157 = vmatmul.mubr.f32.gmra.mxu0 %v4010
        %v4158 = vpop.f32.mrf.mxu0
        %v4159 = vadd.f32 0.0, %v4158
        %v4160 = vpop.f32.mrf.mxu0
        %v4161 = vadd.f32 0.0, %v4160
        %4162 = vmatprep.mubr.f32.mxu0 0.0
        %4163 = vmatmul.mubr.f32.gmra.mxu0 %v4011
        %v4164 = vpop.f32.mrf.mxu0
        %v4165 = vadd.f32 0.0, %v4164
        %v4166 = vpop.f32.mrf.mxu0
        %v4167 = vadd.f32 0.0, %v4166
        %4168 = vmatprep.mubr.f32.mxu0 0.0
        %4169 = vmatmul.mubr.f32.gmra.mxu0 %v4012
        %v4170 = vpop.f32.mrf.mxu0
        %v4171 = vadd.f32 0.0, %v4170
        %v4172 = vpop.f32.mrf.mxu0
        %v4173 = vadd.f32 0.0, %v4172
        %4174 = vmatprep.mubr.f32.mxu0 0.0
        %4175 = vmatmul.mubr.f32.gmra.mxu0 %v4013
        %v4176 = vpop.f32.mrf.mxu0
        %v4177 = vadd.f32 0.0, %v4176
        %v4178 = vpop.f32.mrf.mxu0
        %v4179 = vadd.f32 0.0, %v4178
        %4180 = vmatprep.mubr.f32.mxu0 0.0
        %4181 = vmatmul.mubr.f32.gmra.mxu0 %v4014
        %v4182 = vpop.f32.mrf.mxu0
        %v4183 = vadd.f32 0.0, %v4182
        %v4184 = vpop.f32.mrf.mxu0
        %v4185 = vadd.f32 0.0, %v4184
        %4186 = vmatprep.mubr.f32.mxu0 0.0
        %4187 = vmatmul.mubr.f32.gmra.mxu0 %v4015
        %v4188 = vpop.f32.mrf.mxu0
        %v4189 = vadd.f32 0.0, %v4188
        %v4190 = vpop.f32.mrf.mxu0
        %v4191 = vadd.f32 0.0, %v4190
        %4192 = vmatprep.mubr.f32.mxu0 0.0
        %4193 = vmatmul.mubr.f32.gmra.mxu0 %v4016
        %v4194 = vpop.f32.mrf.mxu0
        %v4195 = vadd.f32 0.0, %v4194
        %v4196 = vpop.f32.mrf.mxu0
        %v4197 = vadd.f32 0.0, %v4196
        %4198 = vmatprep.mubr.f32.mxu0 0.0
        %4199 = vmatmul.mubr.f32.gmra.mxu0 %v4017
        %v4200 = vpop.f32.mrf.mxu0
        %v4201 = vadd.f32 0.0, %v4200
        %v4202 = vpop.f32.mrf.mxu0
        %v4203 = vadd.f32 0.0, %v4202
        %4204 = vmatprep.mubr.f32.mxu0 0.0
        %4205 = vmatmul.mubr.f32.gmra.mxu0 %v4018
        %v4206 = vpop.f32.mrf.mxu0
        %v4207 = vadd.f32 0.0, %v4206
        %v4208 = vpop.f32.mrf.mxu0
        %v4209 = vadd.f32 0.0, %v4208
        %4210 = vmatprep.mubr.f32.mxu0 0.0
        %4211 = vmatmul.mubr.f32.gmra.mxu0 %v4019
        %v4212 = vpop.f32.mrf.mxu0
        %v4213 = vadd.f32 0.0, %v4212
        %v4214 = vpop.f32.mrf.mxu0
        %v4215 = vadd.f32 0.0, %v4214
        %4216 = vmatprep.mubr.f32.mxu0 0.0
        %4217 = vmatmul.mubr.f32.gmra.mxu0 %v4020
        %v4218 = vpop.f32.mrf.mxu0
        %v4219 = vadd.f32 0.0, %v4218
        %v4220 = vpop.f32.mrf.mxu0
        %v4221 = vadd.f32 0.0, %v4220
        %4222 = vmatprep.mubr.f32.mxu0 0.0
        %4223 = vmatmul.mubr.f32.gmra.mxu0 %v4021
        %v4224 = vpop.f32.mrf.mxu0
        %v4225 = vadd.f32 0.0, %v4224
        %v4226 = vpop.f32.mrf.mxu0
        %v4227 = vadd.f32 0.0, %v4226
        %4228 = vmatprep.mubr.f32.mxu0 0.0
        %4229 = vmatmul.mubr.f32.gmra.mxu0 %v4022
        %v4230 = vpop.f32.mrf.mxu0
        %v4231 = vadd.f32 0.0, %v4230
        %v4232 = vpop.f32.mrf.mxu0
        %v4233 = vadd.f32 0.0, %v4232
        %4234 = vmatprep.mubr.f32.mxu0 0.0
        %4235 = vmatmul.mubr.f32.gmra.mxu0 %v4023
        %v4236 = vpop.f32.mrf.mxu0
        %v4237 = vadd.f32 0.0, %v4236
        %v4238 = vpop.f32.mrf.mxu0
        %v4239 = vadd.f32 0.0, %v4238
        %4240 = vmatprep.mubr.f32.mxu0 0.0
        %4241 = vmatmul.mubr.f32.gmra.mxu0 %v4024
        %v4242 = vpop.f32.mrf.mxu0
        %v4243 = vadd.f32 0.0, %v4242
        %v4244 = vpop.f32.mrf.mxu0
        %v4245 = vadd.f32 0.0, %v4244
        %4246 = vmatprep.mubr.f32.mxu0 0.0
        %4247 = vmatmul.mubr.f32.gmra.mxu0 %v4025
        %v4248 = vpop.f32.mrf.mxu0
        %v4249 = vadd.f32 0.0, %v4248
        %v4250 = vpop.f32.mrf.mxu0
        %v4251 = vadd.f32 0.0, %v4250
        %4252 = vmatprep.mubr.f32.mxu0 0.0
        %4253 = vmatmul.mubr.f32.gmra.mxu0 %v4026
        %v4254 = vpop.f32.mrf.mxu0
        %v4255 = vadd.f32 0.0, %v4254
        %v4256 = vpop.f32.mrf.mxu0
        %v4257 = vadd.f32 0.0, %v4256
        %4258 = vmatprep.mubr.f32.mxu0 0.0
        %4259 = vmatmul.mubr.f32.gmra.mxu0 %v4027
        %v4260 = vpop.f32.mrf.mxu0
        %v4261 = vadd.f32 0.0, %v4260
        %v4262 = vpop.f32.mrf.mxu0
        %v4263 = vadd.f32 0.0, %v4262
        %4264 = vmatprep.mubr.f32.mxu0 0.0
        %4265 = vmatmul.mubr.f32.gmra.mxu0 %v4028
        %v4266 = vpop.f32.mrf.mxu0
        %v4267 = vadd.f32 0.0, %v4266
        %v4268 = vpop.f32.mrf.mxu0
        %v4269 = vadd.f32 0.0, %v4268
        %4270 = vmatprep.mubr.f32.mxu0 0.0
        %4271 = vmatmul.mubr.f32.gmra.mxu0 %v4029
        %v4272 = vpop.f32.mrf.mxu0
        %v4273 = vadd.f32 0.0, %v4272
        %v4274 = vpop.f32.mrf.mxu0
        %v4275 = vadd.f32 0.0, %v4274
        %4276 = vmatprep.mubr.f32.mxu0 0.0
        %4277 = vmatmul.mubr.f32.gmra.mxu0 %v4030
        %v4278 = vpop.f32.mrf.mxu0
        %v4279 = vadd.f32 0.0, %v4278
        %v4280 = vpop.f32.mrf.mxu0
        %v4281 = vadd.f32 0.0, %v4280
        %4282 = vmatprep.mubr.f32.mxu0 0.0
        %4283 = vmatmul.mubr.f32.gmra.mxu0 %v4031
        %v4284 = vpop.f32.mrf.mxu0
        %v4285 = vadd.f32 0.0, %v4284
        %v4286 = vpop.f32.mrf.mxu0
        %v4287 = vadd.f32 0.0, %v4286
        %4288 = vdwg.mxu0
        %4289 = vmatprep.subr.mxu0 %v3771
        %4290 = vmatpush1.msra.mxu0 %v3769
        %4291 = vmatprep.subr.mxu0 %v3765
        %4292 = vmatpush1.msra.mxu0 %v3763
        %4293 = vmatprep.subr.mxu0 %v3759
        %4294 = vmatpush1.msra.mxu0 %v3757
        %4295 = vmatprep.subr.mxu0 %v3753
        %4296 = vmatpush1.msra.mxu0 %v3751
        %4297 = vmatprep.subr.mxu0 %v3747
        %4298 = vmatpush1.msra.mxu0 %v3745
        %4299 = vmatprep.subr.mxu0 %v3741
        %4300 = vmatpush1.msra.mxu0 %v3739
        %4301 = vmatprep.subr.mxu0 %v3735
        %4302 = vmatpush1.msra.mxu0 %v3733
        %4303 = vmatprep.subr.mxu0 %v3729
        %4304 = vmatpush1.msra.mxu0 %v3727
        %4305 = vmatprep.subr.mxu0 %v3723
        %4306 = vmatpush1.msra.mxu0 %v3721
        %4307 = vmatprep.subr.mxu0 %v3717
        %4308 = vmatpush1.msra.mxu0 %v3715
        %4309 = vmatprep.subr.mxu0 %v3711
        %4310 = vmatpush1.msra.mxu0 %v3709
        %4311 = vmatprep.subr.mxu0 %v3705
        %4312 = vmatpush1.msra.mxu0 %v3703
        %4313 = vmatprep.subr.mxu0 %v3699
        %4314 = vmatpush1.msra.mxu0 %v3697
        %4315 = vmatprep.subr.mxu0 %v3693
        %4316 = vmatpush1.msra.mxu0 %v3691
        %4317 = vmatprep.subr.mxu0 %v3687
        %4318 = vmatpush1.msra.mxu0 %v3685
        %4319 = vmatprep.subr.mxu0 %v3681
        %4320 = vmatpush1.msra.mxu0 %v3679
        %4321 = vmatprep.subr.mxu0 0.0
        %4322 = vmatpush2.msra.mxu0 0.0
        %4323 = vmatprep.subr.mxu0 0.0
        %4324 = vmatpush2.msra.mxu0 0.0
        %4325 = vmatprep.subr.mxu0 0.0
        %4326 = vmatpush2.msra.mxu0 0.0
        %4327 = vmatprep.subr.mxu0 0.0
        %4328 = vmatpush2.msra.mxu0 0.0
        %4329 = vmatprep.subr.mxu0 0.0
        %4330 = vmatpush2.msra.mxu0 0.0
        %4331 = vmatprep.subr.mxu0 0.0
        %4332 = vmatpush2.msra.mxu0 0.0
        %4333 = vmatprep.subr.mxu0 0.0
        %4334 = vmatpush2.msra.mxu0 0.0
        %4335 = vmatprep.subr.mxu0 0.0
        %4336 = vmatpush2.msra.mxu0 0.0
        %4337 = vmatprep.subr.mxu0 0.0
        %4338 = vmatpush2.msra.mxu0 0.0
        %4339 = vmatprep.subr.mxu0 0.0
        %4340 = vmatpush2.msra.mxu0 0.0
        %4341 = vmatprep.subr.mxu0 0.0
        %4342 = vmatpush2.msra.mxu0 0.0
        %4343 = vmatprep.subr.mxu0 0.0
        %4344 = vmatpush2.msra.mxu0 0.0
        %4345 = vmatprep.subr.mxu0 0.0
        %4346 = vmatpush2.msra.mxu0 0.0
        %4347 = vmatprep.subr.mxu0 0.0
        %4348 = vmatpush2.msra.mxu0 0.0
        %4349 = vmatprep.subr.mxu0 0.0
        %4350 = vmatpush2.msra.mxu0 0.0
        %4351 = vmatprep.subr.mxu0 0.0
        %4352 = vmatpush2.msra.mxu0 0.0
        %4353 = vmatprep.mubr.f32.mxu0 0.0
        %4354 = vmatmul.mubr.f32.gmra.mxu0 %v3773
        %v4355 = vpop.f32.mrf.mxu0
        %v4356 = vadd.f32 %v4099, %v4355
        %v4357 = vpop.f32.mrf.mxu0
        %v4358 = vadd.f32 %v4101, %v4357
        %4359 = vmatprep.mubr.f32.mxu0 0.0
        %4360 = vmatmul.mubr.f32.gmra.mxu0 %v3774
        %v4361 = vpop.f32.mrf.mxu0
        %v4362 = vadd.f32 %v4105, %v4361
        %v4363 = vpop.f32.mrf.mxu0
        %v4364 = vadd.f32 %v4107, %v4363
        %4365 = vmatprep.mubr.f32.mxu0 0.0
        %4366 = vmatmul.mubr.f32.gmra.mxu0 %v3775
        %v4367 = vpop.f32.mrf.mxu0
        %v4368 = vadd.f32 %v4111, %v4367
        %v4369 = vpop.f32.mrf.mxu0
        %v4370 = vadd.f32 %v4113, %v4369
        %4371 = vmatprep.mubr.f32.mxu0 0.0
        %4372 = vmatmul.mubr.f32.gmra.mxu0 %v3776
        %v4373 = vpop.f32.mrf.mxu0
        %v4374 = vadd.f32 %v4117, %v4373
        %v4375 = vpop.f32.mrf.mxu0
        %v4376 = vadd.f32 %v4119, %v4375
        %4377 = vmatprep.mubr.f32.mxu0 0.0
        %4378 = vmatmul.mubr.f32.gmra.mxu0 %v3777
        %v4379 = vpop.f32.mrf.mxu0
        %v4380 = vadd.f32 %v4123, %v4379
        %v4381 = vpop.f32.mrf.mxu0
        %v4382 = vadd.f32 %v4125, %v4381
        %4383 = vmatprep.mubr.f32.mxu0 0.0
        %4384 = vmatmul.mubr.f32.gmra.mxu0 %v3778
        %v4385 = vpop.f32.mrf.mxu0
        %v4386 = vadd.f32 %v4129, %v4385
        %v4387 = vpop.f32.mrf.mxu0
        %v4388 = vadd.f32 %v4131, %v4387
        %4389 = vmatprep.mubr.f32.mxu0 0.0
        %4390 = vmatmul.mubr.f32.gmra.mxu0 %v3779
        %v4391 = vpop.f32.mrf.mxu0
        %v4392 = vadd.f32 %v4135, %v4391
        %v4393 = vpop.f32.mrf.mxu0
        %v4394 = vadd.f32 %v4137, %v4393
        %4395 = vmatprep.mubr.f32.mxu0 0.0
        %4396 = vmatmul.mubr.f32.gmra.mxu0 %v3780
        %v4397 = vpop.f32.mrf.mxu0
        %v4398 = vadd.f32 %v4141, %v4397
        %v4399 = vpop.f32.mrf.mxu0
        %v4400 = vadd.f32 %v4143, %v4399
        %4401 = vmatprep.mubr.f32.mxu0 0.0
        %4402 = vmatmul.mubr.f32.gmra.mxu0 %v3781
        %v4403 = vpop.f32.mrf.mxu0
        %v4404 = vadd.f32 %v4147, %v4403
        %v4405 = vpop.f32.mrf.mxu0
        %v4406 = vadd.f32 %v4149, %v4405
        %4407 = vmatprep.mubr.f32.mxu0 0.0
        %4408 = vmatmul.mubr.f32.gmra.mxu0 %v3782
        %v4409 = vpop.f32.mrf.mxu0
        %v4410 = vadd.f32 %v4153, %v4409
        %v4411 = vpop.f32.mrf.mxu0
        %v4412 = vadd.f32 %v4155, %v4411
        %4413 = vmatprep.mubr.f32.mxu0 0.0
        %4414 = vmatmul.mubr.f32.gmra.mxu0 %v3783
        %v4415 = vpop.f32.mrf.mxu0
        %v4416 = vadd.f32 %v4159, %v4415
        %v4417 = vpop.f32.mrf.mxu0
        %v4418 = vadd.f32 %v4161, %v4417
        %4419 = vmatprep.mubr.f32.mxu0 0.0
        %4420 = vmatmul.mubr.f32.gmra.mxu0 %v3784
        %v4421 = vpop.f32.mrf.mxu0
        %v4422 = vadd.f32 %v4165, %v4421
        %v4423 = vpop.f32.mrf.mxu0
        %v4424 = vadd.f32 %v4167, %v4423
        %4425 = vmatprep.mubr.f32.mxu0 0.0
        %4426 = vmatmul.mubr.f32.gmra.mxu0 %v3785
        %v4427 = vpop.f32.mrf.mxu0
        %v4428 = vadd.f32 %v4171, %v4427
        %v4429 = vpop.f32.mrf.mxu0
        %v4430 = vadd.f32 %v4173, %v4429
        %4431 = vmatprep.mubr.f32.mxu0 0.0
        %4432 = vmatmul.mubr.f32.gmra.mxu0 %v3786
        %v4433 = vpop.f32.mrf.mxu0
        %v4434 = vadd.f32 %v4177, %v4433
        %v4435 = vpop.f32.mrf.mxu0
        %v4436 = vadd.f32 %v4179, %v4435
        %4437 = vmatprep.mubr.f32.mxu0 0.0
        %4438 = vmatmul.mubr.f32.gmra.mxu0 %v3787
        %v4439 = vpop.f32.mrf.mxu0
        %v4440 = vadd.f32 %v4183, %v4439
        %v4441 = vpop.f32.mrf.mxu0
        %v4442 = vadd.f32 %v4185, %v4441
        %4443 = vmatprep.mubr.f32.mxu0 0.0
        %4444 = vmatmul.mubr.f32.gmra.mxu0 %v3788
        %v4445 = vpop.f32.mrf.mxu0
        %v4446 = vadd.f32 %v4189, %v4445
        %v4447 = vpop.f32.mrf.mxu0
        %v4448 = vadd.f32 %v4191, %v4447
        %4449 = vmatprep.mubr.f32.mxu0 0.0
        %4450 = vmatmul.mubr.f32.gmra.mxu0 %v3789
        %v4451 = vpop.f32.mrf.mxu0
        %v4452 = vadd.f32 %v4195, %v4451
        %v4453 = vpop.f32.mrf.mxu0
        %v4454 = vadd.f32 %v4197, %v4453
        %4455 = vmatprep.mubr.f32.mxu0 0.0
        %4456 = vmatmul.mubr.f32.gmra.mxu0 %v3790
        %v4457 = vpop.f32.mrf.mxu0
        %v4458 = vadd.f32 %v4201, %v4457
        %v4459 = vpop.f32.mrf.mxu0
        %v4460 = vadd.f32 %v4203, %v4459
        %4461 = vmatprep.mubr.f32.mxu0 0.0
        %4462 = vmatmul.mubr.f32.gmra.mxu0 %v3791
        %v4463 = vpop.f32.mrf.mxu0
        %v4464 = vadd.f32 %v4207, %v4463
        %v4465 = vpop.f32.mrf.mxu0
        %v4466 = vadd.f32 %v4209, %v4465
        %4467 = vmatprep.mubr.f32.mxu0 0.0
        %4468 = vmatmul.mubr.f32.gmra.mxu0 %v3792
        %v4469 = vpop.f32.mrf.mxu0
        %v4470 = vadd.f32 %v4213, %v4469
        %v4471 = vpop.f32.mrf.mxu0
        %v4472 = vadd.f32 %v4215, %v4471
        %4473 = vmatprep.mubr.f32.mxu0 0.0
        %4474 = vmatmul.mubr.f32.gmra.mxu0 %v3793
        %v4475 = vpop.f32.mrf.mxu0
        %v4476 = vadd.f32 %v4219, %v4475
        %v4477 = vpop.f32.mrf.mxu0
        %v4478 = vadd.f32 %v4221, %v4477
        %4479 = vmatprep.mubr.f32.mxu0 0.0
        %4480 = vmatmul.mubr.f32.gmra.mxu0 %v3794
        %v4481 = vpop.f32.mrf.mxu0
        %v4482 = vadd.f32 %v4225, %v4481
        %v4483 = vpop.f32.mrf.mxu0
        %v4484 = vadd.f32 %v4227, %v4483
        %4485 = vmatprep.mubr.f32.mxu0 0.0
        %4486 = vmatmul.mubr.f32.gmra.mxu0 %v3795
        %v4487 = vpop.f32.mrf.mxu0
        %v4488 = vadd.f32 %v4231, %v4487
        %v4489 = vpop.f32.mrf.mxu0
        %v4490 = vadd.f32 %v4233, %v4489
        %4491 = vmatprep.mubr.f32.mxu0 0.0
        %4492 = vmatmul.mubr.f32.gmra.mxu0 %v3796
        %v4493 = vpop.f32.mrf.mxu0
        %v4494 = vadd.f32 %v4237, %v4493
        %v4495 = vpop.f32.mrf.mxu0
        %v4496 = vadd.f32 %v4239, %v4495
        %4497 = vmatprep.mubr.f32.mxu0 0.0
        %4498 = vmatmul.mubr.f32.gmra.mxu0 %v3797
        %v4499 = vpop.f32.mrf.mxu0
        %v4500 = vadd.f32 %v4243, %v4499
        %v4501 = vpop.f32.mrf.mxu0
        %v4502 = vadd.f32 %v4245, %v4501
        %4503 = vmatprep.mubr.f32.mxu0 0.0
        %4504 = vmatmul.mubr.f32.gmra.mxu0 %v3798
        %v4505 = vpop.f32.mrf.mxu0
        %v4506 = vadd.f32 %v4249, %v4505
        %v4507 = vpop.f32.mrf.mxu0
        %v4508 = vadd.f32 %v4251, %v4507
        %4509 = vmatprep.mubr.f32.mxu0 0.0
        %4510 = vmatmul.mubr.f32.gmra.mxu0 %v3799
        %v4511 = vpop.f32.mrf.mxu0
        %v4512 = vadd.f32 %v4255, %v4511
        %v4513 = vpop.f32.mrf.mxu0
        %v4514 = vadd.f32 %v4257, %v4513
        %4515 = vmatprep.mubr.f32.mxu0 0.0
        %4516 = vmatmul.mubr.f32.gmra.mxu0 %v3800
        %v4517 = vpop.f32.mrf.mxu0
        %v4518 = vadd.f32 %v4261, %v4517
        %v4519 = vpop.f32.mrf.mxu0
        %v4520 = vadd.f32 %v4263, %v4519
        %4521 = vmatprep.mubr.f32.mxu0 0.0
        %4522 = vmatmul.mubr.f32.gmra.mxu0 %v3801
        %v4523 = vpop.f32.mrf.mxu0
        %v4524 = vadd.f32 %v4267, %v4523
        %v4525 = vpop.f32.mrf.mxu0
        %v4526 = vadd.f32 %v4269, %v4525
        %4527 = vmatprep.mubr.f32.mxu0 0.0
        %4528 = vmatmul.mubr.f32.gmra.mxu0 %v3802
        %v4529 = vpop.f32.mrf.mxu0
        %v4530 = vadd.f32 %v4273, %v4529
        %v4531 = vpop.f32.mrf.mxu0
        %v4532 = vadd.f32 %v4275, %v4531
        %4533 = vmatprep.mubr.f32.mxu0 0.0
        %4534 = vmatmul.mubr.f32.gmra.mxu0 %v3803
        %v4535 = vpop.f32.mrf.mxu0
        %v4536 = vadd.f32 %v4279, %v4535
        %v4537 = vpop.f32.mrf.mxu0
        %v4538 = vadd.f32 %v4281, %v4537
        %4539 = vmatprep.mubr.f32.mxu0 0.0
        %4540 = vmatmul.mubr.f32.gmra.mxu0 %v3804
        %v4541 = vpop.f32.mrf.mxu0
        %v4542 = vadd.f32 %v4285, %v4541
        %v4543 = vpop.f32.mrf.mxu0
        %v4544 = vadd.f32 %v4287, %v4543
        %4545 = vdwg.mxu0
        %s4546 = scalar_lea.vmem %s11, 512
        %v4547 = vld [vmem:[%s4546] sm:$0xff]
        %v4548 = vld [vmem:[%s4546 + $0x8] sm:$0xff]
        %v4549 = vld [vmem:[%s4546 + $0x10] sm:$0xff]
        %v4550 = vld [vmem:[%s4546 + $0x18] sm:$0xff]
        %v4551 = vld [vmem:[%s4546 + $0x20] sm:$0xff]
        %v4552 = vld [vmem:[%s4546 + $0x28] sm:$0xff]
        %v4553 = vld [vmem:[%s4546 + $0x30] sm:$0xff]
        %v4554 = vld [vmem:[%s4546 + $0x38] sm:$0xff]
        %v4555 = vld [vmem:[%s4546 + $0x40] sm:$0xff]
        %v4556 = vld [vmem:[%s4546 + $0x48] sm:$0xff]
        %v4557 = vld [vmem:[%s4546 + $0x50] sm:$0xff]
        %v4558 = vld [vmem:[%s4546 + $0x58] sm:$0xff]
        %v4559 = vld [vmem:[%s4546 + $0x60] sm:$0xff]
        %v4560 = vld [vmem:[%s4546 + $0x68] sm:$0xff]
        %v4561 = vld [vmem:[%s4546 + $0x70] sm:$0xff]
        %v4562 = vld [vmem:[%s4546 + $0x78] sm:$0xff]
        %v4563 = vld [vmem:[%s4546 + $0x80] sm:$0xff]
        %v4564 = vld [vmem:[%s4546 + $0x88] sm:$0xff]
        %v4565 = vld [vmem:[%s4546 + $0x90] sm:$0xff]
        %v4566 = vld [vmem:[%s4546 + $0x98] sm:$0xff]
        %v4567 = vld [vmem:[%s4546 + $0xa0] sm:$0xff]
        %v4568 = vld [vmem:[%s4546 + $0xa8] sm:$0xff]
        %v4569 = vld [vmem:[%s4546 + $0xb0] sm:$0xff]
        %v4570 = vld [vmem:[%s4546 + $0xb8] sm:$0xff]
        %v4571 = vld [vmem:[%s4546 + $0xc0] sm:$0xff]
        %v4572 = vld [vmem:[%s4546 + $0xc8] sm:$0xff]
        %v4573 = vld [vmem:[%s4546 + $0xd0] sm:$0xff]
        %v4574 = vld [vmem:[%s4546 + $0xd8] sm:$0xff]
        %v4575 = vld [vmem:[%s4546 + $0xe0] sm:$0xff]
        %v4576 = vld [vmem:[%s4546 + $0xe8] sm:$0xff]
        %v4577 = vld [vmem:[%s4546 + $0xf0] sm:$0xff]
        %v4578 = vld [vmem:[%s4546 + $0xf8] sm:$0xff]
        %4579 = vmatprep.subr.mxu0 %v4578
        %4580 = vmatpush1.msra.mxu0 %v4577
        %4581 = vmatprep.subr.mxu0 %v4576
        %4582 = vmatpush1.msra.mxu0 %v4575
        %4583 = vmatprep.subr.mxu0 %v4574
        %4584 = vmatpush1.msra.mxu0 %v4573
        %4585 = vmatprep.subr.mxu0 %v4572
        %4586 = vmatpush1.msra.mxu0 %v4571
        %4587 = vmatprep.subr.mxu0 %v4570
        %4588 = vmatpush1.msra.mxu0 %v4569
        %4589 = vmatprep.subr.mxu0 %v4568
        %4590 = vmatpush1.msra.mxu0 %v4567
        %4591 = vmatprep.subr.mxu0 %v4566
        %4592 = vmatpush1.msra.mxu0 %v4565
        %4593 = vmatprep.subr.mxu0 %v4564
        %4594 = vmatpush1.msra.mxu0 %v4563
        %4595 = vmatprep.subr.mxu0 %v4562
        %4596 = vmatpush1.msra.mxu0 %v4561
        %4597 = vmatprep.subr.mxu0 %v4560
        %4598 = vmatpush1.msra.mxu0 %v4559
        %4599 = vmatprep.subr.mxu0 %v4558
        %4600 = vmatpush1.msra.mxu0 %v4557
        %4601 = vmatprep.subr.mxu0 %v4556
        %4602 = vmatpush1.msra.mxu0 %v4555
        %4603 = vmatprep.subr.mxu0 %v4554
        %4604 = vmatpush1.msra.mxu0 %v4553
        %4605 = vmatprep.subr.mxu0 %v4552
        %4606 = vmatpush1.msra.mxu0 %v4551
        %4607 = vmatprep.subr.mxu0 %v4550
        %4608 = vmatpush1.msra.mxu0 %v4549
        %4609 = vmatprep.subr.mxu0 %v4548
        %4610 = vmatpush1.msra.mxu0 %v4547
        %4611 = vmatprep.subr.mxu0 0.0
        %4612 = vmatpush2.msra.mxu0 0.0
        %4613 = vmatprep.subr.mxu0 0.0
        %4614 = vmatpush2.msra.mxu0 0.0
        %4615 = vmatprep.subr.mxu0 0.0
        %4616 = vmatpush2.msra.mxu0 0.0
        %4617 = vmatprep.subr.mxu0 0.0
        %4618 = vmatpush2.msra.mxu0 0.0
        %4619 = vmatprep.subr.mxu0 0.0
        %4620 = vmatpush2.msra.mxu0 0.0
        %4621 = vmatprep.subr.mxu0 0.0
        %4622 = vmatpush2.msra.mxu0 0.0
        %4623 = vmatprep.subr.mxu0 0.0
        %4624 = vmatpush2.msra.mxu0 0.0
        %4625 = vmatprep.subr.mxu0 0.0
        %4626 = vmatpush2.msra.mxu0 0.0
        %4627 = vmatprep.subr.mxu0 0.0
        %4628 = vmatpush2.msra.mxu0 0.0
        %4629 = vmatprep.subr.mxu0 0.0
        %4630 = vmatpush2.msra.mxu0 0.0
        %4631 = vmatprep.subr.mxu0 0.0
        %4632 = vmatpush2.msra.mxu0 0.0
        %4633 = vmatprep.subr.mxu0 0.0
        %4634 = vmatpush2.msra.mxu0 0.0
        %4635 = vmatprep.subr.mxu0 0.0
        %4636 = vmatpush2.msra.mxu0 0.0
        %4637 = vmatprep.subr.mxu0 0.0
        %4638 = vmatpush2.msra.mxu0 0.0
        %4639 = vmatprep.subr.mxu0 0.0
        %4640 = vmatpush2.msra.mxu0 0.0
        %4641 = vmatprep.subr.mxu0 0.0
        %4642 = vmatpush2.msra.mxu0 0.0
        %4643 = vmatprep.mubr.f32.mxu0 0.0
        %4644 = vmatmul.mubr.f32.gmra.mxu0 %v3563
        %v4645 = vpop.f32.mrf.mxu0
        %v4646 = vadd.f32 0.0, %v4645
        %v4647 = vpop.f32.mrf.mxu0
        %v4648 = vadd.f32 0.0, %v4647
        %4649 = vmatprep.mubr.f32.mxu0 0.0
        %4650 = vmatmul.mubr.f32.gmra.mxu0 %v3564
        %v4651 = vpop.f32.mrf.mxu0
        %v4652 = vadd.f32 0.0, %v4651
        %v4653 = vpop.f32.mrf.mxu0
        %v4654 = vadd.f32 0.0, %v4653
        %4655 = vmatprep.mubr.f32.mxu0 0.0
        %4656 = vmatmul.mubr.f32.gmra.mxu0 %v3565
        %v4657 = vpop.f32.mrf.mxu0
        %v4658 = vadd.f32 0.0, %v4657
        %v4659 = vpop.f32.mrf.mxu0
        %v4660 = vadd.f32 0.0, %v4659
        %4661 = vmatprep.mubr.f32.mxu0 0.0
        %4662 = vmatmul.mubr.f32.gmra.mxu0 %v3566
        %v4663 = vpop.f32.mrf.mxu0
        %v4664 = vadd.f32 0.0, %v4663
        %v4665 = vpop.f32.mrf.mxu0
        %v4666 = vadd.f32 0.0, %v4665
        %4667 = vmatprep.mubr.f32.mxu0 0.0
        %4668 = vmatmul.mubr.f32.gmra.mxu0 %v3567
        %v4669 = vpop.f32.mrf.mxu0
        %v4670 = vadd.f32 0.0, %v4669
        %v4671 = vpop.f32.mrf.mxu0
        %v4672 = vadd.f32 0.0, %v4671
        %4673 = vmatprep.mubr.f32.mxu0 0.0
        %4674 = vmatmul.mubr.f32.gmra.mxu0 %v3568
        %v4675 = vpop.f32.mrf.mxu0
        %v4676 = vadd.f32 0.0, %v4675
        %v4677 = vpop.f32.mrf.mxu0
        %v4678 = vadd.f32 0.0, %v4677
        %4679 = vmatprep.mubr.f32.mxu0 0.0
        %4680 = vmatmul.mubr.f32.gmra.mxu0 %v3569
        %v4681 = vpop.f32.mrf.mxu0
        %v4682 = vadd.f32 0.0, %v4681
        %v4683 = vpop.f32.mrf.mxu0
        %v4684 = vadd.f32 0.0, %v4683
        %4685 = vmatprep.mubr.f32.mxu0 0.0
        %4686 = vmatmul.mubr.f32.gmra.mxu0 %v3570
        %v4687 = vpop.f32.mrf.mxu0
        %v4688 = vadd.f32 0.0, %v4687
        %v4689 = vpop.f32.mrf.mxu0
        %v4690 = vadd.f32 0.0, %v4689
        %4691 = vmatprep.mubr.f32.mxu0 0.0
        %4692 = vmatmul.mubr.f32.gmra.mxu0 %v3571
        %v4693 = vpop.f32.mrf.mxu0
        %v4694 = vadd.f32 0.0, %v4693
        %v4695 = vpop.f32.mrf.mxu0
        %v4696 = vadd.f32 0.0, %v4695
        %4697 = vmatprep.mubr.f32.mxu0 0.0
        %4698 = vmatmul.mubr.f32.gmra.mxu0 %v3572
        %v4699 = vpop.f32.mrf.mxu0
        %v4700 = vadd.f32 0.0, %v4699
        %v4701 = vpop.f32.mrf.mxu0
        %v4702 = vadd.f32 0.0, %v4701
        %4703 = vmatprep.mubr.f32.mxu0 0.0
        %4704 = vmatmul.mubr.f32.gmra.mxu0 %v3573
        %v4705 = vpop.f32.mrf.mxu0
        %v4706 = vadd.f32 0.0, %v4705
        %v4707 = vpop.f32.mrf.mxu0
        %v4708 = vadd.f32 0.0, %v4707
        %4709 = vmatprep.mubr.f32.mxu0 0.0
        %4710 = vmatmul.mubr.f32.gmra.mxu0 %v3574
        %v4711 = vpop.f32.mrf.mxu0
        %v4712 = vadd.f32 0.0, %v4711
        %v4713 = vpop.f32.mrf.mxu0
        %v4714 = vadd.f32 0.0, %v4713
        %4715 = vmatprep.mubr.f32.mxu0 0.0
        %4716 = vmatmul.mubr.f32.gmra.mxu0 %v3575
        %v4717 = vpop.f32.mrf.mxu0
        %v4718 = vadd.f32 0.0, %v4717
        %v4719 = vpop.f32.mrf.mxu0
        %v4720 = vadd.f32 0.0, %v4719
        %4721 = vmatprep.mubr.f32.mxu0 0.0
        %4722 = vmatmul.mubr.f32.gmra.mxu0 %v3576
        %v4723 = vpop.f32.mrf.mxu0
        %v4724 = vadd.f32 0.0, %v4723
        %v4725 = vpop.f32.mrf.mxu0
        %v4726 = vadd.f32 0.0, %v4725
        %4727 = vmatprep.mubr.f32.mxu0 0.0
        %4728 = vmatmul.mubr.f32.gmra.mxu0 %v3577
        %v4729 = vpop.f32.mrf.mxu0
        %v4730 = vadd.f32 0.0, %v4729
        %v4731 = vpop.f32.mrf.mxu0
        %v4732 = vadd.f32 0.0, %v4731
        %4733 = vmatprep.mubr.f32.mxu0 0.0
        %4734 = vmatmul.mubr.f32.gmra.mxu0 %v3578
        %v4735 = vpop.f32.mrf.mxu0
        %v4736 = vadd.f32 0.0, %v4735
        %v4737 = vpop.f32.mrf.mxu0
        %v4738 = vadd.f32 0.0, %v4737
        %4739 = vdwg.mxu0
        %s4740 = scalar_lea.vmem %s10, 512
        %v4741 = vld [vmem:[%s4740] sm:$0xff]
        %v4742 = vld [vmem:[%s4740 + $0x8] sm:$0xff]
        %v4743 = vld [vmem:[%s4740 + $0x10] sm:$0xff]
        %v4744 = vld [vmem:[%s4740 + $0x18] sm:$0xff]
        %v4745 = vld [vmem:[%s4740 + $0x20] sm:$0xff]
        %v4746 = vld [vmem:[%s4740 + $0x28] sm:$0xff]
        %v4747 = vld [vmem:[%s4740 + $0x30] sm:$0xff]
        %v4748 = vld [vmem:[%s4740 + $0x38] sm:$0xff]
        %v4749 = vld [vmem:[%s4740 + $0x40] sm:$0xff]
        %v4750 = vld [vmem:[%s4740 + $0x48] sm:$0xff]
        %v4751 = vld [vmem:[%s4740 + $0x50] sm:$0xff]
        %v4752 = vld [vmem:[%s4740 + $0x58] sm:$0xff]
        %v4753 = vld [vmem:[%s4740 + $0x60] sm:$0xff]
        %v4754 = vld [vmem:[%s4740 + $0x68] sm:$0xff]
        %v4755 = vld [vmem:[%s4740 + $0x70] sm:$0xff]
        %v4756 = vld [vmem:[%s4740 + $0x78] sm:$0xff]
        %v4757 = vld [vmem:[%s4740 + $0x80] sm:$0xff]
        %v4758 = vld [vmem:[%s4740 + $0x88] sm:$0xff]
        %v4759 = vld [vmem:[%s4740 + $0x90] sm:$0xff]
        %v4760 = vld [vmem:[%s4740 + $0x98] sm:$0xff]
        %v4761 = vld [vmem:[%s4740 + $0xa0] sm:$0xff]
        %v4762 = vld [vmem:[%s4740 + $0xa8] sm:$0xff]
        %v4763 = vld [vmem:[%s4740 + $0xb0] sm:$0xff]
        %v4764 = vld [vmem:[%s4740 + $0xb8] sm:$0xff]
        %v4765 = vld [vmem:[%s4740 + $0xc0] sm:$0xff]
        %v4766 = vld [vmem:[%s4740 + $0xc8] sm:$0xff]
        %v4767 = vld [vmem:[%s4740 + $0xd0] sm:$0xff]
        %v4768 = vld [vmem:[%s4740 + $0xd8] sm:$0xff]
        %v4769 = vld [vmem:[%s4740 + $0xe0] sm:$0xff]
        %v4770 = vld [vmem:[%s4740 + $0xe8] sm:$0xff]
        %v4771 = vld [vmem:[%s4740 + $0xf0] sm:$0xff]
        %v4772 = vld [vmem:[%s4740 + $0xf8] sm:$0xff]
        %4773 = vmatprep.subr.mxu0 %v4738
        %4774 = vmatpush1.msra.mxu0 %v4736
        %4775 = vmatprep.subr.mxu0 %v4732
        %4776 = vmatpush1.msra.mxu0 %v4730
        %4777 = vmatprep.subr.mxu0 %v4726
        %4778 = vmatpush1.msra.mxu0 %v4724
        %4779 = vmatprep.subr.mxu0 %v4720
        %4780 = vmatpush1.msra.mxu0 %v4718
        %4781 = vmatprep.subr.mxu0 %v4714
        %4782 = vmatpush1.msra.mxu0 %v4712
        %4783 = vmatprep.subr.mxu0 %v4708
        %4784 = vmatpush1.msra.mxu0 %v4706
        %4785 = vmatprep.subr.mxu0 %v4702
        %4786 = vmatpush1.msra.mxu0 %v4700
        %4787 = vmatprep.subr.mxu0 %v4696
        %4788 = vmatpush1.msra.mxu0 %v4694
        %4789 = vmatprep.subr.mxu0 %v4690
        %4790 = vmatpush1.msra.mxu0 %v4688
        %4791 = vmatprep.subr.mxu0 %v4684
        %4792 = vmatpush1.msra.mxu0 %v4682
        %4793 = vmatprep.subr.mxu0 %v4678
        %4794 = vmatpush1.msra.mxu0 %v4676
        %4795 = vmatprep.subr.mxu0 %v4672
        %4796 = vmatpush1.msra.mxu0 %v4670
        %4797 = vmatprep.subr.mxu0 %v4666
        %4798 = vmatpush1.msra.mxu0 %v4664
        %4799 = vmatprep.subr.mxu0 %v4660
        %4800 = vmatpush1.msra.mxu0 %v4658
        %4801 = vmatprep.subr.mxu0 %v4654
        %4802 = vmatpush1.msra.mxu0 %v4652
        %4803 = vmatprep.subr.mxu0 %v4648
        %4804 = vmatpush1.msra.mxu0 %v4646
        %4805 = vmatprep.subr.mxu0 0.0
        %4806 = vmatpush2.msra.mxu0 0.0
        %4807 = vmatprep.subr.mxu0 0.0
        %4808 = vmatpush2.msra.mxu0 0.0
        %4809 = vmatprep.subr.mxu0 0.0
        %4810 = vmatpush2.msra.mxu0 0.0
        %4811 = vmatprep.subr.mxu0 0.0
        %4812 = vmatpush2.msra.mxu0 0.0
        %4813 = vmatprep.subr.mxu0 0.0
        %4814 = vmatpush2.msra.mxu0 0.0
        %4815 = vmatprep.subr.mxu0 0.0
        %4816 = vmatpush2.msra.mxu0 0.0
        %4817 = vmatprep.subr.mxu0 0.0
        %4818 = vmatpush2.msra.mxu0 0.0
        %4819 = vmatprep.subr.mxu0 0.0
        %4820 = vmatpush2.msra.mxu0 0.0
        %4821 = vmatprep.subr.mxu0 0.0
        %4822 = vmatpush2.msra.mxu0 0.0
        %4823 = vmatprep.subr.mxu0 0.0
        %4824 = vmatpush2.msra.mxu0 0.0
        %4825 = vmatprep.subr.mxu0 0.0
        %4826 = vmatpush2.msra.mxu0 0.0
        %4827 = vmatprep.subr.mxu0 0.0
        %4828 = vmatpush2.msra.mxu0 0.0
        %4829 = vmatprep.subr.mxu0 0.0
        %4830 = vmatpush2.msra.mxu0 0.0
        %4831 = vmatprep.subr.mxu0 0.0
        %4832 = vmatpush2.msra.mxu0 0.0
        %4833 = vmatprep.subr.mxu0 0.0
        %4834 = vmatpush2.msra.mxu0 0.0
        %4835 = vmatprep.subr.mxu0 0.0
        %4836 = vmatpush2.msra.mxu0 0.0
        %4837 = vmatprep.mubr.f32.mxu0 0.0
        %4838 = vmatmul.mubr.f32.gmra.mxu0 %v4741
        %v4839 = vpop.f32.mrf.mxu0
        %v4840 = vadd.f32 0.0, %v4839
        %v4841 = vpop.f32.mrf.mxu0
        %v4842 = vadd.f32 0.0, %v4841
        %4843 = vmatprep.mubr.f32.mxu0 0.0
        %4844 = vmatmul.mubr.f32.gmra.mxu0 %v4742
        %v4845 = vpop.f32.mrf.mxu0
        %v4846 = vadd.f32 0.0, %v4845
        %v4847 = vpop.f32.mrf.mxu0
        %v4848 = vadd.f32 0.0, %v4847
        %4849 = vmatprep.mubr.f32.mxu0 0.0
        %4850 = vmatmul.mubr.f32.gmra.mxu0 %v4743
        %v4851 = vpop.f32.mrf.mxu0
        %v4852 = vadd.f32 0.0, %v4851
        %v4853 = vpop.f32.mrf.mxu0
        %v4854 = vadd.f32 0.0, %v4853
        %4855 = vmatprep.mubr.f32.mxu0 0.0
        %4856 = vmatmul.mubr.f32.gmra.mxu0 %v4744
        %v4857 = vpop.f32.mrf.mxu0
        %v4858 = vadd.f32 0.0, %v4857
        %v4859 = vpop.f32.mrf.mxu0
        %v4860 = vadd.f32 0.0, %v4859
        %4861 = vmatprep.mubr.f32.mxu0 0.0
        %4862 = vmatmul.mubr.f32.gmra.mxu0 %v4745
        %v4863 = vpop.f32.mrf.mxu0
        %v4864 = vadd.f32 0.0, %v4863
        %v4865 = vpop.f32.mrf.mxu0
        %v4866 = vadd.f32 0.0, %v4865
        %4867 = vmatprep.mubr.f32.mxu0 0.0
        %4868 = vmatmul.mubr.f32.gmra.mxu0 %v4746
        %v4869 = vpop.f32.mrf.mxu0
        %v4870 = vadd.f32 0.0, %v4869
        %v4871 = vpop.f32.mrf.mxu0
        %v4872 = vadd.f32 0.0, %v4871
        %4873 = vmatprep.mubr.f32.mxu0 0.0
        %4874 = vmatmul.mubr.f32.gmra.mxu0 %v4747
        %v4875 = vpop.f32.mrf.mxu0
        %v4876 = vadd.f32 0.0, %v4875
        %v4877 = vpop.f32.mrf.mxu0
        %v4878 = vadd.f32 0.0, %v4877
        %4879 = vmatprep.mubr.f32.mxu0 0.0
        %4880 = vmatmul.mubr.f32.gmra.mxu0 %v4748
        %v4881 = vpop.f32.mrf.mxu0
        %v4882 = vadd.f32 0.0, %v4881
        %v4883 = vpop.f32.mrf.mxu0
        %v4884 = vadd.f32 0.0, %v4883
        %4885 = vmatprep.mubr.f32.mxu0 0.0
        %4886 = vmatmul.mubr.f32.gmra.mxu0 %v4749
        %v4887 = vpop.f32.mrf.mxu0
        %v4888 = vadd.f32 0.0, %v4887
        %v4889 = vpop.f32.mrf.mxu0
        %v4890 = vadd.f32 0.0, %v4889
        %4891 = vmatprep.mubr.f32.mxu0 0.0
        %4892 = vmatmul.mubr.f32.gmra.mxu0 %v4750
        %v4893 = vpop.f32.mrf.mxu0
        %v4894 = vadd.f32 0.0, %v4893
        %v4895 = vpop.f32.mrf.mxu0
        %v4896 = vadd.f32 0.0, %v4895
        %4897 = vmatprep.mubr.f32.mxu0 0.0
        %4898 = vmatmul.mubr.f32.gmra.mxu0 %v4751
        %v4899 = vpop.f32.mrf.mxu0
        %v4900 = vadd.f32 0.0, %v4899
        %v4901 = vpop.f32.mrf.mxu0
        %v4902 = vadd.f32 0.0, %v4901
        %4903 = vmatprep.mubr.f32.mxu0 0.0
        %4904 = vmatmul.mubr.f32.gmra.mxu0 %v4752
        %v4905 = vpop.f32.mrf.mxu0
        %v4906 = vadd.f32 0.0, %v4905
        %v4907 = vpop.f32.mrf.mxu0
        %v4908 = vadd.f32 0.0, %v4907
        %4909 = vmatprep.mubr.f32.mxu0 0.0
        %4910 = vmatmul.mubr.f32.gmra.mxu0 %v4753
        %v4911 = vpop.f32.mrf.mxu0
        %v4912 = vadd.f32 0.0, %v4911
        %v4913 = vpop.f32.mrf.mxu0
        %v4914 = vadd.f32 0.0, %v4913
        %4915 = vmatprep.mubr.f32.mxu0 0.0
        %4916 = vmatmul.mubr.f32.gmra.mxu0 %v4754
        %v4917 = vpop.f32.mrf.mxu0
        %v4918 = vadd.f32 0.0, %v4917
        %v4919 = vpop.f32.mrf.mxu0
        %v4920 = vadd.f32 0.0, %v4919
        %4921 = vmatprep.mubr.f32.mxu0 0.0
        %4922 = vmatmul.mubr.f32.gmra.mxu0 %v4755
        %v4923 = vpop.f32.mrf.mxu0
        %v4924 = vadd.f32 0.0, %v4923
        %v4925 = vpop.f32.mrf.mxu0
        %v4926 = vadd.f32 0.0, %v4925
        %4927 = vmatprep.mubr.f32.mxu0 0.0
        %4928 = vmatmul.mubr.f32.gmra.mxu0 %v4756
        %v4929 = vpop.f32.mrf.mxu0
        %v4930 = vadd.f32 0.0, %v4929
        %v4931 = vpop.f32.mrf.mxu0
        %v4932 = vadd.f32 0.0, %v4931
        %4933 = vmatprep.mubr.f32.mxu0 0.0
        %4934 = vmatmul.mubr.f32.gmra.mxu0 %v4757
        %v4935 = vpop.f32.mrf.mxu0
        %v4936 = vadd.f32 0.0, %v4935
        %v4937 = vpop.f32.mrf.mxu0
        %v4938 = vadd.f32 0.0, %v4937
        %4939 = vmatprep.mubr.f32.mxu0 0.0
        %4940 = vmatmul.mubr.f32.gmra.mxu0 %v4758
        %v4941 = vpop.f32.mrf.mxu0
        %v4942 = vadd.f32 0.0, %v4941
        %v4943 = vpop.f32.mrf.mxu0
        %v4944 = vadd.f32 0.0, %v4943
        %4945 = vmatprep.mubr.f32.mxu0 0.0
        %4946 = vmatmul.mubr.f32.gmra.mxu0 %v4759
        %v4947 = vpop.f32.mrf.mxu0
        %v4948 = vadd.f32 0.0, %v4947
        %v4949 = vpop.f32.mrf.mxu0
        %v4950 = vadd.f32 0.0, %v4949
        %4951 = vmatprep.mubr.f32.mxu0 0.0
        %4952 = vmatmul.mubr.f32.gmra.mxu0 %v4760
        %v4953 = vpop.f32.mrf.mxu0
        %v4954 = vadd.f32 0.0, %v4953
        %v4955 = vpop.f32.mrf.mxu0
        %v4956 = vadd.f32 0.0, %v4955
        %4957 = vmatprep.mubr.f32.mxu0 0.0
        %4958 = vmatmul.mubr.f32.gmra.mxu0 %v4761
        %v4959 = vpop.f32.mrf.mxu0
        %v4960 = vadd.f32 0.0, %v4959
        %v4961 = vpop.f32.mrf.mxu0
        %v4962 = vadd.f32 0.0, %v4961
        %4963 = vmatprep.mubr.f32.mxu0 0.0
        %4964 = vmatmul.mubr.f32.gmra.mxu0 %v4762
        %v4965 = vpop.f32.mrf.mxu0
        %v4966 = vadd.f32 0.0, %v4965
        %v4967 = vpop.f32.mrf.mxu0
        %v4968 = vadd.f32 0.0, %v4967
        %4969 = vmatprep.mubr.f32.mxu0 0.0
        %4970 = vmatmul.mubr.f32.gmra.mxu0 %v4763
        %v4971 = vpop.f32.mrf.mxu0
        %v4972 = vadd.f32 0.0, %v4971
        %v4973 = vpop.f32.mrf.mxu0
        %v4974 = vadd.f32 0.0, %v4973
        %4975 = vmatprep.mubr.f32.mxu0 0.0
        %4976 = vmatmul.mubr.f32.gmra.mxu0 %v4764
        %v4977 = vpop.f32.mrf.mxu0
        %v4978 = vadd.f32 0.0, %v4977
        %v4979 = vpop.f32.mrf.mxu0
        %v4980 = vadd.f32 0.0, %v4979
        %4981 = vmatprep.mubr.f32.mxu0 0.0
        %4982 = vmatmul.mubr.f32.gmra.mxu0 %v4765
        %v4983 = vpop.f32.mrf.mxu0
        %v4984 = vadd.f32 0.0, %v4983
        %v4985 = vpop.f32.mrf.mxu0
        %v4986 = vadd.f32 0.0, %v4985
        %4987 = vmatprep.mubr.f32.mxu0 0.0
        %4988 = vmatmul.mubr.f32.gmra.mxu0 %v4766
        %v4989 = vpop.f32.mrf.mxu0
        %v4990 = vadd.f32 0.0, %v4989
        %v4991 = vpop.f32.mrf.mxu0
        %v4992 = vadd.f32 0.0, %v4991
        %4993 = vmatprep.mubr.f32.mxu0 0.0
        %4994 = vmatmul.mubr.f32.gmra.mxu0 %v4767
        %v4995 = vpop.f32.mrf.mxu0
        %v4996 = vadd.f32 0.0, %v4995
        %v4997 = vpop.f32.mrf.mxu0
        %v4998 = vadd.f32 0.0, %v4997
        %4999 = vmatprep.mubr.f32.mxu0 0.0
        %5000 = vmatmul.mubr.f32.gmra.mxu0 %v4768
        %v5001 = vpop.f32.mrf.mxu0
        %v5002 = vadd.f32 0.0, %v5001
        %v5003 = vpop.f32.mrf.mxu0
        %v5004 = vadd.f32 0.0, %v5003
        %5005 = vmatprep.mubr.f32.mxu0 0.0
        %5006 = vmatmul.mubr.f32.gmra.mxu0 %v4769
        %v5007 = vpop.f32.mrf.mxu0
        %v5008 = vadd.f32 0.0, %v5007
        %v5009 = vpop.f32.mrf.mxu0
        %v5010 = vadd.f32 0.0, %v5009
        %5011 = vmatprep.mubr.f32.mxu0 0.0
        %5012 = vmatmul.mubr.f32.gmra.mxu0 %v4770
        %v5013 = vpop.f32.mrf.mxu0
        %v5014 = vadd.f32 0.0, %v5013
        %v5015 = vpop.f32.mrf.mxu0
        %v5016 = vadd.f32 0.0, %v5015
        %5017 = vmatprep.mubr.f32.mxu0 0.0
        %5018 = vmatmul.mubr.f32.gmra.mxu0 %v4771
        %v5019 = vpop.f32.mrf.mxu0
        %v5020 = vadd.f32 0.0, %v5019
        %v5021 = vpop.f32.mrf.mxu0
        %v5022 = vadd.f32 0.0, %v5021
        %5023 = vmatprep.mubr.f32.mxu0 0.0
        %5024 = vmatmul.mubr.f32.gmra.mxu0 %v4772
        %v5025 = vpop.f32.mrf.mxu0
        %v5026 = vadd.f32 0.0, %v5025
        %v5027 = vpop.f32.mrf.mxu0
        %v5028 = vadd.f32 0.0, %v5027
        %5029 = vdwg.mxu0
        %v5030 = vadd.f32 %v4356, %v4840
        %v5031 = vadd.f32 %v4358, %v4842
        %v5032 = vadd.f32 %v4362, %v4846
        %v5033 = vadd.f32 %v4364, %v4848
        %v5034 = vadd.f32 %v4368, %v4852
        %v5035 = vadd.f32 %v4370, %v4854
        %v5036 = vadd.f32 %v4374, %v4858
        %v5037 = vadd.f32 %v4376, %v4860
        %v5038 = vadd.f32 %v4380, %v4864
        %v5039 = vadd.f32 %v4382, %v4866
        %v5040 = vadd.f32 %v4386, %v4870
        %v5041 = vadd.f32 %v4388, %v4872
        %v5042 = vadd.f32 %v4392, %v4876
        %v5043 = vadd.f32 %v4394, %v4878
        %v5044 = vadd.f32 %v4398, %v4882
        %v5045 = vadd.f32 %v4400, %v4884
        %v5046 = vadd.f32 %v4404, %v4888
        %v5047 = vadd.f32 %v4406, %v4890
        %v5048 = vadd.f32 %v4410, %v4894
        %v5049 = vadd.f32 %v4412, %v4896
        %v5050 = vadd.f32 %v4416, %v4900
        %v5051 = vadd.f32 %v4418, %v4902
        %v5052 = vadd.f32 %v4422, %v4906
        %v5053 = vadd.f32 %v4424, %v4908
        %v5054 = vadd.f32 %v4428, %v4912
        %v5055 = vadd.f32 %v4430, %v4914
        %v5056 = vadd.f32 %v4434, %v4918
        %v5057 = vadd.f32 %v4436, %v4920
        %v5058 = vadd.f32 %v4440, %v4924
        %v5059 = vadd.f32 %v4442, %v4926
        %v5060 = vadd.f32 %v4446, %v4930
        %v5061 = vadd.f32 %v4448, %v4932
        %v5062 = vadd.f32 %v4452, %v4936
        %v5063 = vadd.f32 %v4454, %v4938
        %v5064 = vadd.f32 %v4458, %v4942
        %v5065 = vadd.f32 %v4460, %v4944
        %v5066 = vadd.f32 %v4464, %v4948
        %v5067 = vadd.f32 %v4466, %v4950
        %v5068 = vadd.f32 %v4470, %v4954
        %v5069 = vadd.f32 %v4472, %v4956
        %v5070 = vadd.f32 %v4476, %v4960
        %v5071 = vadd.f32 %v4478, %v4962
        %v5072 = vadd.f32 %v4482, %v4966
        %v5073 = vadd.f32 %v4484, %v4968
        %v5074 = vadd.f32 %v4488, %v4972
        %v5075 = vadd.f32 %v4490, %v4974
        %v5076 = vadd.f32 %v4494, %v4978
        %v5077 = vadd.f32 %v4496, %v4980
        %v5078 = vadd.f32 %v4500, %v4984
        %v5079 = vadd.f32 %v4502, %v4986
        %v5080 = vadd.f32 %v4506, %v4990
        %v5081 = vadd.f32 %v4508, %v4992
        %v5082 = vadd.f32 %v4512, %v4996
        %v5083 = vadd.f32 %v4514, %v4998
        %v5084 = vadd.f32 %v4518, %v5002
        %v5085 = vadd.f32 %v4520, %v5004
        %v5086 = vadd.f32 %v4524, %v5008
        %v5087 = vadd.f32 %v4526, %v5010
        %v5088 = vadd.f32 %v4530, %v5014
        %v5089 = vadd.f32 %v4532, %v5016
        %v5090 = vadd.f32 %v4536, %v5020
        %v5091 = vadd.f32 %v4538, %v5022
        %v5092 = vadd.f32 %v4542, %v5026
        %v5093 = vadd.f32 %v4544, %v5028
        %s5094 = scalar_lea.vmem %s11, 768
        %v5095 = vld [vmem:[%s5094] sm:$0xff]
        %v5096 = vld [vmem:[%s5094 + $0x8] sm:$0xff]
        %v5097 = vld [vmem:[%s5094 + $0x10] sm:$0xff]
        %v5098 = vld [vmem:[%s5094 + $0x18] sm:$0xff]
        %v5099 = vld [vmem:[%s5094 + $0x20] sm:$0xff]
        %v5100 = vld [vmem:[%s5094 + $0x28] sm:$0xff]
        %v5101 = vld [vmem:[%s5094 + $0x30] sm:$0xff]
        %v5102 = vld [vmem:[%s5094 + $0x38] sm:$0xff]
        %v5103 = vld [vmem:[%s5094 + $0x40] sm:$0xff]
        %v5104 = vld [vmem:[%s5094 + $0x48] sm:$0xff]
        %v5105 = vld [vmem:[%s5094 + $0x50] sm:$0xff]
        %v5106 = vld [vmem:[%s5094 + $0x58] sm:$0xff]
        %v5107 = vld [vmem:[%s5094 + $0x60] sm:$0xff]
        %v5108 = vld [vmem:[%s5094 + $0x68] sm:$0xff]
        %v5109 = vld [vmem:[%s5094 + $0x70] sm:$0xff]
        %v5110 = vld [vmem:[%s5094 + $0x78] sm:$0xff]
        %v5111 = vld [vmem:[%s5094 + $0x80] sm:$0xff]
        %v5112 = vld [vmem:[%s5094 + $0x88] sm:$0xff]
        %v5113 = vld [vmem:[%s5094 + $0x90] sm:$0xff]
        %v5114 = vld [vmem:[%s5094 + $0x98] sm:$0xff]
        %v5115 = vld [vmem:[%s5094 + $0xa0] sm:$0xff]
        %v5116 = vld [vmem:[%s5094 + $0xa8] sm:$0xff]
        %v5117 = vld [vmem:[%s5094 + $0xb0] sm:$0xff]
        %v5118 = vld [vmem:[%s5094 + $0xb8] sm:$0xff]
        %v5119 = vld [vmem:[%s5094 + $0xc0] sm:$0xff]
        %v5120 = vld [vmem:[%s5094 + $0xc8] sm:$0xff]
        %v5121 = vld [vmem:[%s5094 + $0xd0] sm:$0xff]
        %v5122 = vld [vmem:[%s5094 + $0xd8] sm:$0xff]
        %v5123 = vld [vmem:[%s5094 + $0xe0] sm:$0xff]
        %v5124 = vld [vmem:[%s5094 + $0xe8] sm:$0xff]
        %v5125 = vld [vmem:[%s5094 + $0xf0] sm:$0xff]
        %v5126 = vld [vmem:[%s5094 + $0xf8] sm:$0xff]
        %5127 = vmatprep.subr.mxu0 %v5126
        %5128 = vmatpush1.msra.mxu0 %v5125
        %5129 = vmatprep.subr.mxu0 %v5124
        %5130 = vmatpush1.msra.mxu0 %v5123
        %5131 = vmatprep.subr.mxu0 %v5122
        %5132 = vmatpush1.msra.mxu0 %v5121
        %5133 = vmatprep.subr.mxu0 %v5120
        %5134 = vmatpush1.msra.mxu0 %v5119
        %5135 = vmatprep.subr.mxu0 %v5118
        %5136 = vmatpush1.msra.mxu0 %v5117
        %5137 = vmatprep.subr.mxu0 %v5116
        %5138 = vmatpush1.msra.mxu0 %v5115
        %5139 = vmatprep.subr.mxu0 %v5114
        %5140 = vmatpush1.msra.mxu0 %v5113
        %5141 = vmatprep.subr.mxu0 %v5112
        %5142 = vmatpush1.msra.mxu0 %v5111
        %5143 = vmatprep.subr.mxu0 %v5110
        %5144 = vmatpush1.msra.mxu0 %v5109
        %5145 = vmatprep.subr.mxu0 %v5108
        %5146 = vmatpush1.msra.mxu0 %v5107
        %5147 = vmatprep.subr.mxu0 %v5106
        %5148 = vmatpush1.msra.mxu0 %v5105
        %5149 = vmatprep.subr.mxu0 %v5104
        %5150 = vmatpush1.msra.mxu0 %v5103
        %5151 = vmatprep.subr.mxu0 %v5102
        %5152 = vmatpush1.msra.mxu0 %v5101
        %5153 = vmatprep.subr.mxu0 %v5100
        %5154 = vmatpush1.msra.mxu0 %v5099
        %5155 = vmatprep.subr.mxu0 %v5098
        %5156 = vmatpush1.msra.mxu0 %v5097
        %5157 = vmatprep.subr.mxu0 %v5096
        %5158 = vmatpush1.msra.mxu0 %v5095
        %5159 = vmatprep.subr.mxu0 0.0
        %5160 = vmatpush2.msra.mxu0 0.0
        %5161 = vmatprep.subr.mxu0 0.0
        %5162 = vmatpush2.msra.mxu0 0.0
        %5163 = vmatprep.subr.mxu0 0.0
        %5164 = vmatpush2.msra.mxu0 0.0
        %5165 = vmatprep.subr.mxu0 0.0
        %5166 = vmatpush2.msra.mxu0 0.0
        %5167 = vmatprep.subr.mxu0 0.0
        %5168 = vmatpush2.msra.mxu0 0.0
        %5169 = vmatprep.subr.mxu0 0.0
        %5170 = vmatpush2.msra.mxu0 0.0
        %5171 = vmatprep.subr.mxu0 0.0
        %5172 = vmatpush2.msra.mxu0 0.0
        %5173 = vmatprep.subr.mxu0 0.0
        %5174 = vmatpush2.msra.mxu0 0.0
        %5175 = vmatprep.subr.mxu0 0.0
        %5176 = vmatpush2.msra.mxu0 0.0
        %5177 = vmatprep.subr.mxu0 0.0
        %5178 = vmatpush2.msra.mxu0 0.0
        %5179 = vmatprep.subr.mxu0 0.0
        %5180 = vmatpush2.msra.mxu0 0.0
        %5181 = vmatprep.subr.mxu0 0.0
        %5182 = vmatpush2.msra.mxu0 0.0
        %5183 = vmatprep.subr.mxu0 0.0
        %5184 = vmatpush2.msra.mxu0 0.0
        %5185 = vmatprep.subr.mxu0 0.0
        %5186 = vmatpush2.msra.mxu0 0.0
        %5187 = vmatprep.subr.mxu0 0.0
        %5188 = vmatpush2.msra.mxu0 0.0
        %5189 = vmatprep.subr.mxu0 0.0
        %5190 = vmatpush2.msra.mxu0 0.0
        %5191 = vmatprep.mubr.f32.mxu0 0.0
        %5192 = vmatmul.mubr.f32.gmra.mxu0 %v3563
        %v5193 = vpop.f32.mrf.mxu0
        %v5194 = vadd.f32 0.0, %v5193
        %v5195 = vpop.f32.mrf.mxu0
        %v5196 = vadd.f32 0.0, %v5195
        %5197 = vmatprep.mubr.f32.mxu0 0.0
        %5198 = vmatmul.mubr.f32.gmra.mxu0 %v3564
        %v5199 = vpop.f32.mrf.mxu0
        %v5200 = vadd.f32 0.0, %v5199
        %v5201 = vpop.f32.mrf.mxu0
        %v5202 = vadd.f32 0.0, %v5201
        %5203 = vmatprep.mubr.f32.mxu0 0.0
        %5204 = vmatmul.mubr.f32.gmra.mxu0 %v3565
        %v5205 = vpop.f32.mrf.mxu0
        %v5206 = vadd.f32 0.0, %v5205
        %v5207 = vpop.f32.mrf.mxu0
        %v5208 = vadd.f32 0.0, %v5207
        %5209 = vmatprep.mubr.f32.mxu0 0.0
        %5210 = vmatmul.mubr.f32.gmra.mxu0 %v3566
        %v5211 = vpop.f32.mrf.mxu0
        %v5212 = vadd.f32 0.0, %v5211
        %v5213 = vpop.f32.mrf.mxu0
        %v5214 = vadd.f32 0.0, %v5213
        %5215 = vmatprep.mubr.f32.mxu0 0.0
        %5216 = vmatmul.mubr.f32.gmra.mxu0 %v3567
        %v5217 = vpop.f32.mrf.mxu0
        %v5218 = vadd.f32 0.0, %v5217
        %v5219 = vpop.f32.mrf.mxu0
        %v5220 = vadd.f32 0.0, %v5219
        %5221 = vmatprep.mubr.f32.mxu0 0.0
        %5222 = vmatmul.mubr.f32.gmra.mxu0 %v3568
        %v5223 = vpop.f32.mrf.mxu0
        %v5224 = vadd.f32 0.0, %v5223
        %v5225 = vpop.f32.mrf.mxu0
        %v5226 = vadd.f32 0.0, %v5225
        %5227 = vmatprep.mubr.f32.mxu0 0.0
        %5228 = vmatmul.mubr.f32.gmra.mxu0 %v3569
        %v5229 = vpop.f32.mrf.mxu0
        %v5230 = vadd.f32 0.0, %v5229
        %v5231 = vpop.f32.mrf.mxu0
        %v5232 = vadd.f32 0.0, %v5231
        %5233 = vmatprep.mubr.f32.mxu0 0.0
        %5234 = vmatmul.mubr.f32.gmra.mxu0 %v3570
        %v5235 = vpop.f32.mrf.mxu0
        %v5236 = vadd.f32 0.0, %v5235
        %v5237 = vpop.f32.mrf.mxu0
        %v5238 = vadd.f32 0.0, %v5237
        %5239 = vmatprep.mubr.f32.mxu0 0.0
        %5240 = vmatmul.mubr.f32.gmra.mxu0 %v3571
        %v5241 = vpop.f32.mrf.mxu0
        %v5242 = vadd.f32 0.0, %v5241
        %v5243 = vpop.f32.mrf.mxu0
        %v5244 = vadd.f32 0.0, %v5243
        %5245 = vmatprep.mubr.f32.mxu0 0.0
        %5246 = vmatmul.mubr.f32.gmra.mxu0 %v3572
        %v5247 = vpop.f32.mrf.mxu0
        %v5248 = vadd.f32 0.0, %v5247
        %v5249 = vpop.f32.mrf.mxu0
        %v5250 = vadd.f32 0.0, %v5249
        %5251 = vmatprep.mubr.f32.mxu0 0.0
        %5252 = vmatmul.mubr.f32.gmra.mxu0 %v3573
        %v5253 = vpop.f32.mrf.mxu0
        %v5254 = vadd.f32 0.0, %v5253
        %v5255 = vpop.f32.mrf.mxu0
        %v5256 = vadd.f32 0.0, %v5255
        %5257 = vmatprep.mubr.f32.mxu0 0.0
        %5258 = vmatmul.mubr.f32.gmra.mxu0 %v3574
        %v5259 = vpop.f32.mrf.mxu0
        %v5260 = vadd.f32 0.0, %v5259
        %v5261 = vpop.f32.mrf.mxu0
        %v5262 = vadd.f32 0.0, %v5261
        %5263 = vmatprep.mubr.f32.mxu0 0.0
        %5264 = vmatmul.mubr.f32.gmra.mxu0 %v3575
        %v5265 = vpop.f32.mrf.mxu0
        %v5266 = vadd.f32 0.0, %v5265
        %v5267 = vpop.f32.mrf.mxu0
        %v5268 = vadd.f32 0.0, %v5267
        %5269 = vmatprep.mubr.f32.mxu0 0.0
        %5270 = vmatmul.mubr.f32.gmra.mxu0 %v3576
        %v5271 = vpop.f32.mrf.mxu0
        %v5272 = vadd.f32 0.0, %v5271
        %v5273 = vpop.f32.mrf.mxu0
        %v5274 = vadd.f32 0.0, %v5273
        %5275 = vmatprep.mubr.f32.mxu0 0.0
        %5276 = vmatmul.mubr.f32.gmra.mxu0 %v3577
        %v5277 = vpop.f32.mrf.mxu0
        %v5278 = vadd.f32 0.0, %v5277
        %v5279 = vpop.f32.mrf.mxu0
        %v5280 = vadd.f32 0.0, %v5279
        %5281 = vmatprep.mubr.f32.mxu0 0.0
        %5282 = vmatmul.mubr.f32.gmra.mxu0 %v3578
        %v5283 = vpop.f32.mrf.mxu0
        %v5284 = vadd.f32 0.0, %v5283
        %v5285 = vpop.f32.mrf.mxu0
        %v5286 = vadd.f32 0.0, %v5285
        %5287 = vdwg.mxu0
        %s5288 = scalar_lea.vmem %s10, 768
        %v5289 = vld [vmem:[%s5288] sm:$0xff]
        %v5290 = vld [vmem:[%s5288 + $0x8] sm:$0xff]
        %v5291 = vld [vmem:[%s5288 + $0x10] sm:$0xff]
        %v5292 = vld [vmem:[%s5288 + $0x18] sm:$0xff]
        %v5293 = vld [vmem:[%s5288 + $0x20] sm:$0xff]
        %v5294 = vld [vmem:[%s5288 + $0x28] sm:$0xff]
        %v5295 = vld [vmem:[%s5288 + $0x30] sm:$0xff]
        %v5296 = vld [vmem:[%s5288 + $0x38] sm:$0xff]
        %v5297 = vld [vmem:[%s5288 + $0x40] sm:$0xff]
        %v5298 = vld [vmem:[%s5288 + $0x48] sm:$0xff]
        %v5299 = vld [vmem:[%s5288 + $0x50] sm:$0xff]
        %v5300 = vld [vmem:[%s5288 + $0x58] sm:$0xff]
        %v5301 = vld [vmem:[%s5288 + $0x60] sm:$0xff]
        %v5302 = vld [vmem:[%s5288 + $0x68] sm:$0xff]
        %v5303 = vld [vmem:[%s5288 + $0x70] sm:$0xff]
        %v5304 = vld [vmem:[%s5288 + $0x78] sm:$0xff]
        %v5305 = vld [vmem:[%s5288 + $0x80] sm:$0xff]
        %v5306 = vld [vmem:[%s5288 + $0x88] sm:$0xff]
        %v5307 = vld [vmem:[%s5288 + $0x90] sm:$0xff]
        %v5308 = vld [vmem:[%s5288 + $0x98] sm:$0xff]
        %v5309 = vld [vmem:[%s5288 + $0xa0] sm:$0xff]
        %v5310 = vld [vmem:[%s5288 + $0xa8] sm:$0xff]
        %v5311 = vld [vmem:[%s5288 + $0xb0] sm:$0xff]
        %v5312 = vld [vmem:[%s5288 + $0xb8] sm:$0xff]
        %v5313 = vld [vmem:[%s5288 + $0xc0] sm:$0xff]
        %v5314 = vld [vmem:[%s5288 + $0xc8] sm:$0xff]
        %v5315 = vld [vmem:[%s5288 + $0xd0] sm:$0xff]
        %v5316 = vld [vmem:[%s5288 + $0xd8] sm:$0xff]
        %v5317 = vld [vmem:[%s5288 + $0xe0] sm:$0xff]
        %v5318 = vld [vmem:[%s5288 + $0xe8] sm:$0xff]
        %v5319 = vld [vmem:[%s5288 + $0xf0] sm:$0xff]
        %v5320 = vld [vmem:[%s5288 + $0xf8] sm:$0xff]
        %5321 = vmatprep.subr.mxu0 %v5286
        %5322 = vmatpush1.msra.mxu0 %v5284
        %5323 = vmatprep.subr.mxu0 %v5280
        %5324 = vmatpush1.msra.mxu0 %v5278
        %5325 = vmatprep.subr.mxu0 %v5274
        %5326 = vmatpush1.msra.mxu0 %v5272
        %5327 = vmatprep.subr.mxu0 %v5268
        %5328 = vmatpush1.msra.mxu0 %v5266
        %5329 = vmatprep.subr.mxu0 %v5262
        %5330 = vmatpush1.msra.mxu0 %v5260
        %5331 = vmatprep.subr.mxu0 %v5256
        %5332 = vmatpush1.msra.mxu0 %v5254
        %5333 = vmatprep.subr.mxu0 %v5250
        %5334 = vmatpush1.msra.mxu0 %v5248
        %5335 = vmatprep.subr.mxu0 %v5244
        %5336 = vmatpush1.msra.mxu0 %v5242
        %5337 = vmatprep.subr.mxu0 %v5238
        %5338 = vmatpush1.msra.mxu0 %v5236
        %5339 = vmatprep.subr.mxu0 %v5232
        %5340 = vmatpush1.msra.mxu0 %v5230
        %5341 = vmatprep.subr.mxu0 %v5226
        %5342 = vmatpush1.msra.mxu0 %v5224
        %5343 = vmatprep.subr.mxu0 %v5220
        %5344 = vmatpush1.msra.mxu0 %v5218
        %5345 = vmatprep.subr.mxu0 %v5214
        %5346 = vmatpush1.msra.mxu0 %v5212
        %5347 = vmatprep.subr.mxu0 %v5208
        %5348 = vmatpush1.msra.mxu0 %v5206
        %5349 = vmatprep.subr.mxu0 %v5202
        %5350 = vmatpush1.msra.mxu0 %v5200
        %5351 = vmatprep.subr.mxu0 %v5196
        %5352 = vmatpush1.msra.mxu0 %v5194
        %5353 = vmatprep.subr.mxu0 0.0
        %5354 = vmatpush2.msra.mxu0 0.0
        %5355 = vmatprep.subr.mxu0 0.0
        %5356 = vmatpush2.msra.mxu0 0.0
        %5357 = vmatprep.subr.mxu0 0.0
        %5358 = vmatpush2.msra.mxu0 0.0
        %5359 = vmatprep.subr.mxu0 0.0
        %5360 = vmatpush2.msra.mxu0 0.0
        %5361 = vmatprep.subr.mxu0 0.0
        %5362 = vmatpush2.msra.mxu0 0.0
        %5363 = vmatprep.subr.mxu0 0.0
        %5364 = vmatpush2.msra.mxu0 0.0
        %5365 = vmatprep.subr.mxu0 0.0
        %5366 = vmatpush2.msra.mxu0 0.0
        %5367 = vmatprep.subr.mxu0 0.0
        %5368 = vmatpush2.msra.mxu0 0.0
        %5369 = vmatprep.subr.mxu0 0.0
        %5370 = vmatpush2.msra.mxu0 0.0
        %5371 = vmatprep.subr.mxu0 0.0
        %5372 = vmatpush2.msra.mxu0 0.0
        %5373 = vmatprep.subr.mxu0 0.0
        %5374 = vmatpush2.msra.mxu0 0.0
        %5375 = vmatprep.subr.mxu0 0.0
        %5376 = vmatpush2.msra.mxu0 0.0
        %5377 = vmatprep.subr.mxu0 0.0
        %5378 = vmatpush2.msra.mxu0 0.0
        %5379 = vmatprep.subr.mxu0 0.0
        %5380 = vmatpush2.msra.mxu0 0.0
        %5381 = vmatprep.subr.mxu0 0.0
        %5382 = vmatpush2.msra.mxu0 0.0
        %5383 = vmatprep.subr.mxu0 0.0
        %5384 = vmatpush2.msra.mxu0 0.0
        %5385 = vmatprep.mubr.f32.mxu0 0.0
        %5386 = vmatmul.mubr.f32.gmra.mxu0 %v5289
        %v5387 = vpop.f32.mrf.mxu0
        %v5388 = vadd.f32 0.0, %v5387
        %v5389 = vpop.f32.mrf.mxu0
        %v5390 = vadd.f32 0.0, %v5389
        %5391 = vmatprep.mubr.f32.mxu0 0.0
        %5392 = vmatmul.mubr.f32.gmra.mxu0 %v5290
        %v5393 = vpop.f32.mrf.mxu0
        %v5394 = vadd.f32 0.0, %v5393
        %v5395 = vpop.f32.mrf.mxu0
        %v5396 = vadd.f32 0.0, %v5395
        %5397 = vmatprep.mubr.f32.mxu0 0.0
        %5398 = vmatmul.mubr.f32.gmra.mxu0 %v5291
        %v5399 = vpop.f32.mrf.mxu0
        %v5400 = vadd.f32 0.0, %v5399
        %v5401 = vpop.f32.mrf.mxu0
        %v5402 = vadd.f32 0.0, %v5401
        %5403 = vmatprep.mubr.f32.mxu0 0.0
        %5404 = vmatmul.mubr.f32.gmra.mxu0 %v5292
        %v5405 = vpop.f32.mrf.mxu0
        %v5406 = vadd.f32 0.0, %v5405
        %v5407 = vpop.f32.mrf.mxu0
        %v5408 = vadd.f32 0.0, %v5407
        %5409 = vmatprep.mubr.f32.mxu0 0.0
        %5410 = vmatmul.mubr.f32.gmra.mxu0 %v5293
        %v5411 = vpop.f32.mrf.mxu0
        %v5412 = vadd.f32 0.0, %v5411
        %v5413 = vpop.f32.mrf.mxu0
        %v5414 = vadd.f32 0.0, %v5413
        %5415 = vmatprep.mubr.f32.mxu0 0.0
        %5416 = vmatmul.mubr.f32.gmra.mxu0 %v5294
        %v5417 = vpop.f32.mrf.mxu0
        %v5418 = vadd.f32 0.0, %v5417
        %v5419 = vpop.f32.mrf.mxu0
        %v5420 = vadd.f32 0.0, %v5419
        %5421 = vmatprep.mubr.f32.mxu0 0.0
        %5422 = vmatmul.mubr.f32.gmra.mxu0 %v5295
        %v5423 = vpop.f32.mrf.mxu0
        %v5424 = vadd.f32 0.0, %v5423
        %v5425 = vpop.f32.mrf.mxu0
        %v5426 = vadd.f32 0.0, %v5425
        %5427 = vmatprep.mubr.f32.mxu0 0.0
        %5428 = vmatmul.mubr.f32.gmra.mxu0 %v5296
        %v5429 = vpop.f32.mrf.mxu0
        %v5430 = vadd.f32 0.0, %v5429
        %v5431 = vpop.f32.mrf.mxu0
        %v5432 = vadd.f32 0.0, %v5431
        %5433 = vmatprep.mubr.f32.mxu0 0.0
        %5434 = vmatmul.mubr.f32.gmra.mxu0 %v5297
        %v5435 = vpop.f32.mrf.mxu0
        %v5436 = vadd.f32 0.0, %v5435
        %v5437 = vpop.f32.mrf.mxu0
        %v5438 = vadd.f32 0.0, %v5437
        %5439 = vmatprep.mubr.f32.mxu0 0.0
        %5440 = vmatmul.mubr.f32.gmra.mxu0 %v5298
        %v5441 = vpop.f32.mrf.mxu0
        %v5442 = vadd.f32 0.0, %v5441
        %v5443 = vpop.f32.mrf.mxu0
        %v5444 = vadd.f32 0.0, %v5443
        %5445 = vmatprep.mubr.f32.mxu0 0.0
        %5446 = vmatmul.mubr.f32.gmra.mxu0 %v5299
        %v5447 = vpop.f32.mrf.mxu0
        %v5448 = vadd.f32 0.0, %v5447
        %v5449 = vpop.f32.mrf.mxu0
        %v5450 = vadd.f32 0.0, %v5449
        %5451 = vmatprep.mubr.f32.mxu0 0.0
        %5452 = vmatmul.mubr.f32.gmra.mxu0 %v5300
        %v5453 = vpop.f32.mrf.mxu0
        %v5454 = vadd.f32 0.0, %v5453
        %v5455 = vpop.f32.mrf.mxu0
        %v5456 = vadd.f32 0.0, %v5455
        %5457 = vmatprep.mubr.f32.mxu0 0.0
        %5458 = vmatmul.mubr.f32.gmra.mxu0 %v5301
        %v5459 = vpop.f32.mrf.mxu0
        %v5460 = vadd.f32 0.0, %v5459
        %v5461 = vpop.f32.mrf.mxu0
        %v5462 = vadd.f32 0.0, %v5461
        %5463 = vmatprep.mubr.f32.mxu0 0.0
        %5464 = vmatmul.mubr.f32.gmra.mxu0 %v5302
        %v5465 = vpop.f32.mrf.mxu0
        %v5466 = vadd.f32 0.0, %v5465
        %v5467 = vpop.f32.mrf.mxu0
        %v5468 = vadd.f32 0.0, %v5467
        %5469 = vmatprep.mubr.f32.mxu0 0.0
        %5470 = vmatmul.mubr.f32.gmra.mxu0 %v5303
        %v5471 = vpop.f32.mrf.mxu0
        %v5472 = vadd.f32 0.0, %v5471
        %v5473 = vpop.f32.mrf.mxu0
        %v5474 = vadd.f32 0.0, %v5473
        %5475 = vmatprep.mubr.f32.mxu0 0.0
        %5476 = vmatmul.mubr.f32.gmra.mxu0 %v5304
        %v5477 = vpop.f32.mrf.mxu0
        %v5478 = vadd.f32 0.0, %v5477
        %v5479 = vpop.f32.mrf.mxu0
        %v5480 = vadd.f32 0.0, %v5479
        %5481 = vmatprep.mubr.f32.mxu0 0.0
        %5482 = vmatmul.mubr.f32.gmra.mxu0 %v5305
        %v5483 = vpop.f32.mrf.mxu0
        %v5484 = vadd.f32 0.0, %v5483
        %v5485 = vpop.f32.mrf.mxu0
        %v5486 = vadd.f32 0.0, %v5485
        %5487 = vmatprep.mubr.f32.mxu0 0.0
        %5488 = vmatmul.mubr.f32.gmra.mxu0 %v5306
        %v5489 = vpop.f32.mrf.mxu0
        %v5490 = vadd.f32 0.0, %v5489
        %v5491 = vpop.f32.mrf.mxu0
        %v5492 = vadd.f32 0.0, %v5491
        %5493 = vmatprep.mubr.f32.mxu0 0.0
        %5494 = vmatmul.mubr.f32.gmra.mxu0 %v5307
        %v5495 = vpop.f32.mrf.mxu0
        %v5496 = vadd.f32 0.0, %v5495
        %v5497 = vpop.f32.mrf.mxu0
        %v5498 = vadd.f32 0.0, %v5497
        %5499 = vmatprep.mubr.f32.mxu0 0.0
        %5500 = vmatmul.mubr.f32.gmra.mxu0 %v5308
        %v5501 = vpop.f32.mrf.mxu0
        %v5502 = vadd.f32 0.0, %v5501
        %v5503 = vpop.f32.mrf.mxu0
        %v5504 = vadd.f32 0.0, %v5503
        %5505 = vmatprep.mubr.f32.mxu0 0.0
        %5506 = vmatmul.mubr.f32.gmra.mxu0 %v5309
        %v5507 = vpop.f32.mrf.mxu0
        %v5508 = vadd.f32 0.0, %v5507
        %v5509 = vpop.f32.mrf.mxu0
        %v5510 = vadd.f32 0.0, %v5509
        %5511 = vmatprep.mubr.f32.mxu0 0.0
        %5512 = vmatmul.mubr.f32.gmra.mxu0 %v5310
        %v5513 = vpop.f32.mrf.mxu0
        %v5514 = vadd.f32 0.0, %v5513
        %v5515 = vpop.f32.mrf.mxu0
        %v5516 = vadd.f32 0.0, %v5515
        %5517 = vmatprep.mubr.f32.mxu0 0.0
        %5518 = vmatmul.mubr.f32.gmra.mxu0 %v5311
        %v5519 = vpop.f32.mrf.mxu0
        %v5520 = vadd.f32 0.0, %v5519
        %v5521 = vpop.f32.mrf.mxu0
        %v5522 = vadd.f32 0.0, %v5521
        %5523 = vmatprep.mubr.f32.mxu0 0.0
        %5524 = vmatmul.mubr.f32.gmra.mxu0 %v5312
        %v5525 = vpop.f32.mrf.mxu0
        %v5526 = vadd.f32 0.0, %v5525
        %v5527 = vpop.f32.mrf.mxu0
        %v5528 = vadd.f32 0.0, %v5527
        %5529 = vmatprep.mubr.f32.mxu0 0.0
        %5530 = vmatmul.mubr.f32.gmra.mxu0 %v5313
        %v5531 = vpop.f32.mrf.mxu0
        %v5532 = vadd.f32 0.0, %v5531
        %v5533 = vpop.f32.mrf.mxu0
        %v5534 = vadd.f32 0.0, %v5533
        %5535 = vmatprep.mubr.f32.mxu0 0.0
        %5536 = vmatmul.mubr.f32.gmra.mxu0 %v5314
        %v5537 = vpop.f32.mrf.mxu0
        %v5538 = vadd.f32 0.0, %v5537
        %v5539 = vpop.f32.mrf.mxu0
        %v5540 = vadd.f32 0.0, %v5539
        %5541 = vmatprep.mubr.f32.mxu0 0.0
        %5542 = vmatmul.mubr.f32.gmra.mxu0 %v5315
        %v5543 = vpop.f32.mrf.mxu0
        %v5544 = vadd.f32 0.0, %v5543
        %v5545 = vpop.f32.mrf.mxu0
        %v5546 = vadd.f32 0.0, %v5545
        %5547 = vmatprep.mubr.f32.mxu0 0.0
        %5548 = vmatmul.mubr.f32.gmra.mxu0 %v5316
        %v5549 = vpop.f32.mrf.mxu0
        %v5550 = vadd.f32 0.0, %v5549
        %v5551 = vpop.f32.mrf.mxu0
        %v5552 = vadd.f32 0.0, %v5551
        %5553 = vmatprep.mubr.f32.mxu0 0.0
        %5554 = vmatmul.mubr.f32.gmra.mxu0 %v5317
        %v5555 = vpop.f32.mrf.mxu0
        %v5556 = vadd.f32 0.0, %v5555
        %v5557 = vpop.f32.mrf.mxu0
        %v5558 = vadd.f32 0.0, %v5557
        %5559 = vmatprep.mubr.f32.mxu0 0.0
        %5560 = vmatmul.mubr.f32.gmra.mxu0 %v5318
        %v5561 = vpop.f32.mrf.mxu0
        %v5562 = vadd.f32 0.0, %v5561
        %v5563 = vpop.f32.mrf.mxu0
        %v5564 = vadd.f32 0.0, %v5563
        %5565 = vmatprep.mubr.f32.mxu0 0.0
        %5566 = vmatmul.mubr.f32.gmra.mxu0 %v5319
        %v5567 = vpop.f32.mrf.mxu0
        %v5568 = vadd.f32 0.0, %v5567
        %v5569 = vpop.f32.mrf.mxu0
        %v5570 = vadd.f32 0.0, %v5569
        %5571 = vmatprep.mubr.f32.mxu0 0.0
        %5572 = vmatmul.mubr.f32.gmra.mxu0 %v5320
        %v5573 = vpop.f32.mrf.mxu0
        %v5574 = vadd.f32 0.0, %v5573
        %v5575 = vpop.f32.mrf.mxu0
        %v5576 = vadd.f32 0.0, %v5575
        %5577 = vdwg.mxu0
        %v5578 = vadd.f32 %v5030, %v5388
        %v5579 = vadd.f32 %v5031, %v5390
        %v5580 = vadd.f32 %v5032, %v5394
        %v5581 = vadd.f32 %v5033, %v5396
        %v5582 = vadd.f32 %v5034, %v5400
        %v5583 = vadd.f32 %v5035, %v5402
        %v5584 = vadd.f32 %v5036, %v5406
        %v5585 = vadd.f32 %v5037, %v5408
        %v5586 = vadd.f32 %v5038, %v5412
        %v5587 = vadd.f32 %v5039, %v5414
        %v5588 = vadd.f32 %v5040, %v5418
        %v5589 = vadd.f32 %v5041, %v5420
        %v5590 = vadd.f32 %v5042, %v5424
        %v5591 = vadd.f32 %v5043, %v5426
        %v5592 = vadd.f32 %v5044, %v5430
        %v5593 = vadd.f32 %v5045, %v5432
        %v5594 = vadd.f32 %v5046, %v5436
        %v5595 = vadd.f32 %v5047, %v5438
        %v5596 = vadd.f32 %v5048, %v5442
        %v5597 = vadd.f32 %v5049, %v5444
        %v5598 = vadd.f32 %v5050, %v5448
        %v5599 = vadd.f32 %v5051, %v5450
        %v5600 = vadd.f32 %v5052, %v5454
        %v5601 = vadd.f32 %v5053, %v5456
        %v5602 = vadd.f32 %v5054, %v5460
        %v5603 = vadd.f32 %v5055, %v5462
        %v5604 = vadd.f32 %v5056, %v5466
        %v5605 = vadd.f32 %v5057, %v5468
        %v5606 = vadd.f32 %v5058, %v5472
        %v5607 = vadd.f32 %v5059, %v5474
        %v5608 = vadd.f32 %v5060, %v5478
        %v5609 = vadd.f32 %v5061, %v5480
        %v5610 = vadd.f32 %v5062, %v5484
        %v5611 = vadd.f32 %v5063, %v5486
        %v5612 = vadd.f32 %v5064, %v5490
        %v5613 = vadd.f32 %v5065, %v5492
        %v5614 = vadd.f32 %v5066, %v5496
        %v5615 = vadd.f32 %v5067, %v5498
        %v5616 = vadd.f32 %v5068, %v5502
        %v5617 = vadd.f32 %v5069, %v5504
        %v5618 = vadd.f32 %v5070, %v5508
        %v5619 = vadd.f32 %v5071, %v5510
        %v5620 = vadd.f32 %v5072, %v5514
        %v5621 = vadd.f32 %v5073, %v5516
        %v5622 = vadd.f32 %v5074, %v5520
        %v5623 = vadd.f32 %v5075, %v5522
        %v5624 = vadd.f32 %v5076, %v5526
        %v5625 = vadd.f32 %v5077, %v5528
        %v5626 = vadd.f32 %v5078, %v5532
        %v5627 = vadd.f32 %v5079, %v5534
        %v5628 = vadd.f32 %v5080, %v5538
        %v5629 = vadd.f32 %v5081, %v5540
        %v5630 = vadd.f32 %v5082, %v5544
        %v5631 = vadd.f32 %v5083, %v5546
        %v5632 = vadd.f32 %v5084, %v5550
        %v5633 = vadd.f32 %v5085, %v5552
        %v5634 = vadd.f32 %v5086, %v5556
        %v5635 = vadd.f32 %v5087, %v5558
        %v5636 = vadd.f32 %v5088, %v5562
        %v5637 = vadd.f32 %v5089, %v5564
        %v5638 = vadd.f32 %v5090, %v5568
        %v5639 = vadd.f32 %v5091, %v5570
        %v5640 = vadd.f32 %v5092, %v5574
        %v5641 = vadd.f32 %v5093, %v5576
        %v5642 = vstv %s3579
        %v5643 = vadd.f32 %v5578, %v5642
        %v5644 = vadd.f32 %v5579, %v5642
        %v5645 = vadd.f32 %v5580, %v5642
        %v5646 = vadd.f32 %v5581, %v5642
        %v5647 = vadd.f32 %v5582, %v5642
        %v5648 = vadd.f32 %v5583, %v5642
        %v5649 = vadd.f32 %v5584, %v5642
        %v5650 = vadd.f32 %v5585, %v5642
        %v5651 = vadd.f32 %v5586, %v5642
        %v5652 = vadd.f32 %v5587, %v5642
        %v5653 = vadd.f32 %v5588, %v5642
        %v5654 = vadd.f32 %v5589, %v5642
        %v5655 = vadd.f32 %v5590, %v5642
        %v5656 = vadd.f32 %v5591, %v5642
        %v5657 = vadd.f32 %v5592, %v5642
        %v5658 = vadd.f32 %v5593, %v5642
        %v5659 = vadd.f32 %v5594, %v5642
        %v5660 = vadd.f32 %v5595, %v5642
        %v5661 = vadd.f32 %v5596, %v5642
        %v5662 = vadd.f32 %v5597, %v5642
        %v5663 = vadd.f32 %v5598, %v5642
        %v5664 = vadd.f32 %v5599, %v5642
        %v5665 = vadd.f32 %v5600, %v5642
        %v5666 = vadd.f32 %v5601, %v5642
        %v5667 = vadd.f32 %v5602, %v5642
        %v5668 = vadd.f32 %v5603, %v5642
        %v5669 = vadd.f32 %v5604, %v5642
        %v5670 = vadd.f32 %v5605, %v5642
        %v5671 = vadd.f32 %v5606, %v5642
        %v5672 = vadd.f32 %v5607, %v5642
        %v5673 = vadd.f32 %v5608, %v5642
        %v5674 = vadd.f32 %v5609, %v5642
        %v5675 = vadd.f32 %v5610, %v5642
        %v5676 = vadd.f32 %v5611, %v5642
        %v5677 = vadd.f32 %v5612, %v5642
        %v5678 = vadd.f32 %v5613, %v5642
        %v5679 = vadd.f32 %v5614, %v5642
        %v5680 = vadd.f32 %v5615, %v5642
        %v5681 = vadd.f32 %v5616, %v5642
        %v5682 = vadd.f32 %v5617, %v5642
        %v5683 = vadd.f32 %v5618, %v5642
        %v5684 = vadd.f32 %v5619, %v5642
        %v5685 = vadd.f32 %v5620, %v5642
        %v5686 = vadd.f32 %v5621, %v5642
        %v5687 = vadd.f32 %v5622, %v5642
        %v5688 = vadd.f32 %v5623, %v5642
        %v5689 = vadd.f32 %v5624, %v5642
        %v5690 = vadd.f32 %v5625, %v5642
        %v5691 = vadd.f32 %v5626, %v5642
        %v5692 = vadd.f32 %v5627, %v5642
        %v5693 = vadd.f32 %v5628, %v5642
        %v5694 = vadd.f32 %v5629, %v5642
        %v5695 = vadd.f32 %v5630, %v5642
        %v5696 = vadd.f32 %v5631, %v5642
        %v5697 = vadd.f32 %v5632, %v5642
        %v5698 = vadd.f32 %v5633, %v5642
        %v5699 = vadd.f32 %v5634, %v5642
        %v5700 = vadd.f32 %v5635, %v5642
        %v5701 = vadd.f32 %v5636, %v5642
        %v5702 = vadd.f32 %v5637, %v5642
        %v5703 = vadd.f32 %v5638, %v5642
        %v5704 = vadd.f32 %v5639, %v5642
        %v5705 = vadd.f32 %v5640, %v5642
        %v5706 = vadd.f32 %v5641, %v5642
        %5707 = vst [vmem:[%s420] sm:$0xff] %v5643
        %5708 = vst [vmem:[%s420 + $0x8] sm:$0xff] %v5644
        %5709 = vst [vmem:[%s420 + $0x10] sm:$0xff] %v5645
        %5710 = vst [vmem:[%s420 + $0x18] sm:$0xff] %v5646
        %5711 = vst [vmem:[%s420 + $0x20] sm:$0xff] %v5647
        %5712 = vst [vmem:[%s420 + $0x28] sm:$0xff] %v5648
        %5713 = vst [vmem:[%s420 + $0x30] sm:$0xff] %v5649
        %5714 = vst [vmem:[%s420 + $0x38] sm:$0xff] %v5650
        %5715 = vst [vmem:[%s420 + $0x40] sm:$0xff] %v5651
        %5716 = vst [vmem:[%s420 + $0x48] sm:$0xff] %v5652
        %5717 = vst [vmem:[%s420 + $0x50] sm:$0xff] %v5653
        %5718 = vst [vmem:[%s420 + $0x58] sm:$0xff] %v5654
        %5719 = vst [vmem:[%s420 + $0x60] sm:$0xff] %v5655
        %5720 = vst [vmem:[%s420 + $0x68] sm:$0xff] %v5656
        %5721 = vst [vmem:[%s420 + $0x70] sm:$0xff] %v5657
        %5722 = vst [vmem:[%s420 + $0x78] sm:$0xff] %v5658
        %5723 = vst [vmem:[%s420 + $0x80] sm:$0xff] %v5659
        %5724 = vst [vmem:[%s420 + $0x88] sm:$0xff] %v5660
        %5725 = vst [vmem:[%s420 + $0x90] sm:$0xff] %v5661
        %5726 = vst [vmem:[%s420 + $0x98] sm:$0xff] %v5662
        %5727 = vst [vmem:[%s420 + $0xa0] sm:$0xff] %v5663
        %5728 = vst [vmem:[%s420 + $0xa8] sm:$0xff] %v5664
        %5729 = vst [vmem:[%s420 + $0xb0] sm:$0xff] %v5665
        %5730 = vst [vmem:[%s420 + $0xb8] sm:$0xff] %v5666
        %5731 = vst [vmem:[%s420 + $0xc0] sm:$0xff] %v5667
        %5732 = vst [vmem:[%s420 + $0xc8] sm:$0xff] %v5668
        %5733 = vst [vmem:[%s420 + $0xd0] sm:$0xff] %v5669
        %5734 = vst [vmem:[%s420 + $0xd8] sm:$0xff] %v5670
        %5735 = vst [vmem:[%s420 + $0xe0] sm:$0xff] %v5671
        %5736 = vst [vmem:[%s420 + $0xe8] sm:$0xff] %v5672
        %5737 = vst [vmem:[%s420 + $0xf0] sm:$0xff] %v5673
        %5738 = vst [vmem:[%s420 + $0xf8] sm:$0xff] %v5674
        %5739 = vst [vmem:[%s420 + $0x100] sm:$0xff] %v5675
        %5740 = vst [vmem:[%s420 + $0x108] sm:$0xff] %v5676
        %5741 = vst [vmem:[%s420 + $0x110] sm:$0xff] %v5677
        %5742 = vst [vmem:[%s420 + $0x118] sm:$0xff] %v5678
        %5743 = vst [vmem:[%s420 + $0x120] sm:$0xff] %v5679
        %5744 = vst [vmem:[%s420 + $0x128] sm:$0xff] %v5680
        %5745 = vst [vmem:[%s420 + $0x130] sm:$0xff] %v5681
        %5746 = vst [vmem:[%s420 + $0x138] sm:$0xff] %v5682
        %5747 = vst [vmem:[%s420 + $0x140] sm:$0xff] %v5683
        %5748 = vst [vmem:[%s420 + $0x148] sm:$0xff] %v5684
        %5749 = vst [vmem:[%s420 + $0x150] sm:$0xff] %v5685
        %5750 = vst [vmem:[%s420 + $0x158] sm:$0xff] %v5686
        %5751 = vst [vmem:[%s420 + $0x160] sm:$0xff] %v5687
        %5752 = vst [vmem:[%s420 + $0x168] sm:$0xff] %v5688
        %5753 = vst [vmem:[%s420 + $0x170] sm:$0xff] %v5689
        %5754 = vst [vmem:[%s420 + $0x178] sm:$0xff] %v5690
        %5755 = vst [vmem:[%s420 + $0x180] sm:$0xff] %v5691
        %5756 = vst [vmem:[%s420 + $0x188] sm:$0xff] %v5692
        %5757 = vst [vmem:[%s420 + $0x190] sm:$0xff] %v5693
        %5758 = vst [vmem:[%s420 + $0x198] sm:$0xff] %v5694
        %5759 = vst [vmem:[%s420 + $0x1a0] sm:$0xff] %v5695
        %5760 = vst [vmem:[%s420 + $0x1a8] sm:$0xff] %v5696
        %5761 = vst [vmem:[%s420 + $0x1b0] sm:$0xff] %v5697
        %5762 = vst [vmem:[%s420 + $0x1b8] sm:$0xff] %v5698
        %5763 = vst [vmem:[%s420 + $0x1c0] sm:$0xff] %v5699
        %5764 = vst [vmem:[%s420 + $0x1c8] sm:$0xff] %v5700
        %5765 = vst [vmem:[%s420 + $0x1d0] sm:$0xff] %v5701
        %5766 = vst [vmem:[%s420 + $0x1d8] sm:$0xff] %v5702
        %5767 = vst [vmem:[%s420 + $0x1e0] sm:$0xff] %v5703
        %5768 = vst [vmem:[%s420 + $0x1e8] sm:$0xff] %v5704
        %5769 = vst [vmem:[%s420 + $0x1f0] sm:$0xff] %v5705
        %5770 = vst [vmem:[%s420 + $0x1f8] sm:$0xff] %v5706
        %p5771 = scmp.lt.s32.totalorder %s25, 1
        %s5772 = scalar_select %p5771, %s25, 1
        %s5773 = smul.addr %s5772, 64
        %s5774 = smul.addr %s5773, 8
        %s5775 = scalar_lea.vmem %s12, %s5774
        // Predicated region
        $region77: #{deconvnet_forward.1} parent=67 // pred_check
          %p5776 = pneg %p295
        $region78: #{deconvnet_forward.1} parent=67 // pred_check_branch
          %5778 = sbr.rel (%p5776) target = $region80
        $region79: #{deconvnet_forward.1} parent=67 // pred_region
          _
        $region80: #{deconvnet_forward.1} parent=67 // pred_fallthru
          _
      $region68: #{deconvnet_forward.1} parent=5 // pred_fallthru
        _
      %p5779 = scmp.le.s32.totalorder 2, %s20
      // Predicated region
      $region81: #{deconvnet_forward.1} parent=5 // pred_check
        %p5780 = pneg %p5779
      $region82: #{deconvnet_forward.1} parent=5 // pred_check_branch
        %5782 = sbr.rel (%p5780) target = $region84
      $region83: #{deconvnet_forward.1} parent=5 // pred_region
        %s5783 = ssub.s32 %s20, 2
        // Predicated region
        $region85: #{deconvnet_forward.1} parent=83 // pred_check
          %p5784 = pneg %p301
        $region86: #{deconvnet_forward.1} parent=83 // pred_check_branch
          %5786 = sbr.rel (%p5784) target = $region88
        $region87: #{deconvnet_forward.1} parent=83 // pred_region
          %p5787 = scmp.lt.s32.totalorder %s26, 1
          %s5788 = scalar_select %p5787, %s26, 1
          %s5789 = smul.addr %s5788, 64
          %s5790 = smul.addr %s5789, 8
          %s5791 = scalar_lea.vmem %s12, %s5790
        $region88: #{deconvnet_forward.1} parent=83 // pred_fallthru
          _
      $region84: #{deconvnet_forward.1} parent=5 // pred_fallthru
        _
    $region6: #{deconvnet_forward.1} parent=1 // loop_footer
      %s24 = sadd.s32 1, %s20
    $region7: #{deconvnet_forward.1} parent=1 // loop_footer_branch
      %19 = sbr.rel target = $region3
    $region8: #{deconvnet_forward.1} parent=1 // loop_exit
      _
    %5792 = vsyncpa [#allocation3], 1
    %s5793 = scalar_lea.sflag [#allocation3], 1
    %5794 = vsyncpa %s5793, 1
    %5795 = vsyncpa [#allocation5], 1

</llo_original>
